<compile_context>
chip_gen: v7x
topology: tpu7x:2x2x1
jax: 0.10.0
libtpu: 0.0.40
codegen_flags: <defaults>
</compile_context>

<pallas_src>
import numpy as np
import jax
import jax.numpy as jnp
from jax import lax
from jax.experimental import pallas as pl
from jax.experimental.pallas import tpu as pltpu  # noqa: F401  (TPU backend assumed)

# ----------------------------- small BERT config -----------------------------
VOCAB = 64
MAX_POS = 16
TYPE_VOCAB = 2
HIDDEN = 32
NUM_HEADS = 4
HEAD_DIM = HIDDEN // NUM_HEADS
INTERMEDIATE = 64
NUM_LAYERS = 2
NUM_CLASS = 2
SEQ = 8          # (original module pads to max_length=128; small demo uses 8)
BATCH = 2
LN_EPS = 1e-12

BS = BATCH * SEQ                 # batch folded onto sublanes: activation rows
R = NUM_HEADS * BS               # attention rows, ordered (head, batch, seq)
VEC_W = 3 * HIDDEN               # lane width of the packed bias/LayerNorm slab

assert SEQ <= MAX_POS, "SEQ must not exceed MAX_POS (position embedding table)"

# Static block-diagonal attention bias: a query row i may only attend to key
# column j when both lie in the same (head, batch) block of SEQ rows.
_blk = np.arange(R) // SEQ
_BLOCK_BIAS = np.where(_blk[:, None] == _blk[None, :], 0.0, -1e9).astype(np.float32)


# ------------------------------ fused Pallas kernel ---------------------------
def _bert_fused_kernel(ids_ref, emb_tab_ref, attn_bias_ref,
                       wqkv_ref, wo_ref, w1_ref, w2_ref,
                       pool_cls_w_ref, vecs_ref, out_ref):
    """Whole model, both batch elements, one invocation (no grid)."""
    f32 = jnp.float32

    def vec(row, width):                       # packed bias / LN vector -> (1, width)
        return vecs_ref[row:row + 1, :width]

    def layernorm(y, g, b):
        mean = jnp.mean(y, axis=-1, keepdims=True)
        var = jnp.mean(jnp.square(y - mean), axis=-1, keepdims=True)
        return (y - mean) * lax.rsqrt(var + LN_EPS) * g + b

    # ---------------- embeddings (gather-free: one-hot @ table) ----------------
    ids = ids_ref[...]                                            # (BS, 2) int32
    word_oh = jnp.where(
        ids[:, 0:1] == lax.broadcasted_iota(jnp.int32, (BS, VOCAB), 1), 1.0, 0.0)
    type_oh = jnp.where(
        ids[:, 1:2] == lax.broadcasted_iota(jnp.int32, (BS, TYPE_VOCAB), 1), 1.0, 0.0)
    word_tab = emb_tab_ref[0:VOCAB, :]
    pos_tab = emb_tab_ref[VOCAB:VOCAB + SEQ, :]                   # (SEQ, H)
    type_tab = emb_tab_ref[VOCAB + MAX_POS:VOCAB + MAX_POS + TYPE_VOCAB, :]
    x = (jnp.dot(word_oh, word_tab, preferred_element_type=f32)
         + jnp.dot(type_oh, type_tab, preferred_element_type=f32)
         + jnp.concatenate([pos_tab] * BATCH, axis=0))            # (BS, H)
    h = layernorm(x, vec(0, HIDDEN), vec(1, HIDDEN))
    # TODO(synk): dropout from the reference module is omitted (eval/inference mode).

    scale = 1.0 / (HEAD_DIM ** 0.5)
    attn_bias = attn_bias_ref[...]                                # (R, R)

    for li in range(NUM_LAYERS):                                  # static unroll (2 layers)
        base = 4 + li * 8
        # ----------------------- self attention (all heads) -----------------------
        qkv = (jnp.dot(h, wqkv_ref[li], preferred_element_type=f32)
               + vec(base + 0, 3 * HIDDEN))                       # (BS, 3H)

        def to_heads(off, t=qkv):                                 # (BS,H) lanes -> (R,HD) rows
            return jnp.concatenate(
                [t[:, off + n * HEAD_DIM: off + (n + 1) * HEAD_DIM]
                 for n in range(NUM_HEADS)], axis=0)

        q_heads = to_heads(0) * scale                             # (R, HD), rows = (head,batch,seq)
        k_heads = to_heads(HIDDEN)
        v_heads = to_heads(2 * HIDDEN)

        # One score matmul for all heads & batches: q @ k^T (contract last axes).
        s = lax.dot_general(q_heads, k_heads, (((1,), (1,)), ((), ())),
                            preferred_element_type=f32)           # (R, R)
        s = s + attn_bias                                         # block-diag + key padding mask
        m = jnp.max(s, axis=-1, keepdims=True)
        p = jnp.exp(s - m)
        p = p * pl.reciprocal(jnp.sum(p, axis=-1, keepdims=True), approx=True)  # EUP divide
        ctx = jnp.dot(p, v_heads, preferred_element_type=f32)     # (R, HD)

        # Head merge: concat_h(ctx_h) @ wo == sum_h ctx_h @ wo[h*hd:(h+1)*hd, :]
        wo = wo_ref[li]
        attn = None
        for n in range(NUM_HEADS):
            term = jnp.dot(ctx[n * BS:(n + 1) * BS, :],
                           wo[n * HEAD_DIM:(n + 1) * HEAD_DIM, :],
                           preferred_element_type=f32)            # (BS, H)
            attn = term if attn is None else attn + term
        h = layernorm(h + attn + vec(base + 1, HIDDEN),
                      vec(base + 2, HIDDEN), vec(base + 3, HIDDEN))

        # -------------------------------- feed forward ----------------------------
        f = jnp.dot(h, w1_ref[li], preferred_element_type=f32) + vec(base + 4, INTERMEDIATE)
        # TODO(synk): HF BERT uses exact erf-GELU; tanh approximation used here.
        c = 0.7978845608028654                                    # sqrt(2/pi)
        f = 0.5 * f * (1.0 + jnp.tanh(c * (f + 0.044715 * f * f * f)))
        f = jnp.dot(f, w2_ref[li], preferred_element_type=f32) + vec(base + 5, HIDDEN)
        h = layernorm(h + f, vec(base + 6, HIDDEN), vec(base + 7, HIDDEN))

    # ------------------ pooler ([CLS] dense + tanh) + classifier ------------------
    cls_tok = jnp.concatenate([h[b * SEQ:b * SEQ + 1, :] for b in range(BATCH)], axis=0)
    pooled = jnp.tanh(jnp.dot(cls_tok, pool_cls_w_ref[:, 0:HIDDEN],
                              preferred_element_type=f32) + vec(2, HIDDEN))
    pred = jnp.dot(pooled, pool_cls_w_ref[:, HIDDEN:HIDDEN + NUM_CLASS],
                   preferred_element_type=f32) + vec(3, NUM_CLASS)               # (B, C)
    out_ref[...] = pred


# ------------------------------ parameter setup -------------------------------
def init_params(key):
    def dense(k, fan_in, fan_out):
        return jax.random.normal(k, (fan_in, fan_out), jnp.float32) * 0.02

    def pack(v):                                   # pad a 1-D vector to the slab width
        return jnp.pad(v.astype(jnp.float32), (0, VEC_W - v.shape[0]))

    keys = jax.random.split(key, 5 + NUM_LAYERS)
    word_emb = jax.random.normal(keys[0], (VOCAB, HIDDEN), jnp.float32) * 0.02
    pos_emb = jax.random.normal(keys[1], (MAX_POS, HIDDEN), jnp.float32) * 0.02
    type_emb = jax.random.normal(keys[2], (TYPE_VOCAB, HIDDEN), jnp.float32) * 0.02

    ones_h, zeros_h = jnp.ones((HIDDEN,)), jnp.zeros((HIDDEN,))
    # Packed vector slab row order (matches kernel's static offsets):
    #   0 emb_ln_g, 1 emb_ln_b, 2 pool_b, 3 cls_b, then per layer:
    #   bqkv, bo, ln1_g, ln1_b, b1, b2, ln2_g, ln2_b
    vec_rows = [pack(ones_h), pack(zeros_h), pack(zeros_h), pack(jnp.zeros((NUM_CLASS,)))]

    wqkv, wo, w1, w2 = [], [], [], []
    for li in range(NUM_LAYERS):
        lk = jax.random.split(keys[5 + li], 4)
        wqkv.append(dense(lk[0], HIDDEN, 3 * HIDDEN))   # fused [Q|K|V], head-major columns
        wo.append(dense(lk[1], HIDDEN, HIDDEN))
        w1.append(dense(lk[2], HIDDEN, INTERMEDIATE))
        w2.append(dense(lk[3], INTERMEDIATE, HIDDEN))
        vec_rows += [pack(jnp.zeros((3 * HIDDEN,))),    # qkv bias
                     pack(zeros_h),                     # attention output bias
                     pack(ones_h), pack(zeros_h),       # LayerNorm 1 gamma / beta
                     pack(jnp.zeros((INTERMEDIATE,))),  # FFN bias 1
                     pack(zeros_h),                     # FFN bias 2
                     pack(ones_h), pack(zeros_h)]       # LayerNorm 2 gamma / beta

    return {
        "emb_tab": jnp.concatenate([word_emb, pos_emb, type_emb], axis=0),   # (82, H)
        "wqkv": jnp.stack(wqkv), "wo": jnp.stack(wo),
        "w1": jnp.stack(w1), "w2": jnp.stack(w2),
        "pool_cls_w": jnp.concatenate([dense(keys[3], HIDDEN, HIDDEN),
                                       dense(keys[4], HIDDEN, NUM_CLASS)], axis=1),
        "vecs": jnp.stack(vec_rows),                                          # (20, 96)
    }


# -------------------------------- forward pass --------------------------------
def _cost_estimate(bytes_accessed):
    emb_flops = 2 * BS * VOCAB * HIDDEN + 2 * BS * TYPE_VOCAB * HIDDEN
    per_layer = (2 * BS * HIDDEN * 3 * HIDDEN             # fused QKV
                 + 2 * R * HEAD_DIM * R                    # scores
                 + 2 * R * R * HEAD_DIM                    # context
                 + NUM_HEADS * 2 * BS * HEAD_DIM * HIDDEN  # head merge
                 + 2 * 2 * BS * HIDDEN * INTERMEDIATE)     # FFN
    head_flops = 2 * BATCH * HIDDEN * HIDDEN + 2 * BATCH * HIDDEN * NUM_CLASS
    trans = NUM_LAYERS * (R * R + BS * INTERMEDIATE) + BATCH * HIDDEN
    return pl.CostEstimate(flops=int(emb_flops + NUM_LAYERS * per_layer + head_flops),
                           transcendentals=int(trans),
                           bytes_accessed=int(bytes_accessed))


@jax.jit
def bert_forward(params, input_ids, token_type_ids, attention_mask):
    B, S = input_ids.shape
    assert B == BATCH and S == SEQ

    # Token / type ids, batch*seq flattened row-major onto sublanes.
    ids = jnp.stack([input_ids.reshape(-1), token_type_ids.reshape(-1)],
                    axis=-1).astype(jnp.int32)                                  # (BS, 2)

    # Additive attention bias: static block-diagonal (head, batch) structure +
    # per-key padding mask; columns ordered (head, batch, seq) to match the
    # kernel's heads-on-sublane layout.
    key_bias = ((1.0 - attention_mask.astype(jnp.float32)) * -10000.0).reshape(1, BS)
    key_cols = jnp.broadcast_to(key_bias, (NUM_HEADS, BS)).reshape(1, R)
    attn_bias = jnp.asarray(_BLOCK_BIAS) + key_cols                             # (R, R)

    args = (ids, params["emb_tab"], attn_bias,
            params["wqkv"], params["wo"], params["w1"], params["w2"],
            params["pool_cls_w"], params["vecs"])
    bytes_accessed = (sum(int(a.size) * a.dtype.itemsize for a in args)
                      + BATCH * NUM_CLASS * 4)

    # Single grid-less pallas_call: every operand is a whole-array VMEM block
    # (total resident footprint well under 1 MiB on any TPU generation).
    return pl.pallas_call(
        _bert_fused_kernel,
        out_shape=jax.ShapeDtypeStruct((BATCH, NUM_CLASS), jnp.float32),
        cost_estimate=_cost_estimate(bytes_accessed),
    )(*args)


# ------------------------------------ main ------------------------------------
if __name__ == "__main__":
    key = jax.random.PRNGKey(0)
    k_param, k_ids = jax.random.split(key)

    params = init_params(k_param)

    # TODO(synk): BertTokenizer / pretrained checkpoint loading have no Pallas
    # equivalent; token ids are synthetic and weights are random.
    input_ids = jax.random.randint(k_ids, (BATCH, SEQ), 0, VOCAB, dtype=jnp.int32)
    token_type_ids = jnp.zeros((BATCH, SEQ), dtype=jnp.int32)
    attention_mask = jnp.array(
        [[1, 1, 1, 1, 1, 1, 1, 1],
         [1, 1, 1, 1, 1, 0, 0, 0]], dtype=jnp.int32)

    pred = bert_forward(params, input_ids, token_type_ids, attention_mask)
    pred = jax.block_until_ready(pred)

    assert pred.shape == (BATCH, NUM_CLASS)
    assert bool(jnp.all(jnp.isfinite(pred)))
    print("KERNEL_OK")
</pallas_src>

<mosaic_0001>
module attributes {stable_mosaic.version = 11 : i64} {
  func.func @_bert_fused_kernel(%arg0: memref<16x2xi32, #tpu.memory_space<vmem>>, %arg1: memref<82x32xf32, #tpu.memory_space<vmem>>, %arg2: memref<64x64xf32, #tpu.memory_space<vmem>>, %arg3: memref<2x32x96xf32, #tpu.memory_space<vmem>>, %arg4: memref<2x32x32xf32, #tpu.memory_space<vmem>>, %arg5: memref<2x32x64xf32, #tpu.memory_space<vmem>>, %arg6: memref<2x64x32xf32, #tpu.memory_space<vmem>>, %arg7: memref<32x34xf32, #tpu.memory_space<vmem>>, %arg8: memref<20x96xf32, #tpu.memory_space<vmem>>, %arg9: memref<2x2xf32, #tpu.memory_space<vmem>>) attributes {dimension_semantics = [], scalar_prefetch = 0 : i64, scratch_operands = 0 : i64, tpu.core_type = #tpu.core_type<tc>} {
    %c0 = arith.constant 0 : index
    %c0_0 = arith.constant 0 : index
    %0 = vector.load %arg0[%c0, %c0_0] : memref<16x2xi32, #tpu.memory_space<vmem>>, vector<16x2xi32>
    %1 = vector.extract_strided_slice %0 {offsets = [0, 0], sizes = [16, 1], strides = [1, 1]} : vector<16x2xi32> to vector<16x1xi32>
    %2 = tpu.iota {dimensions = array<i32: 1>} : vector<16x64xi32>
    %3 = vector.broadcast %1 : vector<16x1xi32> to vector<16x64xi32>
    %4 = arith.cmpi eq, %3, %2 : vector<16x64xi32>
    %cst = arith.constant 1.000000e+00 : f32
    %cst_1 = arith.constant 0.000000e+00 : f32
    %5 = vector.broadcast %cst : f32 to vector<16x64xf32>
    %6 = vector.broadcast %cst_1 : f32 to vector<16x64xf32>
    %7 = arith.select %4, %5, %6 : vector<16x64xi1>, vector<16x64xf32>
    %8 = vector.extract_strided_slice %0 {offsets = [0, 1], sizes = [16, 1], strides = [1, 1]} : vector<16x2xi32> to vector<16x1xi32>
    %9 = tpu.iota {dimensions = array<i32: 1>} : vector<16x2xi32>
    %10 = vector.broadcast %8 : vector<16x1xi32> to vector<16x2xi32>
    %11 = arith.cmpi eq, %10, %9 : vector<16x2xi32>
    %cst_2 = arith.constant 1.000000e+00 : f32
    %cst_3 = arith.constant 0.000000e+00 : f32
    %12 = vector.broadcast %cst_2 : f32 to vector<16x2xf32>
    %13 = vector.broadcast %cst_3 : f32 to vector<16x2xf32>
    %14 = arith.select %11, %12, %13 : vector<16x2xi1>, vector<16x2xf32>
    %c0_4 = arith.constant 0 : index
    %c0_5 = arith.constant 0 : index
    %15 = vector.load %arg1[%c0_4, %c0_5] : memref<82x32xf32, #tpu.memory_space<vmem>>, vector<64x32xf32>
    %c64 = arith.constant 64 : index
    %c0_6 = arith.constant 0 : index
    %16 = vector.load %arg1[%c64, %c0_6] : memref<82x32xf32, #tpu.memory_space<vmem>>, vector<8x32xf32>
    %c80 = arith.constant 80 : index
    %c0_7 = arith.constant 0 : index
    %17 = vector.load %arg1[%c80, %c0_7] : memref<82x32xf32, #tpu.memory_space<vmem>>, vector<2x32xf32>
    %cst_8 = arith.constant dense<0.000000e+00> : vector<16x32xf32>
    %18 = tpu.matmul %7, %15, %cst_8 {dimension_numbers = #tpu.dot_dimension_numbers<[1], [0], [0], [1], [0, 0, 1, 1], [], []>} : vector<16x64xf32>, vector<64x32xf32>, vector<16x32xf32> -> vector<16x32xf32>
    %cst_9 = arith.constant dense<0.000000e+00> : vector<16x32xf32>
    %19 = tpu.matmul %14, %17, %cst_9 {dimension_numbers = #tpu.dot_dimension_numbers<[1], [0], [0], [1], [0, 0, 1, 1], [], []>} : vector<16x2xf32>, vector<2x32xf32>, vector<16x32xf32> -> vector<16x32xf32>
    %20 = arith.addf %18, %19 : vector<16x32xf32>
    %21 = tpu.concatenate %16, %16 in 0 : vector<8x32xf32>, vector<8x32xf32> -> vector<16x32xf32>
    %22 = arith.addf %20, %21 : vector<16x32xf32>
    %c0_10 = arith.constant 0 : index
    %c0_11 = arith.constant 0 : index
    %23 = vector.load %arg8[%c0_10, %c0_11] : memref<20x96xf32, #tpu.memory_space<vmem>>, vector<1x32xf32>
    %c1 = arith.constant 1 : index
    %c0_12 = arith.constant 0 : index
    %24 = vector.load %arg8[%c1, %c0_12] : memref<20x96xf32, #tpu.memory_space<vmem>>, vector<1x32xf32>
    %cst_13 = arith.constant dense<0.000000e+00> : vector<16xf32>
    %25 = vector.multi_reduction <add>, %22, %cst_13 [1] : vector<16x32xf32> to vector<16xf32>
    %26 = vector.shape_cast %25 : vector<16xf32> to vector<16x1xf32>
    %cst_14 = arith.constant 3.200000e+01 : f32
    %27 = vector.broadcast %cst_14 : f32 to vector<16x1xf32>
    %28 = arith.divf %26, %27 : vector<16x1xf32>
    %29 = vector.broadcast %28 : vector<16x1xf32> to vector<16x32xf32>
    %30 = arith.subf %22, %29 : vector<16x32xf32>
    %31 = arith.mulf %30, %30 : vector<16x32xf32>
    %cst_15 = arith.constant dense<0.000000e+00> : vector<16xf32>
    %32 = vector.multi_reduction <add>, %31, %cst_15 [1] : vector<16x32xf32> to vector<16xf32>
    %33 = vector.shape_cast %32 : vector<16xf32> to vector<16x1xf32>
    %cst_16 = arith.constant 3.200000e+01 : f32
    %34 = vector.broadcast %cst_16 : f32 to vector<16x1xf32>
    %35 = arith.divf %33, %34 : vector<16x1xf32>
    %36 = vector.broadcast %28 : vector<16x1xf32> to vector<16x32xf32>
    %37 = arith.subf %22, %36 : vector<16x32xf32>
    %cst_17 = arith.constant 9.99999996E-13 : f32
    %38 = vector.broadcast %cst_17 : f32 to vector<16x1xf32>
    %39 = arith.addf %35, %38 : vector<16x1xf32>
    %40 = math.rsqrt %39 : vector<16x1xf32>
    %41 = vector.broadcast %40 : vector<16x1xf32> to vector<16x32xf32>
    %42 = arith.mulf %37, %41 : vector<16x32xf32>
    %43 = vector.broadcast %23 : vector<1x32xf32> to vector<16x32xf32>
    %44 = arith.mulf %42, %43 : vector<16x32xf32>
    %45 = vector.broadcast %24 : vector<1x32xf32> to vector<16x32xf32>
    %46 = arith.addf %44, %45 : vector<16x32xf32>
    %c0_18 = arith.constant 0 : index
    %c0_19 = arith.constant 0 : index
    %47 = vector.load %arg2[%c0_18, %c0_19] : memref<64x64xf32, #tpu.memory_space<vmem>>, vector<64x64xf32>
    %c0_20 = arith.constant 0 : index
    %c0_21 = arith.constant 0 : index
    %c0_22 = arith.constant 0 : index
    %48 = vector.load %arg3[%c0_20, %c0_21, %c0_22] : memref<2x32x96xf32, #tpu.memory_space<vmem>>, vector<1x32x96xf32>
    %49 = vector.shape_cast %48 : vector<1x32x96xf32> to vector<32x96xf32>
    %cst_23 = arith.constant dense<0.000000e+00> : vector<16x96xf32>
    %50 = tpu.matmul %46, %49, %cst_23 {dimension_numbers = #tpu.dot_dimension_numbers<[1], [0], [0], [1], [0, 0, 1, 1], [], []>} : vector<16x32xf32>, vector<32x96xf32>, vector<16x96xf32> -> vector<16x96xf32>
    %c4 = arith.constant 4 : index
    %c0_24 = arith.constant 0 : index
    %51 = vector.load %arg8[%c4, %c0_24] : memref<20x96xf32, #tpu.memory_space<vmem>>, vector<1x96xf32>
    %52 = vector.broadcast %51 : vector<1x96xf32> to vector<16x96xf32>
    %53 = arith.addf %50, %52 : vector<16x96xf32>
    %54 = vector.extract_strided_slice %53 {offsets = [0, 0], sizes = [16, 8], strides = [1, 1]} : vector<16x96xf32> to vector<16x8xf32>
    %55 = vector.extract_strided_slice %53 {offsets = [0, 8], sizes = [16, 8], strides = [1, 1]} : vector<16x96xf32> to vector<16x8xf32>
    %56 = vector.extract_strided_slice %53 {offsets = [0, 16], sizes = [16, 8], strides = [1, 1]} : vector<16x96xf32> to vector<16x8xf32>
    %57 = vector.extract_strided_slice %53 {offsets = [0, 24], sizes = [16, 8], strides = [1, 1]} : vector<16x96xf32> to vector<16x8xf32>
    %58 = tpu.concatenate %54, %55, %56, %57 in 0 : vector<16x8xf32>, vector<16x8xf32>, vector<16x8xf32>, vector<16x8xf32> -> vector<64x8xf32>
    %cst_25 = arith.constant 0.353553385 : f32
    %59 = vector.broadcast %cst_25 : f32 to vector<64x8xf32>
    %60 = arith.mulf %58, %59 : vector<64x8xf32>
    %61 = vector.extract_strided_slice %53 {offsets = [0, 32], sizes = [16, 8], strides = [1, 1]} : vector<16x96xf32> to vector<16x8xf32>
    %62 = vector.extract_strided_slice %53 {offsets = [0, 40], sizes = [16, 8], strides = [1, 1]} : vector<16x96xf32> to vector<16x8xf32>
    %63 = vector.extract_strided_slice %53 {offsets = [0, 48], sizes = [16, 8], strides = [1, 1]} : vector<16x96xf32> to vector<16x8xf32>
    %64 = vector.extract_strided_slice %53 {offsets = [0, 56], sizes = [16, 8], strides = [1, 1]} : vector<16x96xf32> to vector<16x8xf32>
    %65 = tpu.concatenate %61, %62, %63, %64 in 0 : vector<16x8xf32>, vector<16x8xf32>, vector<16x8xf32>, vector<16x8xf32> -> vector<64x8xf32>
    %66 = vector.extract_strided_slice %53 {offsets = [0, 64], sizes = [16, 8], strides = [1, 1]} : vector<16x96xf32> to vector<16x8xf32>
    %67 = vector.extract_strided_slice %53 {offsets = [0, 72], sizes = [16, 8], strides = [1, 1]} : vector<16x96xf32> to vector<16x8xf32>
    %68 = vector.extract_strided_slice %53 {offsets = [0, 80], sizes = [16, 8], strides = [1, 1]} : vector<16x96xf32> to vector<16x8xf32>
    %69 = vector.extract_strided_slice %53 {offsets = [0, 88], sizes = [16, 8], strides = [1, 1]} : vector<16x96xf32> to vector<16x8xf32>
    %70 = tpu.concatenate %66, %67, %68, %69 in 0 : vector<16x8xf32>, vector<16x8xf32>, vector<16x8xf32>, vector<16x8xf32> -> vector<64x8xf32>
    %cst_26 = arith.constant dense<0.000000e+00> : vector<64x64xf32>
    %71 = tpu.matmul %60, %65, %cst_26 {dimension_numbers = #tpu.dot_dimension_numbers<[1], [1], [0], [0], [0, 0, 1, 0], [], []>} : vector<64x8xf32>, vector<64x8xf32>, vector<64x64xf32> -> vector<64x64xf32>
    %72 = arith.addf %71, %47 : vector<64x64xf32>
    %cst_27 = arith.constant dense<0xFF800000> : vector<64xf32>
    %73 = vector.multi_reduction <maximumf>, %72, %cst_27 [1] : vector<64x64xf32> to vector<64xf32>
    %74 = vector.shape_cast %73 : vector<64xf32> to vector<64x1xf32>
    %75 = vector.broadcast %74 : vector<64x1xf32> to vector<64x64xf32>
    %76 = arith.subf %72, %75 : vector<64x64xf32>
    %77 = math.exp %76 : vector<64x64xf32>
    %cst_28 = arith.constant dense<0.000000e+00> : vector<64xf32>
    %78 = vector.multi_reduction <add>, %77, %cst_28 [1] : vector<64x64xf32> to vector<64xf32>
    %79 = vector.shape_cast %78 : vector<64xf32> to vector<64x1xf32>
    %80 = tpu.reciprocal %79 {approx = true} : vector<64x1xf32> -> vector<64x1xf32>
    %81 = vector.broadcast %80 : vector<64x1xf32> to vector<64x64xf32>
    %82 = arith.mulf %77, %81 : vector<64x64xf32>
    %cst_29 = arith.constant dense<0.000000e+00> : vector<64x8xf32>
    %83 = tpu.matmul %82, %70, %cst_29 {dimension_numbers = #tpu.dot_dimension_numbers<[1], [0], [0], [1], [0, 0, 1, 1], [], []>} : vector<64x64xf32>, vector<64x8xf32>, vector<64x8xf32> -> vector<64x8xf32>
    %c0_30 = arith.constant 0 : index
    %c0_31 = arith.constant 0 : index
    %c0_32 = arith.constant 0 : index
    %84 = vector.load %arg4[%c0_30, %c0_31, %c0_32] : memref<2x32x32xf32, #tpu.memory_space<vmem>>, vector<1x32x32xf32>
    %85 = vector.shape_cast %84 : vector<1x32x32xf32> to vector<32x32xf32>
    %86 = vector.extract_strided_slice %83 {offsets = [0, 0], sizes = [16, 8], strides = [1, 1]} : vector<64x8xf32> to vector<16x8xf32>
    %87 = vector.extract_strided_slice %85 {offsets = [0, 0], sizes = [8, 32], strides = [1, 1]} : vector<32x32xf32> to vector<8x32xf32>
    %cst_33 = arith.constant dense<0.000000e+00> : vector<16x32xf32>
    %88 = tpu.matmul %86, %87, %cst_33 {dimension_numbers = #tpu.dot_dimension_numbers<[1], [0], [0], [1], [0, 0, 1, 1], [], []>} : vector<16x8xf32>, vector<8x32xf32>, vector<16x32xf32> -> vector<16x32xf32>
    %89 = vector.extract_strided_slice %83 {offsets = [16, 0], sizes = [16, 8], strides = [1, 1]} : vector<64x8xf32> to vector<16x8xf32>
    %90 = vector.extract_strided_slice %85 {offsets = [8, 0], sizes = [8, 32], strides = [1, 1]} : vector<32x32xf32> to vector<8x32xf32>
    %cst_34 = arith.constant dense<0.000000e+00> : vector<16x32xf32>
    %91 = tpu.matmul %89, %90, %cst_34 {dimension_numbers = #tpu.dot_dimension_numbers<[1], [0], [0], [1], [0, 0, 1, 1], [], []>} : vector<16x8xf32>, vector<8x32xf32>, vector<16x32xf32> -> vector<16x32xf32>
    %92 = arith.addf %88, %91 : vector<16x32xf32>
    %93 = vector.extract_strided_slice %83 {offsets = [32, 0], sizes = [16, 8], strides = [1, 1]} : vector<64x8xf32> to vector<16x8xf32>
    %94 = vector.extract_strided_slice %85 {offsets = [16, 0], sizes = [8, 32], strides = [1, 1]} : vector<32x32xf32> to vector<8x32xf32>
    %cst_35 = arith.constant dense<0.000000e+00> : vector<16x32xf32>
    %95 = tpu.matmul %93, %94, %cst_35 {dimension_numbers = #tpu.dot_dimension_numbers<[1], [0], [0], [1], [0, 0, 1, 1], [], []>} : vector<16x8xf32>, vector<8x32xf32>, vector<16x32xf32> -> vector<16x32xf32>
    %96 = arith.addf %92, %95 : vector<16x32xf32>
    %97 = vector.extract_strided_slice %83 {offsets = [48, 0], sizes = [16, 8], strides = [1, 1]} : vector<64x8xf32> to vector<16x8xf32>
    %98 = vector.extract_strided_slice %85 {offsets = [24, 0], sizes = [8, 32], strides = [1, 1]} : vector<32x32xf32> to vector<8x32xf32>
    %cst_36 = arith.constant dense<0.000000e+00> : vector<16x32xf32>
    %99 = tpu.matmul %97, %98, %cst_36 {dimension_numbers = #tpu.dot_dimension_numbers<[1], [0], [0], [1], [0, 0, 1, 1], [], []>} : vector<16x8xf32>, vector<8x32xf32>, vector<16x32xf32> -> vector<16x32xf32>
    %100 = arith.addf %96, %99 : vector<16x32xf32>
    %101 = arith.addf %46, %100 : vector<16x32xf32>
    %c5 = arith.constant 5 : index
    %c0_37 = arith.constant 0 : index
    %102 = vector.load %arg8[%c5, %c0_37] : memref<20x96xf32, #tpu.memory_space<vmem>>, vector<1x32xf32>
    %103 = vector.broadcast %102 : vector<1x32xf32> to vector<16x32xf32>
    %104 = arith.addf %101, %103 : vector<16x32xf32>
    %c6 = arith.constant 6 : index
    %c0_38 = arith.constant 0 : index
    %105 = vector.load %arg8[%c6, %c0_38] : memref<20x96xf32, #tpu.memory_space<vmem>>, vector<1x32xf32>
    %c7 = arith.constant 7 : index
    %c0_39 = arith.constant 0 : index
    %106 = vector.load %arg8[%c7, %c0_39] : memref<20x96xf32, #tpu.memory_space<vmem>>, vector<1x32xf32>
    %cst_40 = arith.constant dense<0.000000e+00> : vector<16xf32>
    %107 = vector.multi_reduction <add>, %104, %cst_40 [1] : vector<16x32xf32> to vector<16xf32>
    %108 = vector.shape_cast %107 : vector<16xf32> to vector<16x1xf32>
    %cst_41 = arith.constant 3.200000e+01 : f32
    %109 = vector.broadcast %cst_41 : f32 to vector<16x1xf32>
    %110 = arith.divf %108, %109 : vector<16x1xf32>
    %111 = vector.broadcast %110 : vector<16x1xf32> to vector<16x32xf32>
    %112 = arith.subf %104, %111 : vector<16x32xf32>
    %113 = arith.mulf %112, %112 : vector<16x32xf32>
    %cst_42 = arith.constant dense<0.000000e+00> : vector<16xf32>
    %114 = vector.multi_reduction <add>, %113, %cst_42 [1] : vector<16x32xf32> to vector<16xf32>
    %115 = vector.shape_cast %114 : vector<16xf32> to vector<16x1xf32>
    %cst_43 = arith.constant 3.200000e+01 : f32
    %116 = vector.broadcast %cst_43 : f32 to vector<16x1xf32>
    %117 = arith.divf %115, %116 : vector<16x1xf32>
    %118 = vector.broadcast %110 : vector<16x1xf32> to vector<16x32xf32>
    %119 = arith.subf %104, %118 : vector<16x32xf32>
    %cst_44 = arith.constant 9.99999996E-13 : f32
    %120 = vector.broadcast %cst_44 : f32 to vector<16x1xf32>
    %121 = arith.addf %117, %120 : vector<16x1xf32>
    %122 = math.rsqrt %121 : vector<16x1xf32>
    %123 = vector.broadcast %122 : vector<16x1xf32> to vector<16x32xf32>
    %124 = arith.mulf %119, %123 : vector<16x32xf32>
    %125 = vector.broadcast %105 : vector<1x32xf32> to vector<16x32xf32>
    %126 = arith.mulf %124, %125 : vector<16x32xf32>
    %127 = vector.broadcast %106 : vector<1x32xf32> to vector<16x32xf32>
    %128 = arith.addf %126, %127 : vector<16x32xf32>
    %c0_45 = arith.constant 0 : index
    %c0_46 = arith.constant 0 : index
    %c0_47 = arith.constant 0 : index
    %129 = vector.load %arg5[%c0_45, %c0_46, %c0_47] : memref<2x32x64xf32, #tpu.memory_space<vmem>>, vector<1x32x64xf32>
    %130 = vector.shape_cast %129 : vector<1x32x64xf32> to vector<32x64xf32>
    %cst_48 = arith.constant dense<0.000000e+00> : vector<16x64xf32>
    %131 = tpu.matmul %128, %130, %cst_48 {dimension_numbers = #tpu.dot_dimension_numbers<[1], [0], [0], [1], [0, 0, 1, 1], [], []>} : vector<16x32xf32>, vector<32x64xf32>, vector<16x64xf32> -> vector<16x64xf32>
    %c8 = arith.constant 8 : index
    %c0_49 = arith.constant 0 : index
    %132 = vector.load %arg8[%c8, %c0_49] : memref<20x96xf32, #tpu.memory_space<vmem>>, vector<1x64xf32>
    %133 = vector.broadcast %132 : vector<1x64xf32> to vector<16x64xf32>
    %134 = arith.addf %131, %133 : vector<16x64xf32>
    %cst_50 = arith.constant 5.000000e-01 : f32
    %135 = vector.broadcast %cst_50 : f32 to vector<16x64xf32>
    %136 = arith.mulf %135, %134 : vector<16x64xf32>
    %cst_51 = arith.constant 4.471500e-02 : f32
    %137 = vector.broadcast %cst_51 : f32 to vector<16x64xf32>
    %138 = arith.mulf %137, %134 : vector<16x64xf32>
    %139 = arith.mulf %138, %134 : vector<16x64xf32>
    %140 = arith.mulf %139, %134 : vector<16x64xf32>
    %141 = arith.addf %134, %140 : vector<16x64xf32>
    %cst_52 = arith.constant 0.797884583 : f32
    %142 = vector.broadcast %cst_52 : f32 to vector<16x64xf32>
    %143 = arith.mulf %142, %141 : vector<16x64xf32>
    %144 = math.tanh %143 : vector<16x64xf32>
    %cst_53 = arith.constant 1.000000e+00 : f32
    %145 = vector.broadcast %cst_53 : f32 to vector<16x64xf32>
    %146 = arith.addf %145, %144 : vector<16x64xf32>
    %147 = arith.mulf %136, %146 : vector<16x64xf32>
    %c0_54 = arith.constant 0 : index
    %c0_55 = arith.constant 0 : index
    %c0_56 = arith.constant 0 : index
    %148 = vector.load %arg6[%c0_54, %c0_55, %c0_56] : memref<2x64x32xf32, #tpu.memory_space<vmem>>, vector<1x64x32xf32>
    %149 = vector.shape_cast %148 : vector<1x64x32xf32> to vector<64x32xf32>
    %cst_57 = arith.constant dense<0.000000e+00> : vector<16x32xf32>
    %150 = tpu.matmul %147, %149, %cst_57 {dimension_numbers = #tpu.dot_dimension_numbers<[1], [0], [0], [1], [0, 0, 1, 1], [], []>} : vector<16x64xf32>, vector<64x32xf32>, vector<16x32xf32> -> vector<16x32xf32>
    %c9 = arith.constant 9 : index
    %c0_58 = arith.constant 0 : index
    %151 = vector.load %arg8[%c9, %c0_58] : memref<20x96xf32, #tpu.memory_space<vmem>>, vector<1x32xf32>
    %152 = vector.broadcast %151 : vector<1x32xf32> to vector<16x32xf32>
    %153 = arith.addf %150, %152 : vector<16x32xf32>
    %154 = arith.addf %128, %153 : vector<16x32xf32>
    %c10 = arith.constant 10 : index
    %c0_59 = arith.constant 0 : index
    %155 = vector.load %arg8[%c10, %c0_59] : memref<20x96xf32, #tpu.memory_space<vmem>>, vector<1x32xf32>
    %c11 = arith.constant 11 : index
    %c0_60 = arith.constant 0 : index
    %156 = vector.load %arg8[%c11, %c0_60] : memref<20x96xf32, #tpu.memory_space<vmem>>, vector<1x32xf32>
    %cst_61 = arith.constant dense<0.000000e+00> : vector<16xf32>
    %157 = vector.multi_reduction <add>, %154, %cst_61 [1] : vector<16x32xf32> to vector<16xf32>
    %158 = vector.shape_cast %157 : vector<16xf32> to vector<16x1xf32>
    %cst_62 = arith.constant 3.200000e+01 : f32
    %159 = vector.broadcast %cst_62 : f32 to vector<16x1xf32>
    %160 = arith.divf %158, %159 : vector<16x1xf32>
    %161 = vector.broadcast %160 : vector<16x1xf32> to vector<16x32xf32>
    %162 = arith.subf %154, %161 : vector<16x32xf32>
    %163 = arith.mulf %162, %162 : vector<16x32xf32>
    %cst_63 = arith.constant dense<0.000000e+00> : vector<16xf32>
    %164 = vector.multi_reduction <add>, %163, %cst_63 [1] : vector<16x32xf32> to vector<16xf32>
    %165 = vector.shape_cast %164 : vector<16xf32> to vector<16x1xf32>
    %cst_64 = arith.constant 3.200000e+01 : f32
    %166 = vector.broadcast %cst_64 : f32 to vector<16x1xf32>
    %167 = arith.divf %165, %166 : vector<16x1xf32>
    %168 = vector.broadcast %160 : vector<16x1xf32> to vector<16x32xf32>
    %169 = arith.subf %154, %168 : vector<16x32xf32>
    %cst_65 = arith.constant 9.99999996E-13 : f32
    %170 = vector.broadcast %cst_65 : f32 to vector<16x1xf32>
    %171 = arith.addf %167, %170 : vector<16x1xf32>
    %172 = math.rsqrt %171 : vector<16x1xf32>
    %173 = vector.broadcast %172 : vector<16x1xf32> to vector<16x32xf32>
    %174 = arith.mulf %169, %173 : vector<16x32xf32>
    %175 = vector.broadcast %155 : vector<1x32xf32> to vector<16x32xf32>
    %176 = arith.mulf %174, %175 : vector<16x32xf32>
    %177 = vector.broadcast %156 : vector<1x32xf32> to vector<16x32xf32>
    %178 = arith.addf %176, %177 : vector<16x32xf32>
    %c1_66 = arith.constant 1 : index
    %c0_67 = arith.constant 0 : index
    %c0_68 = arith.constant 0 : index
    %179 = vector.load %arg3[%c1_66, %c0_67, %c0_68] : memref<2x32x96xf32, #tpu.memory_space<vmem>>, vector<1x32x96xf32>
    %180 = vector.shape_cast %179 : vector<1x32x96xf32> to vector<32x96xf32>
    %cst_69 = arith.constant dense<0.000000e+00> : vector<16x96xf32>
    %181 = tpu.matmul %178, %180, %cst_69 {dimension_numbers = #tpu.dot_dimension_numbers<[1], [0], [0], [1], [0, 0, 1, 1], [], []>} : vector<16x32xf32>, vector<32x96xf32>, vector<16x96xf32> -> vector<16x96xf32>
    %c12 = arith.constant 12 : index
    %c0_70 = arith.constant 0 : index
    %182 = vector.load %arg8[%c12, %c0_70] : memref<20x96xf32, #tpu.memory_space<vmem>>, vector<1x96xf32>
    %183 = vector.broadcast %182 : vector<1x96xf32> to vector<16x96xf32>
    %184 = arith.addf %181, %183 : vector<16x96xf32>
    %185 = vector.extract_strided_slice %184 {offsets = [0, 0], sizes = [16, 8], strides = [1, 1]} : vector<16x96xf32> to vector<16x8xf32>
    %186 = vector.extract_strided_slice %184 {offsets = [0, 8], sizes = [16, 8], strides = [1, 1]} : vector<16x96xf32> to vector<16x8xf32>
    %187 = vector.extract_strided_slice %184 {offsets = [0, 16], sizes = [16, 8], strides = [1, 1]} : vector<16x96xf32> to vector<16x8xf32>
    %188 = vector.extract_strided_slice %184 {offsets = [0, 24], sizes = [16, 8], strides = [1, 1]} : vector<16x96xf32> to vector<16x8xf32>
    %189 = tpu.concatenate %185, %186, %187, %188 in 0 : vector<16x8xf32>, vector<16x8xf32>, vector<16x8xf32>, vector<16x8xf32> -> vector<64x8xf32>
    %cst_71 = arith.constant 0.353553385 : f32
    %190 = vector.broadcast %cst_71 : f32 to vector<64x8xf32>
    %191 = arith.mulf %189, %190 : vector<64x8xf32>
    %192 = vector.extract_strided_slice %184 {offsets = [0, 32], sizes = [16, 8], strides = [1, 1]} : vector<16x96xf32> to vector<16x8xf32>
    %193 = vector.extract_strided_slice %184 {offsets = [0, 40], sizes = [16, 8], strides = [1, 1]} : vector<16x96xf32> to vector<16x8xf32>
    %194 = vector.extract_strided_slice %184 {offsets = [0, 48], sizes = [16, 8], strides = [1, 1]} : vector<16x96xf32> to vector<16x8xf32>
    %195 = vector.extract_strided_slice %184 {offsets = [0, 56], sizes = [16, 8], strides = [1, 1]} : vector<16x96xf32> to vector<16x8xf32>
    %196 = tpu.concatenate %192, %193, %194, %195 in 0 : vector<16x8xf32>, vector<16x8xf32>, vector<16x8xf32>, vector<16x8xf32> -> vector<64x8xf32>
    %197 = vector.extract_strided_slice %184 {offsets = [0, 64], sizes = [16, 8], strides = [1, 1]} : vector<16x96xf32> to vector<16x8xf32>
    %198 = vector.extract_strided_slice %184 {offsets = [0, 72], sizes = [16, 8], strides = [1, 1]} : vector<16x96xf32> to vector<16x8xf32>
    %199 = vector.extract_strided_slice %184 {offsets = [0, 80], sizes = [16, 8], strides = [1, 1]} : vector<16x96xf32> to vector<16x8xf32>
    %200 = vector.extract_strided_slice %184 {offsets = [0, 88], sizes = [16, 8], strides = [1, 1]} : vector<16x96xf32> to vector<16x8xf32>
    %201 = tpu.concatenate %197, %198, %199, %200 in 0 : vector<16x8xf32>, vector<16x8xf32>, vector<16x8xf32>, vector<16x8xf32> -> vector<64x8xf32>
    %cst_72 = arith.constant dense<0.000000e+00> : vector<64x64xf32>
    %202 = tpu.matmul %191, %196, %cst_72 {dimension_numbers = #tpu.dot_dimension_numbers<[1], [1], [0], [0], [0, 0, 1, 0], [], []>} : vector<64x8xf32>, vector<64x8xf32>, vector<64x64xf32> -> vector<64x64xf32>
    %203 = arith.addf %202, %47 : vector<64x64xf32>
    %cst_73 = arith.constant dense<0xFF800000> : vector<64xf32>
    %204 = vector.multi_reduction <maximumf>, %203, %cst_73 [1] : vector<64x64xf32> to vector<64xf32>
    %205 = vector.shape_cast %204 : vector<64xf32> to vector<64x1xf32>
    %206 = vector.broadcast %205 : vector<64x1xf32> to vector<64x64xf32>
    %207 = arith.subf %203, %206 : vector<64x64xf32>
    %208 = math.exp %207 : vector<64x64xf32>
    %cst_74 = arith.constant dense<0.000000e+00> : vector<64xf32>
    %209 = vector.multi_reduction <add>, %208, %cst_74 [1] : vector<64x64xf32> to vector<64xf32>
    %210 = vector.shape_cast %209 : vector<64xf32> to vector<64x1xf32>
    %211 = tpu.reciprocal %210 {approx = true} : vector<64x1xf32> -> vector<64x1xf32>
    %212 = vector.broadcast %211 : vector<64x1xf32> to vector<64x64xf32>
    %213 = arith.mulf %208, %212 : vector<64x64xf32>
    %cst_75 = arith.constant dense<0.000000e+00> : vector<64x8xf32>
    %214 = tpu.matmul %213, %201, %cst_75 {dimension_numbers = #tpu.dot_dimension_numbers<[1], [0], [0], [1], [0, 0, 1, 1], [], []>} : vector<64x64xf32>, vector<64x8xf32>, vector<64x8xf32> -> vector<64x8xf32>
    %c1_76 = arith.constant 1 : index
    %c0_77 = arith.constant 0 : index
    %c0_78 = arith.constant 0 : index
    %215 = vector.load %arg4[%c1_76, %c0_77, %c0_78] : memref<2x32x32xf32, #tpu.memory_space<vmem>>, vector<1x32x32xf32>
    %216 = vector.shape_cast %215 : vector<1x32x32xf32> to vector<32x32xf32>
    %217 = vector.extract_strided_slice %214 {offsets = [0, 0], sizes = [16, 8], strides = [1, 1]} : vector<64x8xf32> to vector<16x8xf32>
    %218 = vector.extract_strided_slice %216 {offsets = [0, 0], sizes = [8, 32], strides = [1, 1]} : vector<32x32xf32> to vector<8x32xf32>
    %cst_79 = arith.constant dense<0.000000e+00> : vector<16x32xf32>
    %219 = tpu.matmul %217, %218, %cst_79 {dimension_numbers = #tpu.dot_dimension_numbers<[1], [0], [0], [1], [0, 0, 1, 1], [], []>} : vector<16x8xf32>, vector<8x32xf32>, vector<16x32xf32> -> vector<16x32xf32>
    %220 = vector.extract_strided_slice %214 {offsets = [16, 0], sizes = [16, 8], strides = [1, 1]} : vector<64x8xf32> to vector<16x8xf32>
    %221 = vector.extract_strided_slice %216 {offsets = [8, 0], sizes = [8, 32], strides = [1, 1]} : vector<32x32xf32> to vector<8x32xf32>
    %cst_80 = arith.constant dense<0.000000e+00> : vector<16x32xf32>
    %222 = tpu.matmul %220, %221, %cst_80 {dimension_numbers = #tpu.dot_dimension_numbers<[1], [0], [0], [1], [0, 0, 1, 1], [], []>} : vector<16x8xf32>, vector<8x32xf32>, vector<16x32xf32> -> vector<16x32xf32>
    %223 = arith.addf %219, %222 : vector<16x32xf32>
    %224 = vector.extract_strided_slice %214 {offsets = [32, 0], sizes = [16, 8], strides = [1, 1]} : vector<64x8xf32> to vector<16x8xf32>
    %225 = vector.extract_strided_slice %216 {offsets = [16, 0], sizes = [8, 32], strides = [1, 1]} : vector<32x32xf32> to vector<8x32xf32>
    %cst_81 = arith.constant dense<0.000000e+00> : vector<16x32xf32>
    %226 = tpu.matmul %224, %225, %cst_81 {dimension_numbers = #tpu.dot_dimension_numbers<[1], [0], [0], [1], [0, 0, 1, 1], [], []>} : vector<16x8xf32>, vector<8x32xf32>, vector<16x32xf32> -> vector<16x32xf32>
    %227 = arith.addf %223, %226 : vector<16x32xf32>
    %228 = vector.extract_strided_slice %214 {offsets = [48, 0], sizes = [16, 8], strides = [1, 1]} : vector<64x8xf32> to vector<16x8xf32>
    %229 = vector.extract_strided_slice %216 {offsets = [24, 0], sizes = [8, 32], strides = [1, 1]} : vector<32x32xf32> to vector<8x32xf32>
    %cst_82 = arith.constant dense<0.000000e+00> : vector<16x32xf32>
    %230 = tpu.matmul %228, %229, %cst_82 {dimension_numbers = #tpu.dot_dimension_numbers<[1], [0], [0], [1], [0, 0, 1, 1], [], []>} : vector<16x8xf32>, vector<8x32xf32>, vector<16x32xf32> -> vector<16x32xf32>
    %231 = arith.addf %227, %230 : vector<16x32xf32>
    %232 = arith.addf %178, %231 : vector<16x32xf32>
    %c13 = arith.constant 13 : index
    %c0_83 = arith.constant 0 : index
    %233 = vector.load %arg8[%c13, %c0_83] : memref<20x96xf32, #tpu.memory_space<vmem>>, vector<1x32xf32>
    %234 = vector.broadcast %233 : vector<1x32xf32> to vector<16x32xf32>
    %235 = arith.addf %232, %234 : vector<16x32xf32>
    %c14 = arith.constant 14 : index
    %c0_84 = arith.constant 0 : index
    %236 = vector.load %arg8[%c14, %c0_84] : memref<20x96xf32, #tpu.memory_space<vmem>>, vector<1x32xf32>
    %c15 = arith.constant 15 : index
    %c0_85 = arith.constant 0 : index
    %237 = vector.load %arg8[%c15, %c0_85] : memref<20x96xf32, #tpu.memory_space<vmem>>, vector<1x32xf32>
    %cst_86 = arith.constant dense<0.000000e+00> : vector<16xf32>
    %238 = vector.multi_reduction <add>, %235, %cst_86 [1] : vector<16x32xf32> to vector<16xf32>
    %239 = vector.shape_cast %238 : vector<16xf32> to vector<16x1xf32>
    %cst_87 = arith.constant 3.200000e+01 : f32
    %240 = vector.broadcast %cst_87 : f32 to vector<16x1xf32>
    %241 = arith.divf %239, %240 : vector<16x1xf32>
    %242 = vector.broadcast %241 : vector<16x1xf32> to vector<16x32xf32>
    %243 = arith.subf %235, %242 : vector<16x32xf32>
    %244 = arith.mulf %243, %243 : vector<16x32xf32>
    %cst_88 = arith.constant dense<0.000000e+00> : vector<16xf32>
    %245 = vector.multi_reduction <add>, %244, %cst_88 [1] : vector<16x32xf32> to vector<16xf32>
    %246 = vector.shape_cast %245 : vector<16xf32> to vector<16x1xf32>
    %cst_89 = arith.constant 3.200000e+01 : f32
    %247 = vector.broadcast %cst_89 : f32 to vector<16x1xf32>
    %248 = arith.divf %246, %247 : vector<16x1xf32>
    %249 = vector.broadcast %241 : vector<16x1xf32> to vector<16x32xf32>
    %250 = arith.subf %235, %249 : vector<16x32xf32>
    %cst_90 = arith.constant 9.99999996E-13 : f32
    %251 = vector.broadcast %cst_90 : f32 to vector<16x1xf32>
    %252 = arith.addf %248, %251 : vector<16x1xf32>
    %253 = math.rsqrt %252 : vector<16x1xf32>
    %254 = vector.broadcast %253 : vector<16x1xf32> to vector<16x32xf32>
    %255 = arith.mulf %250, %254 : vector<16x32xf32>
    %256 = vector.broadcast %236 : vector<1x32xf32> to vector<16x32xf32>
    %257 = arith.mulf %255, %256 : vector<16x32xf32>
    %258 = vector.broadcast %237 : vector<1x32xf32> to vector<16x32xf32>
    %259 = arith.addf %257, %258 : vector<16x32xf32>
    %c1_91 = arith.constant 1 : index
    %c0_92 = arith.constant 0 : index
    %c0_93 = arith.constant 0 : index
    %260 = vector.load %arg5[%c1_91, %c0_92, %c0_93] : memref<2x32x64xf32, #tpu.memory_space<vmem>>, vector<1x32x64xf32>
    %261 = vector.shape_cast %260 : vector<1x32x64xf32> to vector<32x64xf32>
    %cst_94 = arith.constant dense<0.000000e+00> : vector<16x64xf32>
    %262 = tpu.matmul %259, %261, %cst_94 {dimension_numbers = #tpu.dot_dimension_numbers<[1], [0], [0], [1], [0, 0, 1, 1], [], []>} : vector<16x32xf32>, vector<32x64xf32>, vector<16x64xf32> -> vector<16x64xf32>
    %c16 = arith.constant 16 : index
    %c0_95 = arith.constant 0 : index
    %263 = vector.load %arg8[%c16, %c0_95] : memref<20x96xf32, #tpu.memory_space<vmem>>, vector<1x64xf32>
    %264 = vector.broadcast %263 : vector<1x64xf32> to vector<16x64xf32>
    %265 = arith.addf %262, %264 : vector<16x64xf32>
    %cst_96 = arith.constant 5.000000e-01 : f32
    %266 = vector.broadcast %cst_96 : f32 to vector<16x64xf32>
    %267 = arith.mulf %266, %265 : vector<16x64xf32>
    %cst_97 = arith.constant 4.471500e-02 : f32
    %268 = vector.broadcast %cst_97 : f32 to vector<16x64xf32>
    %269 = arith.mulf %268, %265 : vector<16x64xf32>
    %270 = arith.mulf %269, %265 : vector<16x64xf32>
    %271 = arith.mulf %270, %265 : vector<16x64xf32>
    %272 = arith.addf %265, %271 : vector<16x64xf32>
    %cst_98 = arith.constant 0.797884583 : f32
    %273 = vector.broadcast %cst_98 : f32 to vector<16x64xf32>
    %274 = arith.mulf %273, %272 : vector<16x64xf32>
    %275 = math.tanh %274 : vector<16x64xf32>
    %cst_99 = arith.constant 1.000000e+00 : f32
    %276 = vector.broadcast %cst_99 : f32 to vector<16x64xf32>
    %277 = arith.addf %276, %275 : vector<16x64xf32>
    %278 = arith.mulf %267, %277 : vector<16x64xf32>
    %c1_100 = arith.constant 1 : index
    %c0_101 = arith.constant 0 : index
    %c0_102 = arith.constant 0 : index
    %279 = vector.load %arg6[%c1_100, %c0_101, %c0_102] : memref<2x64x32xf32, #tpu.memory_space<vmem>>, vector<1x64x32xf32>
    %280 = vector.shape_cast %279 : vector<1x64x32xf32> to vector<64x32xf32>
    %cst_103 = arith.constant dense<0.000000e+00> : vector<16x32xf32>
    %281 = tpu.matmul %278, %280, %cst_103 {dimension_numbers = #tpu.dot_dimension_numbers<[1], [0], [0], [1], [0, 0, 1, 1], [], []>} : vector<16x64xf32>, vector<64x32xf32>, vector<16x32xf32> -> vector<16x32xf32>
    %c17 = arith.constant 17 : index
    %c0_104 = arith.constant 0 : index
    %282 = vector.load %arg8[%c17, %c0_104] : memref<20x96xf32, #tpu.memory_space<vmem>>, vector<1x32xf32>
    %283 = vector.broadcast %282 : vector<1x32xf32> to vector<16x32xf32>
    %284 = arith.addf %281, %283 : vector<16x32xf32>
    %285 = arith.addf %259, %284 : vector<16x32xf32>
    %c18 = arith.constant 18 : index
    %c0_105 = arith.constant 0 : index
    %286 = vector.load %arg8[%c18, %c0_105] : memref<20x96xf32, #tpu.memory_space<vmem>>, vector<1x32xf32>
    %c19 = arith.constant 19 : index
    %c0_106 = arith.constant 0 : index
    %287 = vector.load %arg8[%c19, %c0_106] : memref<20x96xf32, #tpu.memory_space<vmem>>, vector<1x32xf32>
    %cst_107 = arith.constant dense<0.000000e+00> : vector<16xf32>
    %288 = vector.multi_reduction <add>, %285, %cst_107 [1] : vector<16x32xf32> to vector<16xf32>
    %289 = vector.shape_cast %288 : vector<16xf32> to vector<16x1xf32>
    %cst_108 = arith.constant 3.200000e+01 : f32
    %290 = vector.broadcast %cst_108 : f32 to vector<16x1xf32>
    %291 = arith.divf %289, %290 : vector<16x1xf32>
    %292 = vector.broadcast %291 : vector<16x1xf32> to vector<16x32xf32>
    %293 = arith.subf %285, %292 : vector<16x32xf32>
    %294 = arith.mulf %293, %293 : vector<16x32xf32>
    %cst_109 = arith.constant dense<0.000000e+00> : vector<16xf32>
    %295 = vector.multi_reduction <add>, %294, %cst_109 [1] : vector<16x32xf32> to vector<16xf32>
    %296 = vector.shape_cast %295 : vector<16xf32> to vector<16x1xf32>
    %cst_110 = arith.constant 3.200000e+01 : f32
    %297 = vector.broadcast %cst_110 : f32 to vector<16x1xf32>
    %298 = arith.divf %296, %297 : vector<16x1xf32>
    %299 = vector.broadcast %291 : vector<16x1xf32> to vector<16x32xf32>
    %300 = arith.subf %285, %299 : vector<16x32xf32>
    %cst_111 = arith.constant 9.99999996E-13 : f32
    %301 = vector.broadcast %cst_111 : f32 to vector<16x1xf32>
    %302 = arith.addf %298, %301 : vector<16x1xf32>
    %303 = math.rsqrt %302 : vector<16x1xf32>
    %304 = vector.broadcast %303 : vector<16x1xf32> to vector<16x32xf32>
    %305 = arith.mulf %300, %304 : vector<16x32xf32>
    %306 = vector.broadcast %286 : vector<1x32xf32> to vector<16x32xf32>
    %307 = arith.mulf %305, %306 : vector<16x32xf32>
    %308 = vector.broadcast %287 : vector<1x32xf32> to vector<16x32xf32>
    %309 = arith.addf %307, %308 : vector<16x32xf32>
    %310 = vector.extract_strided_slice %309 {offsets = [0, 0], sizes = [1, 32], strides = [1, 1]} : vector<16x32xf32> to vector<1x32xf32>
    %311 = vector.extract_strided_slice %309 {offsets = [8, 0], sizes = [1, 32], strides = [1, 1]} : vector<16x32xf32> to vector<1x32xf32>
    %312 = tpu.concatenate %310, %311 in 0 : vector<1x32xf32>, vector<1x32xf32> -> vector<2x32xf32>
    %c0_112 = arith.constant 0 : index
    %c0_113 = arith.constant 0 : index
    %313 = vector.load %arg7[%c0_112, %c0_113] : memref<32x34xf32, #tpu.memory_space<vmem>>, vector<32x32xf32>
    %cst_114 = arith.constant dense<0.000000e+00> : vector<2x32xf32>
    %314 = tpu.matmul %312, %313, %cst_114 {dimension_numbers = #tpu.dot_dimension_numbers<[1], [0], [0], [1], [0, 0, 1, 1], [], []>} : vector<2x32xf32>, vector<32x32xf32>, vector<2x32xf32> -> vector<2x32xf32>
    %c2 = arith.constant 2 : index
    %c0_115 = arith.constant 0 : index
    %315 = vector.load %arg8[%c2, %c0_115] : memref<20x96xf32, #tpu.memory_space<vmem>>, vector<1x32xf32>
    %316 = vector.broadcast %315 : vector<1x32xf32> to vector<2x32xf32>
    %317 = arith.addf %314, %316 : vector<2x32xf32>
    %318 = math.tanh %317 : vector<2x32xf32>
    %c0_116 = arith.constant 0 : index
    %c32 = arith.constant 32 : index
    %319 = vector.load %arg7[%c0_116, %c32] : memref<32x34xf32, #tpu.memory_space<vmem>>, vector<32x2xf32>
    %cst_117 = arith.constant dense<0.000000e+00> : vector<2x2xf32>
    %320 = tpu.matmul %318, %319, %cst_117 {dimension_numbers = #tpu.dot_dimension_numbers<[1], [0], [0], [1], [0, 0, 1, 1], [], []>} : vector<2x32xf32>, vector<32x2xf32>, vector<2x2xf32> -> vector<2x2xf32>
    %c3 = arith.constant 3 : index
    %c0_118 = arith.constant 0 : index
    %321 = vector.load %arg8[%c3, %c0_118] : memref<20x96xf32, #tpu.memory_space<vmem>>, vector<1x2xf32>
    %322 = vector.broadcast %321 : vector<1x2xf32> to vector<2x2xf32>
    %323 = arith.addf %320, %322 : vector<2x2xf32>
    %c0_119 = arith.constant 0 : index
    %c0_120 = arith.constant 0 : index
    %324 = vector.load %arg9[%c0_119, %c0_120] : memref<2x2xf32, #tpu.memory_space<vmem>>, vector<2x2xf32>
    tpu.vector_store %arg9[%c0_119, %c0_120], %323 {strides = array<i32>} : memref<2x2xf32, #tpu.memory_space<vmem>>, vector<2x2xf32>,
    return
  }
}

</mosaic_0001>

<llo_original>
// kernel: bert_forward.1
$region0: #{bert_forward.1}
  #allocation0 [shape = 'u32[]', space=smem, size = 0x4, offset = 0x4, fixed_abs, tag = 'smem constant byte address 0x4 - core index']
  #allocation1 [shape = 'u32[144,128]{1,0:T(1,128)}', space=vmem, size = 0x12000, scoped, tag = 'internal scratch']
  %s0 = inlined_call_operand.vmem [shape: s32[16,2], index: 0, kind: input, shape index: {}]
  %s1 = inlined_call_operand.vmem [shape: f32[82,32], index: 1, kind: input, shape index: {}]
  %s2 = inlined_call_operand.vmem [shape: f32[64,64], index: 2, kind: input, shape index: {}]
  %s3 = inlined_call_operand.vmem [shape: f32[2,32,96], index: 3, kind: input, shape index: {}]
  %s4 = inlined_call_operand.vmem [shape: f32[2,32,32], index: 4, kind: input, shape index: {}]
  %s5 = inlined_call_operand.vmem [shape: f32[2,32,64], index: 5, kind: input, shape index: {}]
  %s6 = inlined_call_operand.vmem [shape: f32[2,64,32], index: 6, kind: input, shape index: {}]
  %s7 = inlined_call_operand.vmem [shape: f32[32,34], index: 7, kind: input, shape index: {}]
  %s8 = inlined_call_operand.vmem [shape: f32[20,96], index: 8, kind: input, shape index: {}]
  %s9 = inlined_call_operand.hbm [shape: f32[2,2], index: 9, kind: output, shape index: {}]
  %s10 = sld [smem:[#allocation0]]
  $region46: #{bert_forward.1} parent=0
    _
  %s12 = ssub.s32 1, %s10
  %s13 = scalar_select 0, %s12, %s10
  $region1: #{bert_forward.1} parent=0
    #allocation2 [shape = 'u8[1024]{0}', space=vmem, size = 0x400, scoped, tag = 'output window, operand 0, single buffered']
    #allocation3 [shape = 's32[1]{0}', space=sflag, size = 0x4, scoped, tag = 'scoped memory for bert_forward.1']
    %14 = vsyncpa [#allocation3], 0
    // Predicated region
    $region2: #{bert_forward.1} parent=1 // pred_check
      _
    $region3: #{bert_forward.1} parent=1 // pred_check_branch
      %16 = sbr.rel (0) target = $region5
    $region4: #{bert_forward.1} parent=1 // pred_region
      _
    $region5: #{bert_forward.1} parent=1 // pred_fallthru
      _
    // Predicated region
    $region6: #{bert_forward.1} parent=1 // pred_check
      _
    $region7: #{bert_forward.1} parent=1 // pred_check_branch
      %18 = sbr.rel (0) target = $region9
    $region8: #{bert_forward.1} parent=1 // pred_region
      _
    $region9: #{bert_forward.1} parent=1 // pred_fallthru
      _
    // Predicated region
    $region10: #{bert_forward.1} parent=1 // pred_check
      _
    $region11: #{bert_forward.1} parent=1 // pred_check_branch
      %20 = sbr.rel (0) target = $region13
    $region12: #{bert_forward.1} parent=1 // pred_region
      _
    $region13: #{bert_forward.1} parent=1 // pred_fallthru
      _
    // Predicated region
    $region14: #{bert_forward.1} parent=1 // pred_check
      _
    $region15: #{bert_forward.1} parent=1 // pred_check_branch
      %22 = sbr.rel (0) target = $region17
    $region16: #{bert_forward.1} parent=1 // pred_region
      _
    $region17: #{bert_forward.1} parent=1 // pred_fallthru
      _
    // Predicated region
    $region18: #{bert_forward.1} parent=1 // pred_check
      _
    $region19: #{bert_forward.1} parent=1 // pred_check_branch
      %24 = sbr.rel (0) target = $region21
    $region20: #{bert_forward.1} parent=1 // pred_region
      _
    $region21: #{bert_forward.1} parent=1 // pred_fallthru
      _
    // Predicated region
    $region22: #{bert_forward.1} parent=1 // pred_check
      _
    $region23: #{bert_forward.1} parent=1 // pred_check_branch
      %26 = sbr.rel (0) target = $region25
    $region24: #{bert_forward.1} parent=1 // pred_region
      _
    $region25: #{bert_forward.1} parent=1 // pred_fallthru
      _
    // Predicated region
    $region26: #{bert_forward.1} parent=1 // pred_check
      _
    $region27: #{bert_forward.1} parent=1 // pred_check_branch
      %28 = sbr.rel (0) target = $region29
    $region28: #{bert_forward.1} parent=1 // pred_region
      _
    $region29: #{bert_forward.1} parent=1 // pred_fallthru
      _
    // Predicated region
    $region30: #{bert_forward.1} parent=1 // pred_check
      _
    $region31: #{bert_forward.1} parent=1 // pred_check_branch
      %30 = sbr.rel (0) target = $region33
    $region32: #{bert_forward.1} parent=1 // pred_region
      _
    $region33: #{bert_forward.1} parent=1 // pred_fallthru
      _
    // Predicated region
    $region34: #{bert_forward.1} parent=1 // pred_check
      _
    $region35: #{bert_forward.1} parent=1 // pred_check_branch
      %32 = sbr.rel (0) target = $region37
    $region36: #{bert_forward.1} parent=1 // pred_region
      _
    $region37: #{bert_forward.1} parent=1 // pred_fallthru
      _
    %v33 = vld [vmem:[%s0] sm:$0xff]
    %v34 = vld [vmem:[%s0 + $0x8] sm:$0xff]
    %v35 = vlaneseq
    %v36 = vand.u32 %v35, 127
    %37 = vset.pattern.permute.xlu0 0
    %38 = vperm.xlu0 %37, %v33
    %v39 = vpop.permute.xlu0 %38
    %40 = vset.pattern.permute.xlu0 0
    %41 = vperm.xlu0 %40, %v34
    %v42 = vpop.permute.xlu0 %41
    %vm43 = vcmp.eq.s32.totalorder %v39, %v36
    %vm44 = vcmp.eq.s32.totalorder %v42, %v36
    %v45 = vsel %vm43, 1.0, 0.0
    %v46 = vsel %vm44, 1.0, 0.0
    %47 = vset.pattern.permute.xlu0 1
    %48 = vperm.xlu0 %47, %v33
    %v49 = vpop.permute.xlu0 %48
    %50 = vset.pattern.permute.xlu0 1
    %51 = vperm.xlu0 %50, %v34
    %v52 = vpop.permute.xlu0 %51
    %vm53 = vcmp.eq.s32.totalorder %v49, %v36
    %vm54 = vcmp.eq.s32.totalorder %v52, %v36
    %v55 = vsel %vm53, 1.0, 0.0
    %v56 = vsel %vm54, 1.0, 0.0
    %v57 = vld [vmem:[%s1] sm:$0xff]
    %v58 = vld [vmem:[%s1 + $0x8] sm:$0xff]
    %v59 = vld [vmem:[%s1 + $0x10] sm:$0xff]
    %v60 = vld [vmem:[%s1 + $0x18] sm:$0xff]
    %v61 = vld [vmem:[%s1 + $0x20] sm:$0xff]
    %v62 = vld [vmem:[%s1 + $0x28] sm:$0xff]
    %v63 = vld [vmem:[%s1 + $0x30] sm:$0xff]
    %v64 = vld [vmem:[%s1 + $0x38] sm:$0xff]
    %v65 = vld [vmem:[%s1 + $0x40] sm:$0xff]
    %v66 = vld [vmem:[%s1 + $0x50] sm:$0x3]
    %vm67 = vcmask 15360
    %v69 = vsel %vm67, %v55, 0
    %v72 = vsel %vm67, %v56, 0
    %vm74 = vcmask 1041408
    %v76 = vsel %vm74, %v66, 0
    %78 = vmatprep.subr.mxu0 0.0
    %79 = vmatpush1.msra.mxu0 %v76
    %80 = vmatprep.subr.mxu0 0.0
    %81 = vmatpush1.msra.mxu0 0.0
    %82 = vmatprep.subr.mxu0 0.0
    %83 = vmatpush1.msra.mxu0 0.0
    %84 = vmatprep.subr.mxu0 0.0
    %85 = vmatpush1.msra.mxu0 0.0
    %86 = vmatprep.subr.mxu0 0.0
    %87 = vmatpush1.msra.mxu0 0.0
    %88 = vmatprep.subr.mxu0 0.0
    %89 = vmatpush1.msra.mxu0 0.0
    %90 = vmatprep.subr.mxu0 0.0
    %91 = vmatpush1.msra.mxu0 0.0
    %92 = vmatprep.subr.mxu0 0.0
    %93 = vmatpush1.msra.mxu0 0.0
    %94 = vmatprep.subr.mxu0 0.0
    %95 = vmatpush1.msra.mxu0 0.0
    %96 = vmatprep.subr.mxu0 0.0
    %97 = vmatpush1.msra.mxu0 0.0
    %98 = vmatprep.subr.mxu0 0.0
    %99 = vmatpush1.msra.mxu0 0.0
    %100 = vmatprep.subr.mxu0 0.0
    %101 = vmatpush1.msra.mxu0 0.0
    %102 = vmatprep.subr.mxu0 0.0
    %103 = vmatpush1.msra.mxu0 0.0
    %104 = vmatprep.subr.mxu0 0.0
    %105 = vmatpush1.msra.mxu0 0.0
    %106 = vmatprep.subr.mxu0 0.0
    %107 = vmatpush1.msra.mxu0 0.0
    %108 = vmatprep.subr.mxu0 0.0
    %109 = vmatpush1.msra.mxu0 0.0
    %110 = vmatprep.subr.mxu0 0.0
    %111 = vmatpush1.msra.mxu0 0.0
    %112 = vmatprep.subr.mxu0 0.0
    %113 = vmatpush1.msra.mxu0 0.0
    %114 = vmatprep.subr.mxu0 0.0
    %115 = vmatpush1.msra.mxu0 0.0
    %116 = vmatprep.subr.mxu0 0.0
    %117 = vmatpush1.msra.mxu0 0.0
    %118 = vmatprep.subr.mxu0 0.0
    %119 = vmatpush1.msra.mxu0 0.0
    %120 = vmatprep.subr.mxu0 0.0
    %121 = vmatpush1.msra.mxu0 0.0
    %122 = vmatprep.subr.mxu0 0.0
    %123 = vmatpush1.msra.mxu0 0.0
    %124 = vmatprep.subr.mxu0 0.0
    %125 = vmatpush1.msra.mxu0 0.0
    %126 = vmatprep.subr.mxu0 0.0
    %127 = vmatpush1.msra.mxu0 0.0
    %128 = vmatprep.subr.mxu0 0.0
    %129 = vmatpush1.msra.mxu0 0.0
    %130 = vmatprep.subr.mxu0 0.0
    %131 = vmatpush1.msra.mxu0 0.0
    %132 = vmatprep.subr.mxu0 0.0
    %133 = vmatpush1.msra.mxu0 0.0
    %134 = vmatprep.subr.mxu0 0.0
    %135 = vmatpush1.msra.mxu0 0.0
    %136 = vmatprep.subr.mxu0 0.0
    %137 = vmatpush1.msra.mxu0 0.0
    %138 = vmatprep.subr.mxu0 0.0
    %139 = vmatpush1.msra.mxu0 0.0
    %140 = vmatprep.subr.mxu0 0.0
    %141 = vmatpush1.msra.mxu0 0.0
    %142 = vmatprep.mubr.f32.mxu0 0.0
    %143 = vmatmul.mubr.f32.gmra.mrb[0].mxu0 %v69
    %v144 = vpop.f32.mrb[0].mxu0
    %v145 = vadd.f32 0.0, %v144
    %v146 = vpop.f32.mrb[0].mxu0
    %147 = vmatprep.mubr.f32.mxu0 0.0
    %148 = vmatmul.mubr.f32.gmra.mrb[0].mxu0 %v72
    %v149 = vpop.f32.mrb[0].mxu0
    %v150 = vadd.f32 0.0, %v149
    %v151 = vpop.f32.mrb[0].mxu0
    %152 = vdwg.mxu0
    %vm153 = vcmask 523264
    %v155 = vsel %vm153, %v45, 0
    %v158 = vsel %vm153, %v46, 0
    %160 = vmatprep.subr.mxu0 0.0
    %161 = vmatpush1.msra.mxu0 %v57
    %162 = vmatprep.subr.mxu0 0.0
    %163 = vmatpush1.msra.mxu0 %v58
    %164 = vmatprep.subr.mxu0 0.0
    %165 = vmatpush1.msra.mxu0 %v59
    %166 = vmatprep.subr.mxu0 0.0
    %167 = vmatpush1.msra.mxu0 %v60
    %168 = vmatprep.subr.mxu0 0.0
    %169 = vmatpush1.msra.mxu0 %v61
    %170 = vmatprep.subr.mxu0 0.0
    %171 = vmatpush1.msra.mxu0 %v62
    %172 = vmatprep.subr.mxu0 0.0
    %173 = vmatpush1.msra.mxu0 %v63
    %174 = vmatprep.subr.mxu0 0.0
    %175 = vmatpush1.msra.mxu0 %v64
    %176 = vmatprep.subr.mxu0 0.0
    %177 = vmatpush1.msra.mxu0 0.0
    %178 = vmatprep.subr.mxu0 0.0
    %179 = vmatpush1.msra.mxu0 0.0
    %180 = vmatprep.subr.mxu0 0.0
    %181 = vmatpush1.msra.mxu0 0.0
    %182 = vmatprep.subr.mxu0 0.0
    %183 = vmatpush1.msra.mxu0 0.0
    %184 = vmatprep.subr.mxu0 0.0
    %185 = vmatpush1.msra.mxu0 0.0
    %186 = vmatprep.subr.mxu0 0.0
    %187 = vmatpush1.msra.mxu0 0.0
    %188 = vmatprep.subr.mxu0 0.0
    %189 = vmatpush1.msra.mxu0 0.0
    %190 = vmatprep.subr.mxu0 0.0
    %191 = vmatpush1.msra.mxu0 0.0
    %192 = vmatprep.subr.mxu0 0.0
    %193 = vmatpush1.msra.mxu0 0.0
    %194 = vmatprep.subr.mxu0 0.0
    %195 = vmatpush1.msra.mxu0 0.0
    %196 = vmatprep.subr.mxu0 0.0
    %197 = vmatpush1.msra.mxu0 0.0
    %198 = vmatprep.subr.mxu0 0.0
    %199 = vmatpush1.msra.mxu0 0.0
    %200 = vmatprep.subr.mxu0 0.0
    %201 = vmatpush1.msra.mxu0 0.0
    %202 = vmatprep.subr.mxu0 0.0
    %203 = vmatpush1.msra.mxu0 0.0
    %204 = vmatprep.subr.mxu0 0.0
    %205 = vmatpush1.msra.mxu0 0.0
    %206 = vmatprep.subr.mxu0 0.0
    %207 = vmatpush1.msra.mxu0 0.0
    %208 = vmatprep.subr.mxu0 0.0
    %209 = vmatpush1.msra.mxu0 0.0
    %210 = vmatprep.subr.mxu0 0.0
    %211 = vmatpush1.msra.mxu0 0.0
    %212 = vmatprep.subr.mxu0 0.0
    %213 = vmatpush1.msra.mxu0 0.0
    %214 = vmatprep.subr.mxu0 0.0
    %215 = vmatpush1.msra.mxu0 0.0
    %216 = vmatprep.subr.mxu0 0.0
    %217 = vmatpush1.msra.mxu0 0.0
    %218 = vmatprep.subr.mxu0 0.0
    %219 = vmatpush1.msra.mxu0 0.0
    %220 = vmatprep.subr.mxu0 0.0
    %221 = vmatpush1.msra.mxu0 0.0
    %222 = vmatprep.subr.mxu0 0.0
    %223 = vmatpush1.msra.mxu0 0.0
    %224 = vmatprep.mubr.f32.mxu0 0.0
    %225 = vmatmul.mubr.f32.gmra.mrb[0].mxu0 %v155
    %v226 = vpop.f32.mrb[0].mxu0
    %v227 = vadd.f32 %v145, %v226
    %v228 = vpop.f32.mrb[0].mxu0
    %229 = vmatprep.mubr.f32.mxu0 0.0
    %230 = vmatmul.mubr.f32.gmra.mrb[0].mxu0 %v158
    %v231 = vpop.f32.mrb[0].mxu0
    %v232 = vadd.f32 %v150, %v231
    %v233 = vpop.f32.mrb[0].mxu0
    %234 = vdwg.mxu0
    %v235 = vadd.f32 %v227, %v65
    %v236 = vadd.f32 %v232, %v65
    %v237 = vld [vmem:[%s8] sm:$0x1]
    %v238 = vld [vmem:[%s8 + $0x1] sm:$0x1]
    %vm239 = vcmask 261120
    %v240 = vsel %vm239, %v235, 0.0
    %241 = vadd.xlane.f32.xlu0 %v240
    %v242 = vpop.xlane.xlu0 %241
    %v243 = vsel %vm239, %v236, 0.0
    %244 = vadd.xlane.f32.xlu0 %v243
    %v245 = vpop.xlane.xlu0 %244
    %v246 = vrcp.pop 32.0
    %v247 = vmul.f32 %v242, %v246
    %v248 = vmul.f32 %v245, %v246
    %v249 = vsub.f32 %v235, %v247
    %v250 = vsub.f32 %v236, %v248
    %v251 = vmul.f32 %v249, %v249
    %v252 = vmul.f32 %v250, %v250
    %v253 = vsel %vm239, %v251, 0.0
    %254 = vadd.xlane.f32.xlu0 %v253
    %v255 = vpop.xlane.xlu0 %254
    %v256 = vsel %vm239, %v252, 0.0
    %257 = vadd.xlane.f32.xlu0 %v256
    %v258 = vpop.xlane.xlu0 %257
    %v259 = vmul.f32 %v255, %v246
    %v260 = vmul.f32 %v258, %v246
    %v261 = vadd.f32 %v259, 1e-12
    %v262 = vadd.f32 %v260, 1e-12
    %v263 = vrsqrt.pop %v261
    %v264 = vrsqrt.pop %v262
    %v265 = vmul.f32 %v249, %v263
    %v266 = vmul.f32 %v250, %v264
    %v267 = vlaneseq
    %v268 = vshrl.u32 %v267, 7
    %v269 = vsub.s32 0, %v268
    %v270 = vrot.slane %v237, %v269
    %v271 = vmul.f32 %v265, %v270
    %v272 = vmul.f32 %v266, %v270
    %v273 = vlaneseq
    %v274 = vshrl.u32 %v273, 7
    %v275 = vsub.s32 0, %v274
    %v276 = vrot.slane %v238, %v275
    %v277 = vadd.f32 %v271, %v276
    %v278 = vadd.f32 %v272, %v276
    %v279 = vld [vmem:[%s2] sm:$0xff]
    %v280 = vld [vmem:[%s2 + $0x8] sm:$0xff]
    %v281 = vld [vmem:[%s2 + $0x10] sm:$0xff]
    %v282 = vld [vmem:[%s2 + $0x18] sm:$0xff]
    %v283 = vld [vmem:[%s2 + $0x20] sm:$0xff]
    %v284 = vld [vmem:[%s2 + $0x28] sm:$0xff]
    %v285 = vld [vmem:[%s2 + $0x30] sm:$0xff]
    %v286 = vld [vmem:[%s2 + $0x38] sm:$0xff]
    %v287 = vld [vmem:[%s3] sm:$0xff]
    %v288 = vld [vmem:[%s3 + $0x8] sm:$0xff]
    %v289 = vld [vmem:[%s3 + $0x10] sm:$0xff]
    %v290 = vld [vmem:[%s3 + $0x18] sm:$0xff]
    %v291 = vld [vmem:[%s8 + $0x4] sm:$0x1]
    %v292 = vlaneseq
    %v293 = vshrl.u32 %v292, 7
    %v294 = vsub.s32 0, %v293
    %v295 = vrot.slane %v291, %v294
    %v297 = vsel %vm239, %v277, 0
    %v300 = vsel %vm239, %v278, 0
    %302 = vmatprep.subr.mxu0 0.0
    %303 = vmatpush1.msra.mxu0 %v287
    %304 = vmatprep.subr.mxu0 0.0
    %305 = vmatpush1.msra.mxu0 %v288
    %306 = vmatprep.subr.mxu0 0.0
    %307 = vmatpush1.msra.mxu0 %v289
    %308 = vmatprep.subr.mxu0 0.0
    %309 = vmatpush1.msra.mxu0 %v290
    %310 = vmatprep.subr.mxu0 0.0
    %311 = vmatpush1.msra.mxu0 0.0
    %312 = vmatprep.subr.mxu0 0.0
    %313 = vmatpush1.msra.mxu0 0.0
    %314 = vmatprep.subr.mxu0 0.0
    %315 = vmatpush1.msra.mxu0 0.0
    %316 = vmatprep.subr.mxu0 0.0
    %317 = vmatpush1.msra.mxu0 0.0
    %318 = vmatprep.subr.mxu0 0.0
    %319 = vmatpush1.msra.mxu0 0.0
    %320 = vmatprep.subr.mxu0 0.0
    %321 = vmatpush1.msra.mxu0 0.0
    %322 = vmatprep.subr.mxu0 0.0
    %323 = vmatpush1.msra.mxu0 0.0
    %324 = vmatprep.subr.mxu0 0.0
    %325 = vmatpush1.msra.mxu0 0.0
    %326 = vmatprep.subr.mxu0 0.0
    %327 = vmatpush1.msra.mxu0 0.0
    %328 = vmatprep.subr.mxu0 0.0
    %329 = vmatpush1.msra.mxu0 0.0
    %330 = vmatprep.subr.mxu0 0.0
    %331 = vmatpush1.msra.mxu0 0.0
    %332 = vmatprep.subr.mxu0 0.0
    %333 = vmatpush1.msra.mxu0 0.0
    %334 = vmatprep.subr.mxu0 0.0
    %335 = vmatpush1.msra.mxu0 0.0
    %336 = vmatprep.subr.mxu0 0.0
    %337 = vmatpush1.msra.mxu0 0.0
    %338 = vmatprep.subr.mxu0 0.0
    %339 = vmatpush1.msra.mxu0 0.0
    %340 = vmatprep.subr.mxu0 0.0
    %341 = vmatpush1.msra.mxu0 0.0
    %342 = vmatprep.subr.mxu0 0.0
    %343 = vmatpush1.msra.mxu0 0.0
    %344 = vmatprep.subr.mxu0 0.0
    %345 = vmatpush1.msra.mxu0 0.0
    %346 = vmatprep.subr.mxu0 0.0
    %347 = vmatpush1.msra.mxu0 0.0
    %348 = vmatprep.subr.mxu0 0.0
    %349 = vmatpush1.msra.mxu0 0.0
    %350 = vmatprep.subr.mxu0 0.0
    %351 = vmatpush1.msra.mxu0 0.0
    %352 = vmatprep.subr.mxu0 0.0
    %353 = vmatpush1.msra.mxu0 0.0
    %354 = vmatprep.subr.mxu0 0.0
    %355 = vmatpush1.msra.mxu0 0.0
    %356 = vmatprep.subr.mxu0 0.0
    %357 = vmatpush1.msra.mxu0 0.0
    %358 = vmatprep.subr.mxu0 0.0
    %359 = vmatpush1.msra.mxu0 0.0
    %360 = vmatprep.subr.mxu0 0.0
    %361 = vmatpush1.msra.mxu0 0.0
    %362 = vmatprep.subr.mxu0 0.0
    %363 = vmatpush1.msra.mxu0 0.0
    %364 = vmatprep.subr.mxu0 0.0
    %365 = vmatpush1.msra.mxu0 0.0
    %366 = vmatprep.mubr.f32.mxu0 0.0
    %367 = vmatmul.mubr.f32.gmra.mrb[0].mxu0 %v297
    %v368 = vpop.f32.mrb[0].mxu0
    %v369 = vadd.f32 %v295, %v368
    %v370 = vpop.f32.mrb[0].mxu0
    %371 = vmatprep.mubr.f32.mxu0 0.0
    %372 = vmatmul.mubr.f32.gmra.mrb[0].mxu0 %v300
    %v373 = vpop.f32.mrb[0].mxu0
    %v374 = vadd.f32 %v295, %v373
    %v375 = vpop.f32.mrb[0].mxu0
    %376 = vdwg.mxu0
    %379 = vrot.lane.b32.xlu0 %v369, 120
    %v380 = vpop.permute.xlu0 %379
    %381 = vrot.lane.b32.xlu0 %v374, 120
    %v382 = vpop.permute.xlu0 %381
    %385 = vrot.lane.b32.xlu0 %v369, 112
    %v386 = vpop.permute.xlu0 %385
    %387 = vrot.lane.b32.xlu0 %v374, 112
    %v388 = vpop.permute.xlu0 %387
    %391 = vrot.lane.b32.xlu0 %v369, 104
    %v392 = vpop.permute.xlu0 %391
    %393 = vrot.lane.b32.xlu0 %v374, 104
    %v394 = vpop.permute.xlu0 %393
    %v397 = vmul.f32 %v369, 0.35355338
    %v398 = vmul.f32 %v374, 0.35355338
    %v399 = vmul.f32 %v380, 0.35355338
    %v400 = vmul.f32 %v382, 0.35355338
    %v401 = vmul.f32 %v386, 0.35355338
    %v402 = vmul.f32 %v388, 0.35355338
    %v403 = vmul.f32 %v392, 0.35355338
    %v404 = vmul.f32 %v394, 0.35355338
    %405 = vrot.lane.b32.xlu0 %v369, 96
    %v406 = vpop.permute.xlu0 %405
    %407 = vrot.lane.b32.xlu0 %v374, 96
    %v408 = vpop.permute.xlu0 %407
    %409 = vrot.lane.b32.xlu0 %v380, 96
    %v410 = vpop.permute.xlu0 %409
    %411 = vrot.lane.b32.xlu0 %v382, 96
    %v412 = vpop.permute.xlu0 %411
    %413 = vrot.lane.b32.xlu0 %v386, 96
    %v414 = vpop.permute.xlu0 %413
    %415 = vrot.lane.b32.xlu0 %v388, 96
    %v416 = vpop.permute.xlu0 %415
    %417 = vrot.lane.b32.xlu0 %v392, 96
    %v418 = vpop.permute.xlu0 %417
    %419 = vrot.lane.b32.xlu0 %v394, 96
    %v420 = vpop.permute.xlu0 %419
    %vm421 = vcmask 64512
    %v423 = vsel %vm421, %v397, 0
    %v426 = vsel %vm421, %v398, 0
    %v429 = vsel %vm421, %v399, 0
    %v432 = vsel %vm421, %v400, 0
    %v435 = vsel %vm421, %v401, 0
    %v438 = vsel %vm421, %v402, 0
    %v441 = vsel %vm421, %v403, 0
    %v444 = vsel %vm421, %v404, 0
    %v446 = vsel %vm421, %v406, 0
    %v448 = vsel %vm421, %v408, 0
    %v450 = vsel %vm421, %v410, 0
    %v452 = vsel %vm421, %v412, 0
    %v454 = vsel %vm421, %v414, 0
    %v456 = vsel %vm421, %v416, 0
    %v458 = vsel %vm421, %v418, 0
    %v460 = vsel %vm421, %v420, 0
    %462 = vmatprep.subr.mxu0 0.0
    %463 = vmatpush1.xpose.msra.mxu0 %v446
    %464 = vmatprep.subr.mxu0 0.0
    %465 = vmatpush1.xpose.msra.mxu0 %v448
    %466 = vmatprep.subr.mxu0 0.0
    %467 = vmatpush1.xpose.msra.mxu0 %v450
    %468 = vmatprep.subr.mxu0 0.0
    %469 = vmatpush1.xpose.msra.mxu0 %v452
    %470 = vmatprep.subr.mxu0 0.0
    %471 = vmatpush1.xpose.msra.mxu0 %v454
    %472 = vmatprep.subr.mxu0 0.0
    %473 = vmatpush1.xpose.msra.mxu0 %v456
    %474 = vmatprep.subr.mxu0 0.0
    %475 = vmatpush1.xpose.msra.mxu0 %v458
    %476 = vmatprep.subr.mxu0 0.0
    %477 = vmatpush1.xpose.msra.mxu0 %v460
    %478 = vmatprep.subr.mxu0 0.0
    %479 = vmatpush1.xpose.msra.mxu0 0.0
    %480 = vmatprep.subr.mxu0 0.0
    %481 = vmatpush1.xpose.msra.mxu0 0.0
    %482 = vmatprep.subr.mxu0 0.0
    %483 = vmatpush1.xpose.msra.mxu0 0.0
    %484 = vmatprep.subr.mxu0 0.0
    %485 = vmatpush1.xpose.msra.mxu0 0.0
    %486 = vmatprep.subr.mxu0 0.0
    %487 = vmatpush1.xpose.msra.mxu0 0.0
    %488 = vmatprep.subr.mxu0 0.0
    %489 = vmatpush1.xpose.msra.mxu0 0.0
    %490 = vmatprep.subr.mxu0 0.0
    %491 = vmatpush1.xpose.msra.mxu0 0.0
    %492 = vmatprep.subr.mxu0 0.0
    %493 = vmatpush1.xpose.msra.mxu0 0.0
    %494 = vmatprep.subr.mxu0 0.0
    %495 = vmatpush1.xpose.msra.mxu0 0.0
    %496 = vmatprep.subr.mxu0 0.0
    %497 = vmatpush1.xpose.msra.mxu0 0.0
    %498 = vmatprep.subr.mxu0 0.0
    %499 = vmatpush1.xpose.msra.mxu0 0.0
    %500 = vmatprep.subr.mxu0 0.0
    %501 = vmatpush1.xpose.msra.mxu0 0.0
    %502 = vmatprep.subr.mxu0 0.0
    %503 = vmatpush1.xpose.msra.mxu0 0.0
    %504 = vmatprep.subr.mxu0 0.0
    %505 = vmatpush1.xpose.msra.mxu0 0.0
    %506 = vmatprep.subr.mxu0 0.0
    %507 = vmatpush1.xpose.msra.mxu0 0.0
    %508 = vmatprep.subr.mxu0 0.0
    %509 = vmatpush1.xpose.msra.mxu0 0.0
    %510 = vmatprep.subr.mxu0 0.0
    %511 = vmatpush1.xpose.msra.mxu0 0.0
    %512 = vmatprep.subr.mxu0 0.0
    %513 = vmatpush1.xpose.msra.mxu0 0.0
    %514 = vmatprep.subr.mxu0 0.0
    %515 = vmatpush1.xpose.msra.mxu0 0.0
    %516 = vmatprep.subr.mxu0 0.0
    %517 = vmatpush1.xpose.msra.mxu0 0.0
    %518 = vmatprep.subr.mxu0 0.0
    %519 = vmatpush1.xpose.msra.mxu0 0.0
    %520 = vmatprep.subr.mxu0 0.0
    %521 = vmatpush1.xpose.msra.mxu0 0.0
    %522 = vmatprep.subr.mxu0 0.0
    %523 = vmatpush1.xpose.msra.mxu0 0.0
    %524 = vmatprep.subr.mxu0 0.0
    %525 = vmatpush1.xpose.msra.mxu0 0.0
    %526 = vmatprep.mubr.f32.mxu0 0.0
    %527 = vmatmul.mubr.f32.gmra.mrb[0].mxu0 %v423
    %v528 = vpop.f32.mrb[0].mxu0
    %v529 = vadd.f32 %v279, %v528
    %v530 = vpop.f32.mrb[0].mxu0
    %531 = vmatprep.mubr.f32.mxu0 0.0
    %532 = vmatmul.mubr.f32.gmra.mrb[0].mxu0 %v426
    %v533 = vpop.f32.mrb[0].mxu0
    %v534 = vadd.f32 %v280, %v533
    %v535 = vpop.f32.mrb[0].mxu0
    %536 = vmatprep.mubr.f32.mxu0 0.0
    %537 = vmatmul.mubr.f32.gmra.mrb[0].mxu0 %v429
    %v538 = vpop.f32.mrb[0].mxu0
    %v539 = vadd.f32 %v281, %v538
    %v540 = vpop.f32.mrb[0].mxu0
    %541 = vmatprep.mubr.f32.mxu0 0.0
    %542 = vmatmul.mubr.f32.gmra.mrb[0].mxu0 %v432
    %v543 = vpop.f32.mrb[0].mxu0
    %v544 = vadd.f32 %v282, %v543
    %v545 = vpop.f32.mrb[0].mxu0
    %546 = vmatprep.mubr.f32.mxu0 0.0
    %547 = vmatmul.mubr.f32.gmra.mrb[0].mxu0 %v435
    %v548 = vpop.f32.mrb[0].mxu0
    %v549 = vadd.f32 %v283, %v548
    %v550 = vpop.f32.mrb[0].mxu0
    %551 = vmatprep.mubr.f32.mxu0 0.0
    %552 = vmatmul.mubr.f32.gmra.mrb[0].mxu0 %v438
    %v553 = vpop.f32.mrb[0].mxu0
    %v554 = vadd.f32 %v284, %v553
    %v555 = vpop.f32.mrb[0].mxu0
    %556 = vmatprep.mubr.f32.mxu0 0.0
    %557 = vmatmul.mubr.f32.gmra.mrb[0].mxu0 %v441
    %v558 = vpop.f32.mrb[0].mxu0
    %v559 = vadd.f32 %v285, %v558
    %v560 = vpop.f32.mrb[0].mxu0
    %561 = vmatprep.mubr.f32.mxu0 0.0
    %562 = vmatmul.mubr.f32.gmra.mrb[0].mxu0 %v444
    %v563 = vpop.f32.mrb[0].mxu0
    %v564 = vadd.f32 %v286, %v563
    %v565 = vpop.f32.mrb[0].mxu0
    %566 = vdwg.mxu0
    %v567 = vsel %vm153, %v529, -inf
    %568 = vmax.xlane.f32.xlu0 %v567
    %v569 = vpop.xlane.xlu0 %568
    %v570 = vsel %vm153, %v534, -inf
    %571 = vmax.xlane.f32.xlu0 %v570
    %v572 = vpop.xlane.xlu0 %571
    %v573 = vsel %vm153, %v539, -inf
    %574 = vmax.xlane.f32.xlu0 %v573
    %v575 = vpop.xlane.xlu0 %574
    %v576 = vsel %vm153, %v544, -inf
    %577 = vmax.xlane.f32.xlu0 %v576
    %v578 = vpop.xlane.xlu0 %577
    %v579 = vsel %vm153, %v549, -inf
    %580 = vmax.xlane.f32.xlu0 %v579
    %v581 = vpop.xlane.xlu0 %580
    %v582 = vsel %vm153, %v554, -inf
    %583 = vmax.xlane.f32.xlu0 %v582
    %v584 = vpop.xlane.xlu0 %583
    %v585 = vsel %vm153, %v559, -inf
    %586 = vmax.xlane.f32.xlu0 %v585
    %v587 = vpop.xlane.xlu0 %586
    %v588 = vsel %vm153, %v564, -inf
    %589 = vmax.xlane.f32.xlu0 %v588
    %v590 = vpop.xlane.xlu0 %589
    %v591 = vsub.f32 %v529, %v569
    %v592 = vsub.f32 %v534, %v572
    %v593 = vsub.f32 %v539, %v575
    %v594 = vsub.f32 %v544, %v578
    %v595 = vsub.f32 %v549, %v581
    %v596 = vsub.f32 %v554, %v584
    %v597 = vsub.f32 %v559, %v587
    %v598 = vsub.f32 %v564, %v590
    %v599 = vmul.f32 %v591, 1.442695
    %v600 = vpow.pop %v599
    %v601 = vmul.f32 %v592, 1.442695
    %v602 = vpow.pop %v601
    %v603 = vmul.f32 %v593, 1.442695
    %v604 = vpow.pop %v603
    %v605 = vmul.f32 %v594, 1.442695
    %v606 = vpow.pop %v605
    %v607 = vmul.f32 %v595, 1.442695
    %v608 = vpow.pop %v607
    %v609 = vmul.f32 %v596, 1.442695
    %v610 = vpow.pop %v609
    %v611 = vmul.f32 %v597, 1.442695
    %v612 = vpow.pop %v611
    %v613 = vmul.f32 %v598, 1.442695
    %v614 = vpow.pop %v613
    %v615 = vsel %vm153, %v600, 0.0
    %616 = vadd.xlane.f32.xlu0 %v615
    %v617 = vpop.xlane.xlu0 %616
    %v618 = vsel %vm153, %v602, 0.0
    %619 = vadd.xlane.f32.xlu0 %v618
    %v620 = vpop.xlane.xlu0 %619
    %v621 = vsel %vm153, %v604, 0.0
    %622 = vadd.xlane.f32.xlu0 %v621
    %v623 = vpop.xlane.xlu0 %622
    %v624 = vsel %vm153, %v606, 0.0
    %625 = vadd.xlane.f32.xlu0 %v624
    %v626 = vpop.xlane.xlu0 %625
    %v627 = vsel %vm153, %v608, 0.0
    %628 = vadd.xlane.f32.xlu0 %v627
    %v629 = vpop.xlane.xlu0 %628
    %v630 = vsel %vm153, %v610, 0.0
    %631 = vadd.xlane.f32.xlu0 %v630
    %v632 = vpop.xlane.xlu0 %631
    %v633 = vsel %vm153, %v612, 0.0
    %634 = vadd.xlane.f32.xlu0 %v633
    %v635 = vpop.xlane.xlu0 %634
    %v636 = vsel %vm153, %v614, 0.0
    %637 = vadd.xlane.f32.xlu0 %v636
    %v638 = vpop.xlane.xlu0 %637
    %v639 = vrcp.pop %v617
    %v640 = vrcp.pop %v620
    %v641 = vrcp.pop %v623
    %v642 = vrcp.pop %v626
    %v643 = vrcp.pop %v629
    %v644 = vrcp.pop %v632
    %v645 = vrcp.pop %v635
    %v646 = vrcp.pop %v638
    %v647 = vmul.f32 %v600, %v639
    %v648 = vmul.f32 %v602, %v640
    %v649 = vmul.f32 %v604, %v641
    %v650 = vmul.f32 %v606, %v642
    %v651 = vmul.f32 %v608, %v643
    %v652 = vmul.f32 %v610, %v644
    %v653 = vmul.f32 %v612, %v645
    %v654 = vmul.f32 %v614, %v646
    %655 = vrot.lane.b32.xlu0 %v369, 64
    %v656 = vpop.permute.xlu0 %655
    %657 = vrot.lane.b32.xlu0 %v374, 64
    %v658 = vpop.permute.xlu0 %657
    %659 = vrot.lane.b32.xlu0 %v380, 64
    %v660 = vpop.permute.xlu0 %659
    %661 = vrot.lane.b32.xlu0 %v382, 64
    %v662 = vpop.permute.xlu0 %661
    %663 = vrot.lane.b32.xlu0 %v386, 64
    %v664 = vpop.permute.xlu0 %663
    %665 = vrot.lane.b32.xlu0 %v388, 64
    %v666 = vpop.permute.xlu0 %665
    %667 = vrot.lane.b32.xlu0 %v392, 64
    %v668 = vpop.permute.xlu0 %667
    %669 = vrot.lane.b32.xlu0 %v394, 64
    %v670 = vpop.permute.xlu0 %669
    %v680 = vsel %vm153, %v647, 0
    %v683 = vsel %vm153, %v648, 0
    %v686 = vsel %vm153, %v649, 0
    %v689 = vsel %vm153, %v650, 0
    %v692 = vsel %vm153, %v651, 0
    %v695 = vsel %vm153, %v652, 0
    %v698 = vsel %vm153, %v653, 0
    %v701 = vsel %vm153, %v654, 0
    %703 = vmatprep.subr.mxu0 0.0
    %704 = vmatpush1.msra.mxu0 %v656
    %705 = vmatprep.subr.mxu0 0.0
    %706 = vmatpush1.msra.mxu0 %v658
    %707 = vmatprep.subr.mxu0 0.0
    %708 = vmatpush1.msra.mxu0 %v660
    %709 = vmatprep.subr.mxu0 0.0
    %710 = vmatpush1.msra.mxu0 %v662
    %711 = vmatprep.subr.mxu0 0.0
    %712 = vmatpush1.msra.mxu0 %v664
    %713 = vmatprep.subr.mxu0 0.0
    %714 = vmatpush1.msra.mxu0 %v666
    %715 = vmatprep.subr.mxu0 0.0
    %716 = vmatpush1.msra.mxu0 %v668
    %717 = vmatprep.subr.mxu0 0.0
    %718 = vmatpush1.msra.mxu0 %v670
    %719 = vmatprep.subr.mxu0 0.0
    %720 = vmatpush1.msra.mxu0 0.0
    %721 = vmatprep.subr.mxu0 0.0
    %722 = vmatpush1.msra.mxu0 0.0
    %723 = vmatprep.subr.mxu0 0.0
    %724 = vmatpush1.msra.mxu0 0.0
    %725 = vmatprep.subr.mxu0 0.0
    %726 = vmatpush1.msra.mxu0 0.0
    %727 = vmatprep.subr.mxu0 0.0
    %728 = vmatpush1.msra.mxu0 0.0
    %729 = vmatprep.subr.mxu0 0.0
    %730 = vmatpush1.msra.mxu0 0.0
    %731 = vmatprep.subr.mxu0 0.0
    %732 = vmatpush1.msra.mxu0 0.0
    %733 = vmatprep.subr.mxu0 0.0
    %734 = vmatpush1.msra.mxu0 0.0
    %735 = vmatprep.subr.mxu0 0.0
    %736 = vmatpush1.msra.mxu0 0.0
    %737 = vmatprep.subr.mxu0 0.0
    %738 = vmatpush1.msra.mxu0 0.0
    %739 = vmatprep.subr.mxu0 0.0
    %740 = vmatpush1.msra.mxu0 0.0
    %741 = vmatprep.subr.mxu0 0.0
    %742 = vmatpush1.msra.mxu0 0.0
    %743 = vmatprep.subr.mxu0 0.0
    %744 = vmatpush1.msra.mxu0 0.0
    %745 = vmatprep.subr.mxu0 0.0
    %746 = vmatpush1.msra.mxu0 0.0
    %747 = vmatprep.subr.mxu0 0.0
    %748 = vmatpush1.msra.mxu0 0.0
    %749 = vmatprep.subr.mxu0 0.0
    %750 = vmatpush1.msra.mxu0 0.0
    %751 = vmatprep.subr.mxu0 0.0
    %752 = vmatpush1.msra.mxu0 0.0
    %753 = vmatprep.subr.mxu0 0.0
    %754 = vmatpush1.msra.mxu0 0.0
    %755 = vmatprep.subr.mxu0 0.0
    %756 = vmatpush1.msra.mxu0 0.0
    %757 = vmatprep.subr.mxu0 0.0
    %758 = vmatpush1.msra.mxu0 0.0
    %759 = vmatprep.subr.mxu0 0.0
    %760 = vmatpush1.msra.mxu0 0.0
    %761 = vmatprep.subr.mxu0 0.0
    %762 = vmatpush1.msra.mxu0 0.0
    %763 = vmatprep.subr.mxu0 0.0
    %764 = vmatpush1.msra.mxu0 0.0
    %765 = vmatprep.subr.mxu0 0.0
    %766 = vmatpush1.msra.mxu0 0.0
    %767 = vmatprep.mubr.f32.mxu0 0.0
    %768 = vmatmul.mubr.f32.gmra.mrb[0].mxu0 %v680
    %v769 = vpop.f32.mrb[0].mxu0
    %v770 = vadd.f32 0.0, %v769
    %v771 = vpop.f32.mrb[0].mxu0
    %772 = vmatprep.mubr.f32.mxu0 0.0
    %773 = vmatmul.mubr.f32.gmra.mrb[0].mxu0 %v683
    %v774 = vpop.f32.mrb[0].mxu0
    %v775 = vadd.f32 0.0, %v774
    %v776 = vpop.f32.mrb[0].mxu0
    %777 = vmatprep.mubr.f32.mxu0 0.0
    %778 = vmatmul.mubr.f32.gmra.mrb[0].mxu0 %v686
    %v779 = vpop.f32.mrb[0].mxu0
    %v780 = vadd.f32 0.0, %v779
    %v781 = vpop.f32.mrb[0].mxu0
    %782 = vmatprep.mubr.f32.mxu0 0.0
    %783 = vmatmul.mubr.f32.gmra.mrb[0].mxu0 %v689
    %v784 = vpop.f32.mrb[0].mxu0
    %v785 = vadd.f32 0.0, %v784
    %v786 = vpop.f32.mrb[0].mxu0
    %787 = vmatprep.mubr.f32.mxu0 0.0
    %788 = vmatmul.mubr.f32.gmra.mrb[0].mxu0 %v692
    %v789 = vpop.f32.mrb[0].mxu0
    %v790 = vadd.f32 0.0, %v789
    %v791 = vpop.f32.mrb[0].mxu0
    %792 = vmatprep.mubr.f32.mxu0 0.0
    %793 = vmatmul.mubr.f32.gmra.mrb[0].mxu0 %v695
    %v794 = vpop.f32.mrb[0].mxu0
    %v795 = vadd.f32 0.0, %v794
    %v796 = vpop.f32.mrb[0].mxu0
    %797 = vmatprep.mubr.f32.mxu0 0.0
    %798 = vmatmul.mubr.f32.gmra.mrb[0].mxu0 %v698
    %v799 = vpop.f32.mrb[0].mxu0
    %v800 = vadd.f32 0.0, %v799
    %v801 = vpop.f32.mrb[0].mxu0
    %802 = vmatprep.mubr.f32.mxu0 0.0
    %803 = vmatmul.mubr.f32.gmra.mrb[0].mxu0 %v701
    %v804 = vpop.f32.mrb[0].mxu0
    %v805 = vadd.f32 0.0, %v804
    %v806 = vpop.f32.mrb[0].mxu0
    %807 = vdwg.mxu0
    %v808 = vld [vmem:[%s4] sm:$0xff]
    %v809 = vld [vmem:[%s4 + $0x8] sm:$0xff]
    %v810 = vld [vmem:[%s4 + $0x10] sm:$0xff]
    %v811 = vld [vmem:[%s4 + $0x18] sm:$0xff]
    %v813 = vsel %vm421, %v780, 0
    %v816 = vsel %vm421, %v785, 0
    %818 = vmatprep.subr.mxu0 0.0
    %819 = vmatpush1.msra.mxu0 %v809
    %820 = vmatprep.subr.mxu0 0.0
    %821 = vmatpush1.msra.mxu0 0.0
    %822 = vmatprep.subr.mxu0 0.0
    %823 = vmatpush1.msra.mxu0 0.0
    %824 = vmatprep.subr.mxu0 0.0
    %825 = vmatpush1.msra.mxu0 0.0
    %826 = vmatprep.subr.mxu0 0.0
    %827 = vmatpush1.msra.mxu0 0.0
    %828 = vmatprep.subr.mxu0 0.0
    %829 = vmatpush1.msra.mxu0 0.0
    %830 = vmatprep.subr.mxu0 0.0
    %831 = vmatpush1.msra.mxu0 0.0
    %832 = vmatprep.subr.mxu0 0.0
    %833 = vmatpush1.msra.mxu0 0.0
    %834 = vmatprep.subr.mxu0 0.0
    %835 = vmatpush1.msra.mxu0 0.0
    %836 = vmatprep.subr.mxu0 0.0
    %837 = vmatpush1.msra.mxu0 0.0
    %838 = vmatprep.subr.mxu0 0.0
    %839 = vmatpush1.msra.mxu0 0.0
    %840 = vmatprep.subr.mxu0 0.0
    %841 = vmatpush1.msra.mxu0 0.0
    %842 = vmatprep.subr.mxu0 0.0
    %843 = vmatpush1.msra.mxu0 0.0
    %844 = vmatprep.subr.mxu0 0.0
    %845 = vmatpush1.msra.mxu0 0.0
    %846 = vmatprep.subr.mxu0 0.0
    %847 = vmatpush1.msra.mxu0 0.0
    %848 = vmatprep.subr.mxu0 0.0
    %849 = vmatpush1.msra.mxu0 0.0
    %850 = vmatprep.subr.mxu0 0.0
    %851 = vmatpush1.msra.mxu0 0.0
    %852 = vmatprep.subr.mxu0 0.0
    %853 = vmatpush1.msra.mxu0 0.0
    %854 = vmatprep.subr.mxu0 0.0
    %855 = vmatpush1.msra.mxu0 0.0
    %856 = vmatprep.subr.mxu0 0.0
    %857 = vmatpush1.msra.mxu0 0.0
    %858 = vmatprep.subr.mxu0 0.0
    %859 = vmatpush1.msra.mxu0 0.0
    %860 = vmatprep.subr.mxu0 0.0
    %861 = vmatpush1.msra.mxu0 0.0
    %862 = vmatprep.subr.mxu0 0.0
    %863 = vmatpush1.msra.mxu0 0.0
    %864 = vmatprep.subr.mxu0 0.0
    %865 = vmatpush1.msra.mxu0 0.0
    %866 = vmatprep.subr.mxu0 0.0
    %867 = vmatpush1.msra.mxu0 0.0
    %868 = vmatprep.subr.mxu0 0.0
    %869 = vmatpush1.msra.mxu0 0.0
    %870 = vmatprep.subr.mxu0 0.0
    %871 = vmatpush1.msra.mxu0 0.0
    %872 = vmatprep.subr.mxu0 0.0
    %873 = vmatpush1.msra.mxu0 0.0
    %874 = vmatprep.subr.mxu0 0.0
    %875 = vmatpush1.msra.mxu0 0.0
    %876 = vmatprep.subr.mxu0 0.0
    %877 = vmatpush1.msra.mxu0 0.0
    %878 = vmatprep.subr.mxu0 0.0
    %879 = vmatpush1.msra.mxu0 0.0
    %880 = vmatprep.subr.mxu0 0.0
    %881 = vmatpush1.msra.mxu0 0.0
    %882 = vmatprep.mubr.f32.mxu0 0.0
    %883 = vmatmul.mubr.f32.gmra.mrb[0].mxu0 %v813
    %v884 = vpop.f32.mrb[0].mxu0
    %v885 = vadd.f32 0.0, %v884
    %v886 = vpop.f32.mrb[0].mxu0
    %887 = vmatprep.mubr.f32.mxu0 0.0
    %888 = vmatmul.mubr.f32.gmra.mrb[0].mxu0 %v816
    %v889 = vpop.f32.mrb[0].mxu0
    %v890 = vadd.f32 0.0, %v889
    %v891 = vpop.f32.mrb[0].mxu0
    %892 = vdwg.mxu0
    %v894 = vsel %vm421, %v770, 0
    %v897 = vsel %vm421, %v775, 0
    %899 = vmatprep.subr.mxu0 0.0
    %900 = vmatpush1.msra.mxu0 %v808
    %901 = vmatprep.subr.mxu0 0.0
    %902 = vmatpush1.msra.mxu0 0.0
    %903 = vmatprep.subr.mxu0 0.0
    %904 = vmatpush1.msra.mxu0 0.0
    %905 = vmatprep.subr.mxu0 0.0
    %906 = vmatpush1.msra.mxu0 0.0
    %907 = vmatprep.subr.mxu0 0.0
    %908 = vmatpush1.msra.mxu0 0.0
    %909 = vmatprep.subr.mxu0 0.0
    %910 = vmatpush1.msra.mxu0 0.0
    %911 = vmatprep.subr.mxu0 0.0
    %912 = vmatpush1.msra.mxu0 0.0
    %913 = vmatprep.subr.mxu0 0.0
    %914 = vmatpush1.msra.mxu0 0.0
    %915 = vmatprep.subr.mxu0 0.0
    %916 = vmatpush1.msra.mxu0 0.0
    %917 = vmatprep.subr.mxu0 0.0
    %918 = vmatpush1.msra.mxu0 0.0
    %919 = vmatprep.subr.mxu0 0.0
    %920 = vmatpush1.msra.mxu0 0.0
    %921 = vmatprep.subr.mxu0 0.0
    %922 = vmatpush1.msra.mxu0 0.0
    %923 = vmatprep.subr.mxu0 0.0
    %924 = vmatpush1.msra.mxu0 0.0
    %925 = vmatprep.subr.mxu0 0.0
    %926 = vmatpush1.msra.mxu0 0.0
    %927 = vmatprep.subr.mxu0 0.0
    %928 = vmatpush1.msra.mxu0 0.0
    %929 = vmatprep.subr.mxu0 0.0
    %930 = vmatpush1.msra.mxu0 0.0
    %931 = vmatprep.subr.mxu0 0.0
    %932 = vmatpush1.msra.mxu0 0.0
    %933 = vmatprep.subr.mxu0 0.0
    %934 = vmatpush1.msra.mxu0 0.0
    %935 = vmatprep.subr.mxu0 0.0
    %936 = vmatpush1.msra.mxu0 0.0
    %937 = vmatprep.subr.mxu0 0.0
    %938 = vmatpush1.msra.mxu0 0.0
    %939 = vmatprep.subr.mxu0 0.0
    %940 = vmatpush1.msra.mxu0 0.0
    %941 = vmatprep.subr.mxu0 0.0
    %942 = vmatpush1.msra.mxu0 0.0
    %943 = vmatprep.subr.mxu0 0.0
    %944 = vmatpush1.msra.mxu0 0.0
    %945 = vmatprep.subr.mxu0 0.0
    %946 = vmatpush1.msra.mxu0 0.0
    %947 = vmatprep.subr.mxu0 0.0
    %948 = vmatpush1.msra.mxu0 0.0
    %949 = vmatprep.subr.mxu0 0.0
    %950 = vmatpush1.msra.mxu0 0.0
    %951 = vmatprep.subr.mxu0 0.0
    %952 = vmatpush1.msra.mxu0 0.0
    %953 = vmatprep.subr.mxu0 0.0
    %954 = vmatpush1.msra.mxu0 0.0
    %955 = vmatprep.subr.mxu0 0.0
    %956 = vmatpush1.msra.mxu0 0.0
    %957 = vmatprep.subr.mxu0 0.0
    %958 = vmatpush1.msra.mxu0 0.0
    %959 = vmatprep.subr.mxu0 0.0
    %960 = vmatpush1.msra.mxu0 0.0
    %961 = vmatprep.subr.mxu0 0.0
    %962 = vmatpush1.msra.mxu0 0.0
    %963 = vmatprep.mubr.f32.mxu0 0.0
    %964 = vmatmul.mubr.f32.gmra.mrb[0].mxu0 %v894
    %v965 = vpop.f32.mrb[0].mxu0
    %v966 = vadd.f32 %v885, %v965
    %v967 = vpop.f32.mrb[0].mxu0
    %968 = vmatprep.mubr.f32.mxu0 0.0
    %969 = vmatmul.mubr.f32.gmra.mrb[0].mxu0 %v897
    %v970 = vpop.f32.mrb[0].mxu0
    %v971 = vadd.f32 %v890, %v970
    %v972 = vpop.f32.mrb[0].mxu0
    %973 = vdwg.mxu0
    %v975 = vsel %vm421, %v790, 0
    %v978 = vsel %vm421, %v795, 0
    %980 = vmatprep.subr.mxu0 0.0
    %981 = vmatpush1.msra.mxu0 %v810
    %982 = vmatprep.subr.mxu0 0.0
    %983 = vmatpush1.msra.mxu0 0.0
    %984 = vmatprep.subr.mxu0 0.0
    %985 = vmatpush1.msra.mxu0 0.0
    %986 = vmatprep.subr.mxu0 0.0
    %987 = vmatpush1.msra.mxu0 0.0
    %988 = vmatprep.subr.mxu0 0.0
    %989 = vmatpush1.msra.mxu0 0.0
    %990 = vmatprep.subr.mxu0 0.0
    %991 = vmatpush1.msra.mxu0 0.0
    %992 = vmatprep.subr.mxu0 0.0
    %993 = vmatpush1.msra.mxu0 0.0
    %994 = vmatprep.subr.mxu0 0.0
    %995 = vmatpush1.msra.mxu0 0.0
    %996 = vmatprep.subr.mxu0 0.0
    %997 = vmatpush1.msra.mxu0 0.0
    %998 = vmatprep.subr.mxu0 0.0
    %999 = vmatpush1.msra.mxu0 0.0
    %1000 = vmatprep.subr.mxu0 0.0
    %1001 = vmatpush1.msra.mxu0 0.0
    %1002 = vmatprep.subr.mxu0 0.0
    %1003 = vmatpush1.msra.mxu0 0.0
    %1004 = vmatprep.subr.mxu0 0.0
    %1005 = vmatpush1.msra.mxu0 0.0
    %1006 = vmatprep.subr.mxu0 0.0
    %1007 = vmatpush1.msra.mxu0 0.0
    %1008 = vmatprep.subr.mxu0 0.0
    %1009 = vmatpush1.msra.mxu0 0.0
    %1010 = vmatprep.subr.mxu0 0.0
    %1011 = vmatpush1.msra.mxu0 0.0
    %1012 = vmatprep.subr.mxu0 0.0
    %1013 = vmatpush1.msra.mxu0 0.0
    %1014 = vmatprep.subr.mxu0 0.0
    %1015 = vmatpush1.msra.mxu0 0.0
    %1016 = vmatprep.subr.mxu0 0.0
    %1017 = vmatpush1.msra.mxu0 0.0
    %1018 = vmatprep.subr.mxu0 0.0
    %1019 = vmatpush1.msra.mxu0 0.0
    %1020 = vmatprep.subr.mxu0 0.0
    %1021 = vmatpush1.msra.mxu0 0.0
    %1022 = vmatprep.subr.mxu0 0.0
    %1023 = vmatpush1.msra.mxu0 0.0
    %1024 = vmatprep.subr.mxu0 0.0
    %1025 = vmatpush1.msra.mxu0 0.0
    %1026 = vmatprep.subr.mxu0 0.0
    %1027 = vmatpush1.msra.mxu0 0.0
    %1028 = vmatprep.subr.mxu0 0.0
    %1029 = vmatpush1.msra.mxu0 0.0
    %1030 = vmatprep.subr.mxu0 0.0
    %1031 = vmatpush1.msra.mxu0 0.0
    %1032 = vmatprep.subr.mxu0 0.0
    %1033 = vmatpush1.msra.mxu0 0.0
    %1034 = vmatprep.subr.mxu0 0.0
    %1035 = vmatpush1.msra.mxu0 0.0
    %1036 = vmatprep.subr.mxu0 0.0
    %1037 = vmatpush1.msra.mxu0 0.0
    %1038 = vmatprep.subr.mxu0 0.0
    %1039 = vmatpush1.msra.mxu0 0.0
    %1040 = vmatprep.subr.mxu0 0.0
    %1041 = vmatpush1.msra.mxu0 0.0
    %1042 = vmatprep.subr.mxu0 0.0
    %1043 = vmatpush1.msra.mxu0 0.0
    %1044 = vmatprep.mubr.f32.mxu0 0.0
    %1045 = vmatmul.mubr.f32.gmra.mrb[0].mxu0 %v975
    %v1046 = vpop.f32.mrb[0].mxu0
    %v1047 = vadd.f32 0.0, %v1046
    %v1048 = vpop.f32.mrb[0].mxu0
    %1049 = vmatprep.mubr.f32.mxu0 0.0
    %1050 = vmatmul.mubr.f32.gmra.mrb[0].mxu0 %v978
    %v1051 = vpop.f32.mrb[0].mxu0
    %v1052 = vadd.f32 0.0, %v1051
    %v1053 = vpop.f32.mrb[0].mxu0
    %1054 = vdwg.mxu0
    %v1055 = vadd.f32 %v966, %v1047
    %v1056 = vadd.f32 %v971, %v1052
    %v1058 = vsel %vm421, %v800, 0
    %v1061 = vsel %vm421, %v805, 0
    %1063 = vmatprep.subr.mxu0 0.0
    %1064 = vmatpush1.msra.mxu0 %v811
    %1065 = vmatprep.subr.mxu0 0.0
    %1066 = vmatpush1.msra.mxu0 0.0
    %1067 = vmatprep.subr.mxu0 0.0
    %1068 = vmatpush1.msra.mxu0 0.0
    %1069 = vmatprep.subr.mxu0 0.0
    %1070 = vmatpush1.msra.mxu0 0.0
    %1071 = vmatprep.subr.mxu0 0.0
    %1072 = vmatpush1.msra.mxu0 0.0
    %1073 = vmatprep.subr.mxu0 0.0
    %1074 = vmatpush1.msra.mxu0 0.0
    %1075 = vmatprep.subr.mxu0 0.0
    %1076 = vmatpush1.msra.mxu0 0.0
    %1077 = vmatprep.subr.mxu0 0.0
    %1078 = vmatpush1.msra.mxu0 0.0
    %1079 = vmatprep.subr.mxu0 0.0
    %1080 = vmatpush1.msra.mxu0 0.0
    %1081 = vmatprep.subr.mxu0 0.0
    %1082 = vmatpush1.msra.mxu0 0.0
    %1083 = vmatprep.subr.mxu0 0.0
    %1084 = vmatpush1.msra.mxu0 0.0
    %1085 = vmatprep.subr.mxu0 0.0
    %1086 = vmatpush1.msra.mxu0 0.0
    %1087 = vmatprep.subr.mxu0 0.0
    %1088 = vmatpush1.msra.mxu0 0.0
    %1089 = vmatprep.subr.mxu0 0.0
    %1090 = vmatpush1.msra.mxu0 0.0
    %1091 = vmatprep.subr.mxu0 0.0
    %1092 = vmatpush1.msra.mxu0 0.0
    %1093 = vmatprep.subr.mxu0 0.0
    %1094 = vmatpush1.msra.mxu0 0.0
    %1095 = vmatprep.subr.mxu0 0.0
    %1096 = vmatpush1.msra.mxu0 0.0
    %1097 = vmatprep.subr.mxu0 0.0
    %1098 = vmatpush1.msra.mxu0 0.0
    %1099 = vmatprep.subr.mxu0 0.0
    %1100 = vmatpush1.msra.mxu0 0.0
    %1101 = vmatprep.subr.mxu0 0.0
    %1102 = vmatpush1.msra.mxu0 0.0
    %1103 = vmatprep.subr.mxu0 0.0
    %1104 = vmatpush1.msra.mxu0 0.0
    %1105 = vmatprep.subr.mxu0 0.0
    %1106 = vmatpush1.msra.mxu0 0.0
    %1107 = vmatprep.subr.mxu0 0.0
    %1108 = vmatpush1.msra.mxu0 0.0
    %1109 = vmatprep.subr.mxu0 0.0
    %1110 = vmatpush1.msra.mxu0 0.0
    %1111 = vmatprep.subr.mxu0 0.0
    %1112 = vmatpush1.msra.mxu0 0.0
    %1113 = vmatprep.subr.mxu0 0.0
    %1114 = vmatpush1.msra.mxu0 0.0
    %1115 = vmatprep.subr.mxu0 0.0
    %1116 = vmatpush1.msra.mxu0 0.0
    %1117 = vmatprep.subr.mxu0 0.0
    %1118 = vmatpush1.msra.mxu0 0.0
    %1119 = vmatprep.subr.mxu0 0.0
    %1120 = vmatpush1.msra.mxu0 0.0
    %1121 = vmatprep.subr.mxu0 0.0
    %1122 = vmatpush1.msra.mxu0 0.0
    %1123 = vmatprep.subr.mxu0 0.0
    %1124 = vmatpush1.msra.mxu0 0.0
    %1125 = vmatprep.subr.mxu0 0.0
    %1126 = vmatpush1.msra.mxu0 0.0
    %1127 = vmatprep.mubr.f32.mxu0 0.0
    %1128 = vmatmul.mubr.f32.gmra.mrb[0].mxu0 %v1058
    %v1129 = vpop.f32.mrb[0].mxu0
    %v1130 = vadd.f32 0.0, %v1129
    %v1131 = vpop.f32.mrb[0].mxu0
    %1132 = vmatprep.mubr.f32.mxu0 0.0
    %1133 = vmatmul.mubr.f32.gmra.mrb[0].mxu0 %v1061
    %v1134 = vpop.f32.mrb[0].mxu0
    %v1135 = vadd.f32 0.0, %v1134
    %v1136 = vpop.f32.mrb[0].mxu0
    %1137 = vdwg.mxu0
    %v1138 = vadd.f32 %v1055, %v1130
    %v1139 = vadd.f32 %v1056, %v1135
    %v1140 = vadd.f32 %v277, %v1138
    %v1141 = vadd.f32 %v278, %v1139
    %v1142 = vld [vmem:[%s8 + $0x5] sm:$0x1]
    %v1143 = vlaneseq
    %v1144 = vshrl.u32 %v1143, 7
    %v1145 = vsub.s32 0, %v1144
    %v1146 = vrot.slane %v1142, %v1145
    %v1147 = vadd.f32 %v1140, %v1146
    %v1148 = vadd.f32 %v1141, %v1146
    %v1149 = vld [vmem:[%s8 + $0x6] sm:$0x1]
    %v1150 = vld [vmem:[%s8 + $0x7] sm:$0x1]
    %v1151 = vsel %vm239, %v1147, 0.0
    %1152 = vadd.xlane.f32.xlu0 %v1151
    %v1153 = vpop.xlane.xlu0 %1152
    %v1154 = vsel %vm239, %v1148, 0.0
    %1155 = vadd.xlane.f32.xlu0 %v1154
    %v1156 = vpop.xlane.xlu0 %1155
    %v1157 = vmul.f32 %v1153, %v246
    %v1158 = vmul.f32 %v1156, %v246
    %v1159 = vsub.f32 %v1147, %v1157
    %v1160 = vsub.f32 %v1148, %v1158
    %v1161 = vmul.f32 %v1159, %v1159
    %v1162 = vmul.f32 %v1160, %v1160
    %v1163 = vsel %vm239, %v1161, 0.0
    %1164 = vadd.xlane.f32.xlu0 %v1163
    %v1165 = vpop.xlane.xlu0 %1164
    %v1166 = vsel %vm239, %v1162, 0.0
    %1167 = vadd.xlane.f32.xlu0 %v1166
    %v1168 = vpop.xlane.xlu0 %1167
    %v1169 = vmul.f32 %v1165, %v246
    %v1170 = vmul.f32 %v1168, %v246
    %v1171 = vadd.f32 %v1169, 1e-12
    %v1172 = vadd.f32 %v1170, 1e-12
    %v1173 = vrsqrt.pop %v1171
    %v1174 = vrsqrt.pop %v1172
    %v1175 = vmul.f32 %v1159, %v1173
    %v1176 = vmul.f32 %v1160, %v1174
    %v1177 = vlaneseq
    %v1178 = vshrl.u32 %v1177, 7
    %v1179 = vsub.s32 0, %v1178
    %v1180 = vrot.slane %v1149, %v1179
    %v1181 = vmul.f32 %v1175, %v1180
    %v1182 = vmul.f32 %v1176, %v1180
    %v1183 = vlaneseq
    %v1184 = vshrl.u32 %v1183, 7
    %v1185 = vsub.s32 0, %v1184
    %v1186 = vrot.slane %v1150, %v1185
    %v1187 = vadd.f32 %v1181, %v1186
    %v1188 = vadd.f32 %v1182, %v1186
    %v1189 = vld [vmem:[%s5] sm:$0xff]
    %v1190 = vld [vmem:[%s5 + $0x8] sm:$0xff]
    %v1191 = vld [vmem:[%s5 + $0x10] sm:$0xff]
    %v1192 = vld [vmem:[%s5 + $0x18] sm:$0xff]
    %v1193 = vld [vmem:[%s8 + $0x8] sm:$0x1]
    %v1194 = vlaneseq
    %v1195 = vshrl.u32 %v1194, 7
    %v1196 = vsub.s32 0, %v1195
    %v1197 = vrot.slane %v1193, %v1196
    %v1199 = vsel %vm239, %v1187, 0
    %v1202 = vsel %vm239, %v1188, 0
    %1204 = vmatprep.subr.mxu0 0.0
    %1205 = vmatpush1.msra.mxu0 %v1189
    %1206 = vmatprep.subr.mxu0 0.0
    %1207 = vmatpush1.msra.mxu0 %v1190
    %1208 = vmatprep.subr.mxu0 0.0
    %1209 = vmatpush1.msra.mxu0 %v1191
    %1210 = vmatprep.subr.mxu0 0.0
    %1211 = vmatpush1.msra.mxu0 %v1192
    %1212 = vmatprep.subr.mxu0 0.0
    %1213 = vmatpush1.msra.mxu0 0.0
    %1214 = vmatprep.subr.mxu0 0.0
    %1215 = vmatpush1.msra.mxu0 0.0
    %1216 = vmatprep.subr.mxu0 0.0
    %1217 = vmatpush1.msra.mxu0 0.0
    %1218 = vmatprep.subr.mxu0 0.0
    %1219 = vmatpush1.msra.mxu0 0.0
    %1220 = vmatprep.subr.mxu0 0.0
    %1221 = vmatpush1.msra.mxu0 0.0
    %1222 = vmatprep.subr.mxu0 0.0
    %1223 = vmatpush1.msra.mxu0 0.0
    %1224 = vmatprep.subr.mxu0 0.0
    %1225 = vmatpush1.msra.mxu0 0.0
    %1226 = vmatprep.subr.mxu0 0.0
    %1227 = vmatpush1.msra.mxu0 0.0
    %1228 = vmatprep.subr.mxu0 0.0
    %1229 = vmatpush1.msra.mxu0 0.0
    %1230 = vmatprep.subr.mxu0 0.0
    %1231 = vmatpush1.msra.mxu0 0.0
    %1232 = vmatprep.subr.mxu0 0.0
    %1233 = vmatpush1.msra.mxu0 0.0
    %1234 = vmatprep.subr.mxu0 0.0
    %1235 = vmatpush1.msra.mxu0 0.0
    %1236 = vmatprep.subr.mxu0 0.0
    %1237 = vmatpush1.msra.mxu0 0.0
    %1238 = vmatprep.subr.mxu0 0.0
    %1239 = vmatpush1.msra.mxu0 0.0
    %1240 = vmatprep.subr.mxu0 0.0
    %1241 = vmatpush1.msra.mxu0 0.0
    %1242 = vmatprep.subr.mxu0 0.0
    %1243 = vmatpush1.msra.mxu0 0.0
    %1244 = vmatprep.subr.mxu0 0.0
    %1245 = vmatpush1.msra.mxu0 0.0
    %1246 = vmatprep.subr.mxu0 0.0
    %1247 = vmatpush1.msra.mxu0 0.0
    %1248 = vmatprep.subr.mxu0 0.0
    %1249 = vmatpush1.msra.mxu0 0.0
    %1250 = vmatprep.subr.mxu0 0.0
    %1251 = vmatpush1.msra.mxu0 0.0
    %1252 = vmatprep.subr.mxu0 0.0
    %1253 = vmatpush1.msra.mxu0 0.0
    %1254 = vmatprep.subr.mxu0 0.0
    %1255 = vmatpush1.msra.mxu0 0.0
    %1256 = vmatprep.subr.mxu0 0.0
    %1257 = vmatpush1.msra.mxu0 0.0
    %1258 = vmatprep.subr.mxu0 0.0
    %1259 = vmatpush1.msra.mxu0 0.0
    %1260 = vmatprep.subr.mxu0 0.0
    %1261 = vmatpush1.msra.mxu0 0.0
    %1262 = vmatprep.subr.mxu0 0.0
    %1263 = vmatpush1.msra.mxu0 0.0
    %1264 = vmatprep.subr.mxu0 0.0
    %1265 = vmatpush1.msra.mxu0 0.0
    %1266 = vmatprep.subr.mxu0 0.0
    %1267 = vmatpush1.msra.mxu0 0.0
    %1268 = vmatprep.mubr.f32.mxu0 0.0
    %1269 = vmatmul.mubr.f32.gmra.mrb[0].mxu0 %v1199
    %v1270 = vpop.f32.mrb[0].mxu0
    %v1271 = vadd.f32 %v1197, %v1270
    %v1272 = vpop.f32.mrb[0].mxu0
    %1273 = vmatprep.mubr.f32.mxu0 0.0
    %1274 = vmatmul.mubr.f32.gmra.mrb[0].mxu0 %v1202
    %v1275 = vpop.f32.mrb[0].mxu0
    %v1276 = vadd.f32 %v1197, %v1275
    %v1277 = vpop.f32.mrb[0].mxu0
    %1278 = vdwg.mxu0
    %v1279 = vmul.f32 %v1271, 0.5
    %v1280 = vmul.f32 %v1276, 0.5
    %v1281 = vmul.f32 %v1271, 0.044715
    %v1282 = vmul.f32 %v1276, 0.044715
    %v1283 = vmul.f32 %v1281, %v1271
    %v1284 = vmul.f32 %v1282, %v1276
    %v1285 = vmul.f32 %v1283, %v1271
    %v1286 = vmul.f32 %v1284, %v1276
    %v1287 = vadd.f32 %v1271, %v1285
    %v1288 = vadd.f32 %v1276, %v1286
    %v1289 = vmul.f32 %v1287, 0.7978846
    %v1290 = vmul.f32 %v1288, 0.7978846
    %v1291 = vtanh.pop %v1289
    %v1292 = vtanh.pop %v1290
    %v1293 = vadd.f32 %v1291, 1.0
    %v1294 = vadd.f32 %v1292, 1.0
    %v1295 = vmul.f32 %v1279, %v1293
    %v1296 = vmul.f32 %v1280, %v1294
    %v1297 = vld [vmem:[%s6] sm:$0xff]
    %v1298 = vld [vmem:[%s6 + $0x8] sm:$0xff]
    %v1299 = vld [vmem:[%s6 + $0x10] sm:$0xff]
    %v1300 = vld [vmem:[%s6 + $0x18] sm:$0xff]
    %v1301 = vld [vmem:[%s6 + $0x20] sm:$0xff]
    %v1302 = vld [vmem:[%s6 + $0x28] sm:$0xff]
    %v1303 = vld [vmem:[%s6 + $0x30] sm:$0xff]
    %v1304 = vld [vmem:[%s6 + $0x38] sm:$0xff]
    %v1305 = vld [vmem:[%s8 + $0x9] sm:$0x1]
    %v1306 = vlaneseq
    %v1307 = vshrl.u32 %v1306, 7
    %v1308 = vsub.s32 0, %v1307
    %v1309 = vrot.slane %v1305, %v1308
    %v1311 = vsel %vm153, %v1295, 0
    %v1314 = vsel %vm153, %v1296, 0
    %1316 = vmatprep.subr.mxu0 0.0
    %1317 = vmatpush1.msra.mxu0 %v1297
    %1318 = vmatprep.subr.mxu0 0.0
    %1319 = vmatpush1.msra.mxu0 %v1298
    %1320 = vmatprep.subr.mxu0 0.0
    %1321 = vmatpush1.msra.mxu0 %v1299
    %1322 = vmatprep.subr.mxu0 0.0
    %1323 = vmatpush1.msra.mxu0 %v1300
    %1324 = vmatprep.subr.mxu0 0.0
    %1325 = vmatpush1.msra.mxu0 %v1301
    %1326 = vmatprep.subr.mxu0 0.0
    %1327 = vmatpush1.msra.mxu0 %v1302
    %1328 = vmatprep.subr.mxu0 0.0
    %1329 = vmatpush1.msra.mxu0 %v1303
    %1330 = vmatprep.subr.mxu0 0.0
    %1331 = vmatpush1.msra.mxu0 %v1304
    %1332 = vmatprep.subr.mxu0 0.0
    %1333 = vmatpush1.msra.mxu0 0.0
    %1334 = vmatprep.subr.mxu0 0.0
    %1335 = vmatpush1.msra.mxu0 0.0
    %1336 = vmatprep.subr.mxu0 0.0
    %1337 = vmatpush1.msra.mxu0 0.0
    %1338 = vmatprep.subr.mxu0 0.0
    %1339 = vmatpush1.msra.mxu0 0.0
    %1340 = vmatprep.subr.mxu0 0.0
    %1341 = vmatpush1.msra.mxu0 0.0
    %1342 = vmatprep.subr.mxu0 0.0
    %1343 = vmatpush1.msra.mxu0 0.0
    %1344 = vmatprep.subr.mxu0 0.0
    %1345 = vmatpush1.msra.mxu0 0.0
    %1346 = vmatprep.subr.mxu0 0.0
    %1347 = vmatpush1.msra.mxu0 0.0
    %1348 = vmatprep.subr.mxu0 0.0
    %1349 = vmatpush1.msra.mxu0 0.0
    %1350 = vmatprep.subr.mxu0 0.0
    %1351 = vmatpush1.msra.mxu0 0.0
    %1352 = vmatprep.subr.mxu0 0.0
    %1353 = vmatpush1.msra.mxu0 0.0
    %1354 = vmatprep.subr.mxu0 0.0
    %1355 = vmatpush1.msra.mxu0 0.0
    %1356 = vmatprep.subr.mxu0 0.0
    %1357 = vmatpush1.msra.mxu0 0.0
    %1358 = vmatprep.subr.mxu0 0.0
    %1359 = vmatpush1.msra.mxu0 0.0
    %1360 = vmatprep.subr.mxu0 0.0
    %1361 = vmatpush1.msra.mxu0 0.0
    %1362 = vmatprep.subr.mxu0 0.0
    %1363 = vmatpush1.msra.mxu0 0.0
    %1364 = vmatprep.subr.mxu0 0.0
    %1365 = vmatpush1.msra.mxu0 0.0
    %1366 = vmatprep.subr.mxu0 0.0
    %1367 = vmatpush1.msra.mxu0 0.0
    %1368 = vmatprep.subr.mxu0 0.0
    %1369 = vmatpush1.msra.mxu0 0.0
    %1370 = vmatprep.subr.mxu0 0.0
    %1371 = vmatpush1.msra.mxu0 0.0
    %1372 = vmatprep.subr.mxu0 0.0
    %1373 = vmatpush1.msra.mxu0 0.0
    %1374 = vmatprep.subr.mxu0 0.0
    %1375 = vmatpush1.msra.mxu0 0.0
    %1376 = vmatprep.subr.mxu0 0.0
    %1377 = vmatpush1.msra.mxu0 0.0
    %1378 = vmatprep.subr.mxu0 0.0
    %1379 = vmatpush1.msra.mxu0 0.0
    %1380 = vmatprep.mubr.f32.mxu0 0.0
    %1381 = vmatmul.mubr.f32.gmra.mrb[0].mxu0 %v1311
    %v1382 = vpop.f32.mrb[0].mxu0
    %v1383 = vadd.f32 %v1309, %v1382
    %v1384 = vpop.f32.mrb[0].mxu0
    %1385 = vmatprep.mubr.f32.mxu0 0.0
    %1386 = vmatmul.mubr.f32.gmra.mrb[0].mxu0 %v1314
    %v1387 = vpop.f32.mrb[0].mxu0
    %v1388 = vadd.f32 %v1309, %v1387
    %v1389 = vpop.f32.mrb[0].mxu0
    %1390 = vdwg.mxu0
    %v1391 = vadd.f32 %v1187, %v1383
    %v1392 = vadd.f32 %v1188, %v1388
    %v1393 = vld [vmem:[%s8 + $0xa] sm:$0x1]
    %v1394 = vld [vmem:[%s8 + $0xb] sm:$0x1]
    %v1395 = vsel %vm239, %v1391, 0.0
    %1396 = vadd.xlane.f32.xlu0 %v1395
    %v1397 = vpop.xlane.xlu0 %1396
    %v1398 = vsel %vm239, %v1392, 0.0
    %1399 = vadd.xlane.f32.xlu0 %v1398
    %v1400 = vpop.xlane.xlu0 %1399
    %v1401 = vmul.f32 %v1397, %v246
    %v1402 = vmul.f32 %v1400, %v246
    %v1403 = vsub.f32 %v1391, %v1401
    %v1404 = vsub.f32 %v1392, %v1402
    %v1405 = vmul.f32 %v1403, %v1403
    %v1406 = vmul.f32 %v1404, %v1404
    %v1407 = vsel %vm239, %v1405, 0.0
    %1408 = vadd.xlane.f32.xlu0 %v1407
    %v1409 = vpop.xlane.xlu0 %1408
    %v1410 = vsel %vm239, %v1406, 0.0
    %1411 = vadd.xlane.f32.xlu0 %v1410
    %v1412 = vpop.xlane.xlu0 %1411
    %v1413 = vmul.f32 %v1409, %v246
    %v1414 = vmul.f32 %v1412, %v246
    %v1415 = vadd.f32 %v1413, 1e-12
    %v1416 = vadd.f32 %v1414, 1e-12
    %v1417 = vrsqrt.pop %v1415
    %v1418 = vrsqrt.pop %v1416
    %v1419 = vmul.f32 %v1403, %v1417
    %v1420 = vmul.f32 %v1404, %v1418
    %v1421 = vlaneseq
    %v1422 = vshrl.u32 %v1421, 7
    %v1423 = vsub.s32 0, %v1422
    %v1424 = vrot.slane %v1393, %v1423
    %v1425 = vmul.f32 %v1419, %v1424
    %v1426 = vmul.f32 %v1420, %v1424
    %v1427 = vlaneseq
    %v1428 = vshrl.u32 %v1427, 7
    %v1429 = vsub.s32 0, %v1428
    %v1430 = vrot.slane %v1394, %v1429
    %v1431 = vadd.f32 %v1425, %v1430
    %v1432 = vadd.f32 %v1426, %v1430
    %s1433 = scalar_lea.vmem %s3, 32
    %v1434 = vld [vmem:[%s1433] sm:$0xff]
    %v1435 = vld [vmem:[%s1433 + $0x8] sm:$0xff]
    %v1436 = vld [vmem:[%s1433 + $0x10] sm:$0xff]
    %v1437 = vld [vmem:[%s1433 + $0x18] sm:$0xff]
    %v1438 = vld [vmem:[%s8 + $0xc] sm:$0x1]
    %v1439 = vlaneseq
    %v1440 = vshrl.u32 %v1439, 7
    %v1441 = vsub.s32 0, %v1440
    %v1442 = vrot.slane %v1438, %v1441
    %v1444 = vsel %vm239, %v1431, 0
    %v1447 = vsel %vm239, %v1432, 0
    %1449 = vmatprep.subr.mxu0 0.0
    %1450 = vmatpush1.msra.mxu0 %v1434
    %1451 = vmatprep.subr.mxu0 0.0
    %1452 = vmatpush1.msra.mxu0 %v1435
    %1453 = vmatprep.subr.mxu0 0.0
    %1454 = vmatpush1.msra.mxu0 %v1436
    %1455 = vmatprep.subr.mxu0 0.0
    %1456 = vmatpush1.msra.mxu0 %v1437
    %1457 = vmatprep.subr.mxu0 0.0
    %1458 = vmatpush1.msra.mxu0 0.0
    %1459 = vmatprep.subr.mxu0 0.0
    %1460 = vmatpush1.msra.mxu0 0.0
    %1461 = vmatprep.subr.mxu0 0.0
    %1462 = vmatpush1.msra.mxu0 0.0
    %1463 = vmatprep.subr.mxu0 0.0
    %1464 = vmatpush1.msra.mxu0 0.0
    %1465 = vmatprep.subr.mxu0 0.0
    %1466 = vmatpush1.msra.mxu0 0.0
    %1467 = vmatprep.subr.mxu0 0.0
    %1468 = vmatpush1.msra.mxu0 0.0
    %1469 = vmatprep.subr.mxu0 0.0
    %1470 = vmatpush1.msra.mxu0 0.0
    %1471 = vmatprep.subr.mxu0 0.0
    %1472 = vmatpush1.msra.mxu0 0.0
    %1473 = vmatprep.subr.mxu0 0.0
    %1474 = vmatpush1.msra.mxu0 0.0
    %1475 = vmatprep.subr.mxu0 0.0
    %1476 = vmatpush1.msra.mxu0 0.0
    %1477 = vmatprep.subr.mxu0 0.0
    %1478 = vmatpush1.msra.mxu0 0.0
    %1479 = vmatprep.subr.mxu0 0.0
    %1480 = vmatpush1.msra.mxu0 0.0
    %1481 = vmatprep.subr.mxu0 0.0
    %1482 = vmatpush1.msra.mxu0 0.0
    %1483 = vmatprep.subr.mxu0 0.0
    %1484 = vmatpush1.msra.mxu0 0.0
    %1485 = vmatprep.subr.mxu0 0.0
    %1486 = vmatpush1.msra.mxu0 0.0
    %1487 = vmatprep.subr.mxu0 0.0
    %1488 = vmatpush1.msra.mxu0 0.0
    %1489 = vmatprep.subr.mxu0 0.0
    %1490 = vmatpush1.msra.mxu0 0.0
    %1491 = vmatprep.subr.mxu0 0.0
    %1492 = vmatpush1.msra.mxu0 0.0
    %1493 = vmatprep.subr.mxu0 0.0
    %1494 = vmatpush1.msra.mxu0 0.0
    %1495 = vmatprep.subr.mxu0 0.0
    %1496 = vmatpush1.msra.mxu0 0.0
    %1497 = vmatprep.subr.mxu0 0.0
    %1498 = vmatpush1.msra.mxu0 0.0
    %1499 = vmatprep.subr.mxu0 0.0
    %1500 = vmatpush1.msra.mxu0 0.0
    %1501 = vmatprep.subr.mxu0 0.0
    %1502 = vmatpush1.msra.mxu0 0.0
    %1503 = vmatprep.subr.mxu0 0.0
    %1504 = vmatpush1.msra.mxu0 0.0
    %1505 = vmatprep.subr.mxu0 0.0
    %1506 = vmatpush1.msra.mxu0 0.0
    %1507 = vmatprep.subr.mxu0 0.0
    %1508 = vmatpush1.msra.mxu0 0.0
    %1509 = vmatprep.subr.mxu0 0.0
    %1510 = vmatpush1.msra.mxu0 0.0
    %1511 = vmatprep.subr.mxu0 0.0
    %1512 = vmatpush1.msra.mxu0 0.0
    %1513 = vmatprep.mubr.f32.mxu0 0.0
    %1514 = vmatmul.mubr.f32.gmra.mrb[0].mxu0 %v1444
    %v1515 = vpop.f32.mrb[0].mxu0
    %v1516 = vadd.f32 %v1442, %v1515
    %v1517 = vpop.f32.mrb[0].mxu0
    %1518 = vmatprep.mubr.f32.mxu0 0.0
    %1519 = vmatmul.mubr.f32.gmra.mrb[0].mxu0 %v1447
    %v1520 = vpop.f32.mrb[0].mxu0
    %v1521 = vadd.f32 %v1442, %v1520
    %v1522 = vpop.f32.mrb[0].mxu0
    %1523 = vdwg.mxu0
    %1526 = vrot.lane.b32.xlu0 %v1516, 120
    %v1527 = vpop.permute.xlu0 %1526
    %1528 = vrot.lane.b32.xlu0 %v1521, 120
    %v1529 = vpop.permute.xlu0 %1528
    %1532 = vrot.lane.b32.xlu0 %v1516, 112
    %v1533 = vpop.permute.xlu0 %1532
    %1534 = vrot.lane.b32.xlu0 %v1521, 112
    %v1535 = vpop.permute.xlu0 %1534
    %1538 = vrot.lane.b32.xlu0 %v1516, 104
    %v1539 = vpop.permute.xlu0 %1538
    %1540 = vrot.lane.b32.xlu0 %v1521, 104
    %v1541 = vpop.permute.xlu0 %1540
    %v1544 = vmul.f32 %v1516, 0.35355338
    %v1545 = vmul.f32 %v1521, 0.35355338
    %v1546 = vmul.f32 %v1527, 0.35355338
    %v1547 = vmul.f32 %v1529, 0.35355338
    %v1548 = vmul.f32 %v1533, 0.35355338
    %v1549 = vmul.f32 %v1535, 0.35355338
    %v1550 = vmul.f32 %v1539, 0.35355338
    %v1551 = vmul.f32 %v1541, 0.35355338
    %1552 = vrot.lane.b32.xlu0 %v1516, 96
    %v1553 = vpop.permute.xlu0 %1552
    %1554 = vrot.lane.b32.xlu0 %v1521, 96
    %v1555 = vpop.permute.xlu0 %1554
    %1556 = vrot.lane.b32.xlu0 %v1527, 96
    %v1557 = vpop.permute.xlu0 %1556
    %1558 = vrot.lane.b32.xlu0 %v1529, 96
    %v1559 = vpop.permute.xlu0 %1558
    %1560 = vrot.lane.b32.xlu0 %v1533, 96
    %v1561 = vpop.permute.xlu0 %1560
    %1562 = vrot.lane.b32.xlu0 %v1535, 96
    %v1563 = vpop.permute.xlu0 %1562
    %1564 = vrot.lane.b32.xlu0 %v1539, 96
    %v1565 = vpop.permute.xlu0 %1564
    %1566 = vrot.lane.b32.xlu0 %v1541, 96
    %v1567 = vpop.permute.xlu0 %1566
    %v1569 = vsel %vm421, %v1544, 0
    %v1572 = vsel %vm421, %v1545, 0
    %v1575 = vsel %vm421, %v1546, 0
    %v1578 = vsel %vm421, %v1547, 0
    %v1581 = vsel %vm421, %v1548, 0
    %v1584 = vsel %vm421, %v1549, 0
    %v1587 = vsel %vm421, %v1550, 0
    %v1590 = vsel %vm421, %v1551, 0
    %v1592 = vsel %vm421, %v1553, 0
    %v1594 = vsel %vm421, %v1555, 0
    %v1596 = vsel %vm421, %v1557, 0
    %v1598 = vsel %vm421, %v1559, 0
    %v1600 = vsel %vm421, %v1561, 0
    %v1602 = vsel %vm421, %v1563, 0
    %v1604 = vsel %vm421, %v1565, 0
    %v1606 = vsel %vm421, %v1567, 0
    %1608 = vmatprep.subr.mxu0 0.0
    %1609 = vmatpush1.xpose.msra.mxu0 %v1592
    %1610 = vmatprep.subr.mxu0 0.0
    %1611 = vmatpush1.xpose.msra.mxu0 %v1594
    %1612 = vmatprep.subr.mxu0 0.0
    %1613 = vmatpush1.xpose.msra.mxu0 %v1596
    %1614 = vmatprep.subr.mxu0 0.0
    %1615 = vmatpush1.xpose.msra.mxu0 %v1598
    %1616 = vmatprep.subr.mxu0 0.0
    %1617 = vmatpush1.xpose.msra.mxu0 %v1600
    %1618 = vmatprep.subr.mxu0 0.0
    %1619 = vmatpush1.xpose.msra.mxu0 %v1602
    %1620 = vmatprep.subr.mxu0 0.0
    %1621 = vmatpush1.xpose.msra.mxu0 %v1604
    %1622 = vmatprep.subr.mxu0 0.0
    %1623 = vmatpush1.xpose.msra.mxu0 %v1606
    %1624 = vmatprep.subr.mxu0 0.0
    %1625 = vmatpush1.xpose.msra.mxu0 0.0
    %1626 = vmatprep.subr.mxu0 0.0
    %1627 = vmatpush1.xpose.msra.mxu0 0.0
    %1628 = vmatprep.subr.mxu0 0.0
    %1629 = vmatpush1.xpose.msra.mxu0 0.0
    %1630 = vmatprep.subr.mxu0 0.0
    %1631 = vmatpush1.xpose.msra.mxu0 0.0
    %1632 = vmatprep.subr.mxu0 0.0
    %1633 = vmatpush1.xpose.msra.mxu0 0.0
    %1634 = vmatprep.subr.mxu0 0.0
    %1635 = vmatpush1.xpose.msra.mxu0 0.0
    %1636 = vmatprep.subr.mxu0 0.0
    %1637 = vmatpush1.xpose.msra.mxu0 0.0
    %1638 = vmatprep.subr.mxu0 0.0
    %1639 = vmatpush1.xpose.msra.mxu0 0.0
    %1640 = vmatprep.subr.mxu0 0.0
    %1641 = vmatpush1.xpose.msra.mxu0 0.0
    %1642 = vmatprep.subr.mxu0 0.0
    %1643 = vmatpush1.xpose.msra.mxu0 0.0
    %1644 = vmatprep.subr.mxu0 0.0
    %1645 = vmatpush1.xpose.msra.mxu0 0.0
    %1646 = vmatprep.subr.mxu0 0.0
    %1647 = vmatpush1.xpose.msra.mxu0 0.0
    %1648 = vmatprep.subr.mxu0 0.0
    %1649 = vmatpush1.xpose.msra.mxu0 0.0
    %1650 = vmatprep.subr.mxu0 0.0
    %1651 = vmatpush1.xpose.msra.mxu0 0.0
    %1652 = vmatprep.subr.mxu0 0.0
    %1653 = vmatpush1.xpose.msra.mxu0 0.0
    %1654 = vmatprep.subr.mxu0 0.0
    %1655 = vmatpush1.xpose.msra.mxu0 0.0
    %1656 = vmatprep.subr.mxu0 0.0
    %1657 = vmatpush1.xpose.msra.mxu0 0.0
    %1658 = vmatprep.subr.mxu0 0.0
    %1659 = vmatpush1.xpose.msra.mxu0 0.0
    %1660 = vmatprep.subr.mxu0 0.0
    %1661 = vmatpush1.xpose.msra.mxu0 0.0
    %1662 = vmatprep.subr.mxu0 0.0
    %1663 = vmatpush1.xpose.msra.mxu0 0.0
    %1664 = vmatprep.subr.mxu0 0.0
    %1665 = vmatpush1.xpose.msra.mxu0 0.0
    %1666 = vmatprep.subr.mxu0 0.0
    %1667 = vmatpush1.xpose.msra.mxu0 0.0
    %1668 = vmatprep.subr.mxu0 0.0
    %1669 = vmatpush1.xpose.msra.mxu0 0.0
    %1670 = vmatprep.subr.mxu0 0.0
    %1671 = vmatpush1.xpose.msra.mxu0 0.0
    %1672 = vmatprep.mubr.f32.mxu0 0.0
    %1673 = vmatmul.mubr.f32.gmra.mrb[0].mxu0 %v1569
    %v1674 = vpop.f32.mrb[0].mxu0
    %v1675 = vadd.f32 %v279, %v1674
    %v1676 = vpop.f32.mrb[0].mxu0
    %1677 = vmatprep.mubr.f32.mxu0 0.0
    %1678 = vmatmul.mubr.f32.gmra.mrb[0].mxu0 %v1572
    %v1679 = vpop.f32.mrb[0].mxu0
    %v1680 = vadd.f32 %v280, %v1679
    %v1681 = vpop.f32.mrb[0].mxu0
    %1682 = vmatprep.mubr.f32.mxu0 0.0
    %1683 = vmatmul.mubr.f32.gmra.mrb[0].mxu0 %v1575
    %v1684 = vpop.f32.mrb[0].mxu0
    %v1685 = vadd.f32 %v281, %v1684
    %v1686 = vpop.f32.mrb[0].mxu0
    %1687 = vmatprep.mubr.f32.mxu0 0.0
    %1688 = vmatmul.mubr.f32.gmra.mrb[0].mxu0 %v1578
    %v1689 = vpop.f32.mrb[0].mxu0
    %v1690 = vadd.f32 %v282, %v1689
    %v1691 = vpop.f32.mrb[0].mxu0
    %1692 = vmatprep.mubr.f32.mxu0 0.0
    %1693 = vmatmul.mubr.f32.gmra.mrb[0].mxu0 %v1581
    %v1694 = vpop.f32.mrb[0].mxu0
    %v1695 = vadd.f32 %v283, %v1694
    %v1696 = vpop.f32.mrb[0].mxu0
    %1697 = vmatprep.mubr.f32.mxu0 0.0
    %1698 = vmatmul.mubr.f32.gmra.mrb[0].mxu0 %v1584
    %v1699 = vpop.f32.mrb[0].mxu0
    %v1700 = vadd.f32 %v284, %v1699
    %v1701 = vpop.f32.mrb[0].mxu0
    %1702 = vmatprep.mubr.f32.mxu0 0.0
    %1703 = vmatmul.mubr.f32.gmra.mrb[0].mxu0 %v1587
    %v1704 = vpop.f32.mrb[0].mxu0
    %v1705 = vadd.f32 %v285, %v1704
    %v1706 = vpop.f32.mrb[0].mxu0
    %1707 = vmatprep.mubr.f32.mxu0 0.0
    %1708 = vmatmul.mubr.f32.gmra.mrb[0].mxu0 %v1590
    %v1709 = vpop.f32.mrb[0].mxu0
    %v1710 = vadd.f32 %v286, %v1709
    %v1711 = vpop.f32.mrb[0].mxu0
    %1712 = vdwg.mxu0
    %v1713 = vsel %vm153, %v1675, -inf
    %1714 = vmax.xlane.f32.xlu0 %v1713
    %v1715 = vpop.xlane.xlu0 %1714
    %v1716 = vsel %vm153, %v1680, -inf
    %1717 = vmax.xlane.f32.xlu0 %v1716
    %v1718 = vpop.xlane.xlu0 %1717
    %v1719 = vsel %vm153, %v1685, -inf
    %1720 = vmax.xlane.f32.xlu0 %v1719
    %v1721 = vpop.xlane.xlu0 %1720
    %v1722 = vsel %vm153, %v1690, -inf
    %1723 = vmax.xlane.f32.xlu0 %v1722
    %v1724 = vpop.xlane.xlu0 %1723
    %v1725 = vsel %vm153, %v1695, -inf
    %1726 = vmax.xlane.f32.xlu0 %v1725
    %v1727 = vpop.xlane.xlu0 %1726
    %v1728 = vsel %vm153, %v1700, -inf
    %1729 = vmax.xlane.f32.xlu0 %v1728
    %v1730 = vpop.xlane.xlu0 %1729
    %v1731 = vsel %vm153, %v1705, -inf
    %1732 = vmax.xlane.f32.xlu0 %v1731
    %v1733 = vpop.xlane.xlu0 %1732
    %v1734 = vsel %vm153, %v1710, -inf
    %1735 = vmax.xlane.f32.xlu0 %v1734
    %v1736 = vpop.xlane.xlu0 %1735
    %v1737 = vsub.f32 %v1675, %v1715
    %v1738 = vsub.f32 %v1680, %v1718
    %v1739 = vsub.f32 %v1685, %v1721
    %v1740 = vsub.f32 %v1690, %v1724
    %v1741 = vsub.f32 %v1695, %v1727
    %v1742 = vsub.f32 %v1700, %v1730
    %v1743 = vsub.f32 %v1705, %v1733
    %v1744 = vsub.f32 %v1710, %v1736
    %v1745 = vmul.f32 %v1737, 1.442695
    %v1746 = vpow.pop %v1745
    %v1747 = vmul.f32 %v1738, 1.442695
    %v1748 = vpow.pop %v1747
    %v1749 = vmul.f32 %v1739, 1.442695
    %v1750 = vpow.pop %v1749
    %v1751 = vmul.f32 %v1740, 1.442695
    %v1752 = vpow.pop %v1751
    %v1753 = vmul.f32 %v1741, 1.442695
    %v1754 = vpow.pop %v1753
    %v1755 = vmul.f32 %v1742, 1.442695
    %v1756 = vpow.pop %v1755
    %v1757 = vmul.f32 %v1743, 1.442695
    %v1758 = vpow.pop %v1757
    %v1759 = vmul.f32 %v1744, 1.442695
    %v1760 = vpow.pop %v1759
    %v1761 = vsel %vm153, %v1746, 0.0
    %1762 = vadd.xlane.f32.xlu0 %v1761
    %v1763 = vpop.xlane.xlu0 %1762
    %v1764 = vsel %vm153, %v1748, 0.0
    %1765 = vadd.xlane.f32.xlu0 %v1764
    %v1766 = vpop.xlane.xlu0 %1765
    %v1767 = vsel %vm153, %v1750, 0.0
    %1768 = vadd.xlane.f32.xlu0 %v1767
    %v1769 = vpop.xlane.xlu0 %1768
    %v1770 = vsel %vm153, %v1752, 0.0
    %1771 = vadd.xlane.f32.xlu0 %v1770
    %v1772 = vpop.xlane.xlu0 %1771
    %v1773 = vsel %vm153, %v1754, 0.0
    %1774 = vadd.xlane.f32.xlu0 %v1773
    %v1775 = vpop.xlane.xlu0 %1774
    %v1776 = vsel %vm153, %v1756, 0.0
    %1777 = vadd.xlane.f32.xlu0 %v1776
    %v1778 = vpop.xlane.xlu0 %1777
    %v1779 = vsel %vm153, %v1758, 0.0
    %1780 = vadd.xlane.f32.xlu0 %v1779
    %v1781 = vpop.xlane.xlu0 %1780
    %v1782 = vsel %vm153, %v1760, 0.0
    %1783 = vadd.xlane.f32.xlu0 %v1782
    %v1784 = vpop.xlane.xlu0 %1783
    %v1785 = vrcp.pop %v1763
    %v1786 = vrcp.pop %v1766
    %v1787 = vrcp.pop %v1769
    %v1788 = vrcp.pop %v1772
    %v1789 = vrcp.pop %v1775
    %v1790 = vrcp.pop %v1778
    %v1791 = vrcp.pop %v1781
    %v1792 = vrcp.pop %v1784
    %v1793 = vmul.f32 %v1746, %v1785
    %v1794 = vmul.f32 %v1748, %v1786
    %v1795 = vmul.f32 %v1750, %v1787
    %v1796 = vmul.f32 %v1752, %v1788
    %v1797 = vmul.f32 %v1754, %v1789
    %v1798 = vmul.f32 %v1756, %v1790
    %v1799 = vmul.f32 %v1758, %v1791
    %v1800 = vmul.f32 %v1760, %v1792
    %1801 = vrot.lane.b32.xlu0 %v1516, 64
    %v1802 = vpop.permute.xlu0 %1801
    %1803 = vrot.lane.b32.xlu0 %v1521, 64
    %v1804 = vpop.permute.xlu0 %1803
    %1805 = vrot.lane.b32.xlu0 %v1527, 64
    %v1806 = vpop.permute.xlu0 %1805
    %1807 = vrot.lane.b32.xlu0 %v1529, 64
    %v1808 = vpop.permute.xlu0 %1807
    %1809 = vrot.lane.b32.xlu0 %v1533, 64
    %v1810 = vpop.permute.xlu0 %1809
    %1811 = vrot.lane.b32.xlu0 %v1535, 64
    %v1812 = vpop.permute.xlu0 %1811
    %1813 = vrot.lane.b32.xlu0 %v1539, 64
    %v1814 = vpop.permute.xlu0 %1813
    %1815 = vrot.lane.b32.xlu0 %v1541, 64
    %v1816 = vpop.permute.xlu0 %1815
    %v1826 = vsel %vm153, %v1793, 0
    %v1829 = vsel %vm153, %v1794, 0
    %v1832 = vsel %vm153, %v1795, 0
    %v1835 = vsel %vm153, %v1796, 0
    %v1838 = vsel %vm153, %v1797, 0
    %v1841 = vsel %vm153, %v1798, 0
    %v1844 = vsel %vm153, %v1799, 0
    %v1847 = vsel %vm153, %v1800, 0
    %1849 = vmatprep.subr.mxu0 0.0
    %1850 = vmatpush1.msra.mxu0 %v1802
    %1851 = vmatprep.subr.mxu0 0.0
    %1852 = vmatpush1.msra.mxu0 %v1804
    %1853 = vmatprep.subr.mxu0 0.0
    %1854 = vmatpush1.msra.mxu0 %v1806
    %1855 = vmatprep.subr.mxu0 0.0
    %1856 = vmatpush1.msra.mxu0 %v1808
    %1857 = vmatprep.subr.mxu0 0.0
    %1858 = vmatpush1.msra.mxu0 %v1810
    %1859 = vmatprep.subr.mxu0 0.0
    %1860 = vmatpush1.msra.mxu0 %v1812
    %1861 = vmatprep.subr.mxu0 0.0
    %1862 = vmatpush1.msra.mxu0 %v1814
    %1863 = vmatprep.subr.mxu0 0.0
    %1864 = vmatpush1.msra.mxu0 %v1816
    %1865 = vmatprep.subr.mxu0 0.0
    %1866 = vmatpush1.msra.mxu0 0.0
    %1867 = vmatprep.subr.mxu0 0.0
    %1868 = vmatpush1.msra.mxu0 0.0
    %1869 = vmatprep.subr.mxu0 0.0
    %1870 = vmatpush1.msra.mxu0 0.0
    %1871 = vmatprep.subr.mxu0 0.0
    %1872 = vmatpush1.msra.mxu0 0.0
    %1873 = vmatprep.subr.mxu0 0.0
    %1874 = vmatpush1.msra.mxu0 0.0
    %1875 = vmatprep.subr.mxu0 0.0
    %1876 = vmatpush1.msra.mxu0 0.0
    %1877 = vmatprep.subr.mxu0 0.0
    %1878 = vmatpush1.msra.mxu0 0.0
    %1879 = vmatprep.subr.mxu0 0.0
    %1880 = vmatpush1.msra.mxu0 0.0
    %1881 = vmatprep.subr.mxu0 0.0
    %1882 = vmatpush1.msra.mxu0 0.0
    %1883 = vmatprep.subr.mxu0 0.0
    %1884 = vmatpush1.msra.mxu0 0.0
    %1885 = vmatprep.subr.mxu0 0.0
    %1886 = vmatpush1.msra.mxu0 0.0
    %1887 = vmatprep.subr.mxu0 0.0
    %1888 = vmatpush1.msra.mxu0 0.0
    %1889 = vmatprep.subr.mxu0 0.0
    %1890 = vmatpush1.msra.mxu0 0.0
    %1891 = vmatprep.subr.mxu0 0.0
    %1892 = vmatpush1.msra.mxu0 0.0
    %1893 = vmatprep.subr.mxu0 0.0
    %1894 = vmatpush1.msra.mxu0 0.0
    %1895 = vmatprep.subr.mxu0 0.0
    %1896 = vmatpush1.msra.mxu0 0.0
    %1897 = vmatprep.subr.mxu0 0.0
    %1898 = vmatpush1.msra.mxu0 0.0
    %1899 = vmatprep.subr.mxu0 0.0
    %1900 = vmatpush1.msra.mxu0 0.0
    %1901 = vmatprep.subr.mxu0 0.0
    %1902 = vmatpush1.msra.mxu0 0.0
    %1903 = vmatprep.subr.mxu0 0.0
    %1904 = vmatpush1.msra.mxu0 0.0
    %1905 = vmatprep.subr.mxu0 0.0
    %1906 = vmatpush1.msra.mxu0 0.0
    %1907 = vmatprep.subr.mxu0 0.0
    %1908 = vmatpush1.msra.mxu0 0.0
    %1909 = vmatprep.subr.mxu0 0.0
    %1910 = vmatpush1.msra.mxu0 0.0
    %1911 = vmatprep.subr.mxu0 0.0
    %1912 = vmatpush1.msra.mxu0 0.0
    %1913 = vmatprep.mubr.f32.mxu0 0.0
    %1914 = vmatmul.mubr.f32.gmra.mrb[0].mxu0 %v1826
    %v1915 = vpop.f32.mrb[0].mxu0
    %v1916 = vadd.f32 0.0, %v1915
    %v1917 = vpop.f32.mrb[0].mxu0
    %1918 = vmatprep.mubr.f32.mxu0 0.0
    %1919 = vmatmul.mubr.f32.gmra.mrb[0].mxu0 %v1829
    %v1920 = vpop.f32.mrb[0].mxu0
    %v1921 = vadd.f32 0.0, %v1920
    %v1922 = vpop.f32.mrb[0].mxu0
    %1923 = vmatprep.mubr.f32.mxu0 0.0
    %1924 = vmatmul.mubr.f32.gmra.mrb[0].mxu0 %v1832
    %v1925 = vpop.f32.mrb[0].mxu0
    %v1926 = vadd.f32 0.0, %v1925
    %v1927 = vpop.f32.mrb[0].mxu0
    %1928 = vmatprep.mubr.f32.mxu0 0.0
    %1929 = vmatmul.mubr.f32.gmra.mrb[0].mxu0 %v1835
    %v1930 = vpop.f32.mrb[0].mxu0
    %v1931 = vadd.f32 0.0, %v1930
    %v1932 = vpop.f32.mrb[0].mxu0
    %1933 = vmatprep.mubr.f32.mxu0 0.0
    %1934 = vmatmul.mubr.f32.gmra.mrb[0].mxu0 %v1838
    %v1935 = vpop.f32.mrb[0].mxu0
    %v1936 = vadd.f32 0.0, %v1935
    %v1937 = vpop.f32.mrb[0].mxu0
    %1938 = vmatprep.mubr.f32.mxu0 0.0
    %1939 = vmatmul.mubr.f32.gmra.mrb[0].mxu0 %v1841
    %v1940 = vpop.f32.mrb[0].mxu0
    %v1941 = vadd.f32 0.0, %v1940
    %v1942 = vpop.f32.mrb[0].mxu0
    %1943 = vmatprep.mubr.f32.mxu0 0.0
    %1944 = vmatmul.mubr.f32.gmra.mrb[0].mxu0 %v1844
    %v1945 = vpop.f32.mrb[0].mxu0
    %v1946 = vadd.f32 0.0, %v1945
    %v1947 = vpop.f32.mrb[0].mxu0
    %1948 = vmatprep.mubr.f32.mxu0 0.0
    %1949 = vmatmul.mubr.f32.gmra.mrb[0].mxu0 %v1847
    %v1950 = vpop.f32.mrb[0].mxu0
    %v1951 = vadd.f32 0.0, %v1950
    %v1952 = vpop.f32.mrb[0].mxu0
    %1953 = vdwg.mxu0
    %s1954 = scalar_lea.vmem %s4, 32
    %v1955 = vld [vmem:[%s1954] sm:$0xff]
    %v1956 = vld [vmem:[%s1954 + $0x8] sm:$0xff]
    %v1957 = vld [vmem:[%s1954 + $0x10] sm:$0xff]
    %v1958 = vld [vmem:[%s1954 + $0x18] sm:$0xff]
    %v1960 = vsel %vm421, %v1926, 0
    %v1963 = vsel %vm421, %v1931, 0
    %1965 = vmatprep.subr.mxu0 0.0
    %1966 = vmatpush1.msra.mxu0 %v1956
    %1967 = vmatprep.subr.mxu0 0.0
    %1968 = vmatpush1.msra.mxu0 0.0
    %1969 = vmatprep.subr.mxu0 0.0
    %1970 = vmatpush1.msra.mxu0 0.0
    %1971 = vmatprep.subr.mxu0 0.0
    %1972 = vmatpush1.msra.mxu0 0.0
    %1973 = vmatprep.subr.mxu0 0.0
    %1974 = vmatpush1.msra.mxu0 0.0
    %1975 = vmatprep.subr.mxu0 0.0
    %1976 = vmatpush1.msra.mxu0 0.0
    %1977 = vmatprep.subr.mxu0 0.0
    %1978 = vmatpush1.msra.mxu0 0.0
    %1979 = vmatprep.subr.mxu0 0.0
    %1980 = vmatpush1.msra.mxu0 0.0
    %1981 = vmatprep.subr.mxu0 0.0
    %1982 = vmatpush1.msra.mxu0 0.0
    %1983 = vmatprep.subr.mxu0 0.0
    %1984 = vmatpush1.msra.mxu0 0.0
    %1985 = vmatprep.subr.mxu0 0.0
    %1986 = vmatpush1.msra.mxu0 0.0
    %1987 = vmatprep.subr.mxu0 0.0
    %1988 = vmatpush1.msra.mxu0 0.0
    %1989 = vmatprep.subr.mxu0 0.0
    %1990 = vmatpush1.msra.mxu0 0.0
    %1991 = vmatprep.subr.mxu0 0.0
    %1992 = vmatpush1.msra.mxu0 0.0
    %1993 = vmatprep.subr.mxu0 0.0
    %1994 = vmatpush1.msra.mxu0 0.0
    %1995 = vmatprep.subr.mxu0 0.0
    %1996 = vmatpush1.msra.mxu0 0.0
    %1997 = vmatprep.subr.mxu0 0.0
    %1998 = vmatpush1.msra.mxu0 0.0
    %1999 = vmatprep.subr.mxu0 0.0
    %2000 = vmatpush1.msra.mxu0 0.0
    %2001 = vmatprep.subr.mxu0 0.0
    %2002 = vmatpush1.msra.mxu0 0.0
    %2003 = vmatprep.subr.mxu0 0.0
    %2004 = vmatpush1.msra.mxu0 0.0
    %2005 = vmatprep.subr.mxu0 0.0
    %2006 = vmatpush1.msra.mxu0 0.0
    %2007 = vmatprep.subr.mxu0 0.0
    %2008 = vmatpush1.msra.mxu0 0.0
    %2009 = vmatprep.subr.mxu0 0.0
    %2010 = vmatpush1.msra.mxu0 0.0
    %2011 = vmatprep.subr.mxu0 0.0
    %2012 = vmatpush1.msra.mxu0 0.0
    %2013 = vmatprep.subr.mxu0 0.0
    %2014 = vmatpush1.msra.mxu0 0.0
    %2015 = vmatprep.subr.mxu0 0.0
    %2016 = vmatpush1.msra.mxu0 0.0
    %2017 = vmatprep.subr.mxu0 0.0
    %2018 = vmatpush1.msra.mxu0 0.0
    %2019 = vmatprep.subr.mxu0 0.0
    %2020 = vmatpush1.msra.mxu0 0.0
    %2021 = vmatprep.subr.mxu0 0.0
    %2022 = vmatpush1.msra.mxu0 0.0
    %2023 = vmatprep.subr.mxu0 0.0
    %2024 = vmatpush1.msra.mxu0 0.0
    %2025 = vmatprep.subr.mxu0 0.0
    %2026 = vmatpush1.msra.mxu0 0.0
    %2027 = vmatprep.subr.mxu0 0.0
    %2028 = vmatpush1.msra.mxu0 0.0
    %2029 = vmatprep.mubr.f32.mxu0 0.0
    %2030 = vmatmul.mubr.f32.gmra.mrb[0].mxu0 %v1960
    %v2031 = vpop.f32.mrb[0].mxu0
    %v2032 = vadd.f32 0.0, %v2031
    %v2033 = vpop.f32.mrb[0].mxu0
    %2034 = vmatprep.mubr.f32.mxu0 0.0
    %2035 = vmatmul.mubr.f32.gmra.mrb[0].mxu0 %v1963
    %v2036 = vpop.f32.mrb[0].mxu0
    %v2037 = vadd.f32 0.0, %v2036
    %v2038 = vpop.f32.mrb[0].mxu0
    %2039 = vdwg.mxu0
    %v2041 = vsel %vm421, %v1916, 0
    %v2044 = vsel %vm421, %v1921, 0
    %2046 = vmatprep.subr.mxu0 0.0
    %2047 = vmatpush1.msra.mxu0 %v1955
    %2048 = vmatprep.subr.mxu0 0.0
    %2049 = vmatpush1.msra.mxu0 0.0
    %2050 = vmatprep.subr.mxu0 0.0
    %2051 = vmatpush1.msra.mxu0 0.0
    %2052 = vmatprep.subr.mxu0 0.0
    %2053 = vmatpush1.msra.mxu0 0.0
    %2054 = vmatprep.subr.mxu0 0.0
    %2055 = vmatpush1.msra.mxu0 0.0
    %2056 = vmatprep.subr.mxu0 0.0
    %2057 = vmatpush1.msra.mxu0 0.0
    %2058 = vmatprep.subr.mxu0 0.0
    %2059 = vmatpush1.msra.mxu0 0.0
    %2060 = vmatprep.subr.mxu0 0.0
    %2061 = vmatpush1.msra.mxu0 0.0
    %2062 = vmatprep.subr.mxu0 0.0
    %2063 = vmatpush1.msra.mxu0 0.0
    %2064 = vmatprep.subr.mxu0 0.0
    %2065 = vmatpush1.msra.mxu0 0.0
    %2066 = vmatprep.subr.mxu0 0.0
    %2067 = vmatpush1.msra.mxu0 0.0
    %2068 = vmatprep.subr.mxu0 0.0
    %2069 = vmatpush1.msra.mxu0 0.0
    %2070 = vmatprep.subr.mxu0 0.0
    %2071 = vmatpush1.msra.mxu0 0.0
    %2072 = vmatprep.subr.mxu0 0.0
    %2073 = vmatpush1.msra.mxu0 0.0
    %2074 = vmatprep.subr.mxu0 0.0
    %2075 = vmatpush1.msra.mxu0 0.0
    %2076 = vmatprep.subr.mxu0 0.0
    %2077 = vmatpush1.msra.mxu0 0.0
    %2078 = vmatprep.subr.mxu0 0.0
    %2079 = vmatpush1.msra.mxu0 0.0
    %2080 = vmatprep.subr.mxu0 0.0
    %2081 = vmatpush1.msra.mxu0 0.0
    %2082 = vmatprep.subr.mxu0 0.0
    %2083 = vmatpush1.msra.mxu0 0.0
    %2084 = vmatprep.subr.mxu0 0.0
    %2085 = vmatpush1.msra.mxu0 0.0
    %2086 = vmatprep.subr.mxu0 0.0
    %2087 = vmatpush1.msra.mxu0 0.0
    %2088 = vmatprep.subr.mxu0 0.0
    %2089 = vmatpush1.msra.mxu0 0.0
    %2090 = vmatprep.subr.mxu0 0.0
    %2091 = vmatpush1.msra.mxu0 0.0
    %2092 = vmatprep.subr.mxu0 0.0
    %2093 = vmatpush1.msra.mxu0 0.0
    %2094 = vmatprep.subr.mxu0 0.0
    %2095 = vmatpush1.msra.mxu0 0.0
    %2096 = vmatprep.subr.mxu0 0.0
    %2097 = vmatpush1.msra.mxu0 0.0
    %2098 = vmatprep.subr.mxu0 0.0
    %2099 = vmatpush1.msra.mxu0 0.0
    %2100 = vmatprep.subr.mxu0 0.0
    %2101 = vmatpush1.msra.mxu0 0.0
    %2102 = vmatprep.subr.mxu0 0.0
    %2103 = vmatpush1.msra.mxu0 0.0
    %2104 = vmatprep.subr.mxu0 0.0
    %2105 = vmatpush1.msra.mxu0 0.0
    %2106 = vmatprep.subr.mxu0 0.0
    %2107 = vmatpush1.msra.mxu0 0.0
    %2108 = vmatprep.subr.mxu0 0.0
    %2109 = vmatpush1.msra.mxu0 0.0
    %2110 = vmatprep.mubr.f32.mxu0 0.0
    %2111 = vmatmul.mubr.f32.gmra.mrb[0].mxu0 %v2041
    %v2112 = vpop.f32.mrb[0].mxu0
    %v2113 = vadd.f32 %v2032, %v2112
    %v2114 = vpop.f32.mrb[0].mxu0
    %2115 = vmatprep.mubr.f32.mxu0 0.0
    %2116 = vmatmul.mubr.f32.gmra.mrb[0].mxu0 %v2044
    %v2117 = vpop.f32.mrb[0].mxu0
    %v2118 = vadd.f32 %v2037, %v2117
    %v2119 = vpop.f32.mrb[0].mxu0
    %2120 = vdwg.mxu0
    %v2122 = vsel %vm421, %v1936, 0
    %v2125 = vsel %vm421, %v1941, 0
    %2127 = vmatprep.subr.mxu0 0.0
    %2128 = vmatpush1.msra.mxu0 %v1957
    %2129 = vmatprep.subr.mxu0 0.0
    %2130 = vmatpush1.msra.mxu0 0.0
    %2131 = vmatprep.subr.mxu0 0.0
    %2132 = vmatpush1.msra.mxu0 0.0
    %2133 = vmatprep.subr.mxu0 0.0
    %2134 = vmatpush1.msra.mxu0 0.0
    %2135 = vmatprep.subr.mxu0 0.0
    %2136 = vmatpush1.msra.mxu0 0.0
    %2137 = vmatprep.subr.mxu0 0.0
    %2138 = vmatpush1.msra.mxu0 0.0
    %2139 = vmatprep.subr.mxu0 0.0
    %2140 = vmatpush1.msra.mxu0 0.0
    %2141 = vmatprep.subr.mxu0 0.0
    %2142 = vmatpush1.msra.mxu0 0.0
    %2143 = vmatprep.subr.mxu0 0.0
    %2144 = vmatpush1.msra.mxu0 0.0
    %2145 = vmatprep.subr.mxu0 0.0
    %2146 = vmatpush1.msra.mxu0 0.0
    %2147 = vmatprep.subr.mxu0 0.0
    %2148 = vmatpush1.msra.mxu0 0.0
    %2149 = vmatprep.subr.mxu0 0.0
    %2150 = vmatpush1.msra.mxu0 0.0
    %2151 = vmatprep.subr.mxu0 0.0
    %2152 = vmatpush1.msra.mxu0 0.0
    %2153 = vmatprep.subr.mxu0 0.0
    %2154 = vmatpush1.msra.mxu0 0.0
    %2155 = vmatprep.subr.mxu0 0.0
    %2156 = vmatpush1.msra.mxu0 0.0
    %2157 = vmatprep.subr.mxu0 0.0
    %2158 = vmatpush1.msra.mxu0 0.0
    %2159 = vmatprep.subr.mxu0 0.0
    %2160 = vmatpush1.msra.mxu0 0.0
    %2161 = vmatprep.subr.mxu0 0.0
    %2162 = vmatpush1.msra.mxu0 0.0
    %2163 = vmatprep.subr.mxu0 0.0
    %2164 = vmatpush1.msra.mxu0 0.0
    %2165 = vmatprep.subr.mxu0 0.0
    %2166 = vmatpush1.msra.mxu0 0.0
    %2167 = vmatprep.subr.mxu0 0.0
    %2168 = vmatpush1.msra.mxu0 0.0
    %2169 = vmatprep.subr.mxu0 0.0
    %2170 = vmatpush1.msra.mxu0 0.0
    %2171 = vmatprep.subr.mxu0 0.0
    %2172 = vmatpush1.msra.mxu0 0.0
    %2173 = vmatprep.subr.mxu0 0.0
    %2174 = vmatpush1.msra.mxu0 0.0
    %2175 = vmatprep.subr.mxu0 0.0
    %2176 = vmatpush1.msra.mxu0 0.0
    %2177 = vmatprep.subr.mxu0 0.0
    %2178 = vmatpush1.msra.mxu0 0.0
    %2179 = vmatprep.subr.mxu0 0.0
    %2180 = vmatpush1.msra.mxu0 0.0
    %2181 = vmatprep.subr.mxu0 0.0
    %2182 = vmatpush1.msra.mxu0 0.0
    %2183 = vmatprep.subr.mxu0 0.0
    %2184 = vmatpush1.msra.mxu0 0.0
    %2185 = vmatprep.subr.mxu0 0.0
    %2186 = vmatpush1.msra.mxu0 0.0
    %2187 = vmatprep.subr.mxu0 0.0
    %2188 = vmatpush1.msra.mxu0 0.0
    %2189 = vmatprep.subr.mxu0 0.0
    %2190 = vmatpush1.msra.mxu0 0.0
    %2191 = vmatprep.mubr.f32.mxu0 0.0
    %2192 = vmatmul.mubr.f32.gmra.mrb[0].mxu0 %v2122
    %v2193 = vpop.f32.mrb[0].mxu0
    %v2194 = vadd.f32 0.0, %v2193
    %v2195 = vpop.f32.mrb[0].mxu0
    %2196 = vmatprep.mubr.f32.mxu0 0.0
    %2197 = vmatmul.mubr.f32.gmra.mrb[0].mxu0 %v2125
    %v2198 = vpop.f32.mrb[0].mxu0
    %v2199 = vadd.f32 0.0, %v2198
    %v2200 = vpop.f32.mrb[0].mxu0
    %2201 = vdwg.mxu0
    %v2202 = vadd.f32 %v2113, %v2194
    %v2203 = vadd.f32 %v2118, %v2199
    %v2205 = vsel %vm421, %v1946, 0
    %v2208 = vsel %vm421, %v1951, 0
    %2210 = vmatprep.subr.mxu0 0.0
    %2211 = vmatpush1.msra.mxu0 %v1958
    %2212 = vmatprep.subr.mxu0 0.0
    %2213 = vmatpush1.msra.mxu0 0.0
    %2214 = vmatprep.subr.mxu0 0.0
    %2215 = vmatpush1.msra.mxu0 0.0
    %2216 = vmatprep.subr.mxu0 0.0
    %2217 = vmatpush1.msra.mxu0 0.0
    %2218 = vmatprep.subr.mxu0 0.0
    %2219 = vmatpush1.msra.mxu0 0.0
    %2220 = vmatprep.subr.mxu0 0.0
    %2221 = vmatpush1.msra.mxu0 0.0
    %2222 = vmatprep.subr.mxu0 0.0
    %2223 = vmatpush1.msra.mxu0 0.0
    %2224 = vmatprep.subr.mxu0 0.0
    %2225 = vmatpush1.msra.mxu0 0.0
    %2226 = vmatprep.subr.mxu0 0.0
    %2227 = vmatpush1.msra.mxu0 0.0
    %2228 = vmatprep.subr.mxu0 0.0
    %2229 = vmatpush1.msra.mxu0 0.0
    %2230 = vmatprep.subr.mxu0 0.0
    %2231 = vmatpush1.msra.mxu0 0.0
    %2232 = vmatprep.subr.mxu0 0.0
    %2233 = vmatpush1.msra.mxu0 0.0
    %2234 = vmatprep.subr.mxu0 0.0
    %2235 = vmatpush1.msra.mxu0 0.0
    %2236 = vmatprep.subr.mxu0 0.0
    %2237 = vmatpush1.msra.mxu0 0.0
    %2238 = vmatprep.subr.mxu0 0.0
    %2239 = vmatpush1.msra.mxu0 0.0
    %2240 = vmatprep.subr.mxu0 0.0
    %2241 = vmatpush1.msra.mxu0 0.0
    %2242 = vmatprep.subr.mxu0 0.0
    %2243 = vmatpush1.msra.mxu0 0.0
    %2244 = vmatprep.subr.mxu0 0.0
    %2245 = vmatpush1.msra.mxu0 0.0
    %2246 = vmatprep.subr.mxu0 0.0
    %2247 = vmatpush1.msra.mxu0 0.0
    %2248 = vmatprep.subr.mxu0 0.0
    %2249 = vmatpush1.msra.mxu0 0.0
    %2250 = vmatprep.subr.mxu0 0.0
    %2251 = vmatpush1.msra.mxu0 0.0
    %2252 = vmatprep.subr.mxu0 0.0
    %2253 = vmatpush1.msra.mxu0 0.0
    %2254 = vmatprep.subr.mxu0 0.0
    %2255 = vmatpush1.msra.mxu0 0.0
    %2256 = vmatprep.subr.mxu0 0.0
    %2257 = vmatpush1.msra.mxu0 0.0
    %2258 = vmatprep.subr.mxu0 0.0
    %2259 = vmatpush1.msra.mxu0 0.0
    %2260 = vmatprep.subr.mxu0 0.0
    %2261 = vmatpush1.msra.mxu0 0.0
    %2262 = vmatprep.subr.mxu0 0.0
    %2263 = vmatpush1.msra.mxu0 0.0
    %2264 = vmatprep.subr.mxu0 0.0
    %2265 = vmatpush1.msra.mxu0 0.0
    %2266 = vmatprep.subr.mxu0 0.0
    %2267 = vmatpush1.msra.mxu0 0.0
    %2268 = vmatprep.subr.mxu0 0.0
    %2269 = vmatpush1.msra.mxu0 0.0
    %2270 = vmatprep.subr.mxu0 0.0
    %2271 = vmatpush1.msra.mxu0 0.0
    %2272 = vmatprep.subr.mxu0 0.0
    %2273 = vmatpush1.msra.mxu0 0.0
    %2274 = vmatprep.mubr.f32.mxu0 0.0
    %2275 = vmatmul.mubr.f32.gmra.mrb[0].mxu0 %v2205
    %v2276 = vpop.f32.mrb[0].mxu0
    %v2277 = vadd.f32 0.0, %v2276
    %v2278 = vpop.f32.mrb[0].mxu0
    %2279 = vmatprep.mubr.f32.mxu0 0.0
    %2280 = vmatmul.mubr.f32.gmra.mrb[0].mxu0 %v2208
    %v2281 = vpop.f32.mrb[0].mxu0
    %v2282 = vadd.f32 0.0, %v2281
    %v2283 = vpop.f32.mrb[0].mxu0
    %2284 = vdwg.mxu0
    %v2285 = vadd.f32 %v2202, %v2277
    %v2286 = vadd.f32 %v2203, %v2282
    %v2287 = vadd.f32 %v1431, %v2285
    %v2288 = vadd.f32 %v1432, %v2286
    %v2289 = vld [vmem:[%s8 + $0xd] sm:$0x1]
    %v2290 = vlaneseq
    %v2291 = vshrl.u32 %v2290, 7
    %v2292 = vsub.s32 0, %v2291
    %v2293 = vrot.slane %v2289, %v2292
    %v2294 = vadd.f32 %v2287, %v2293
    %v2295 = vadd.f32 %v2288, %v2293
    %v2296 = vld [vmem:[%s8 + $0xe] sm:$0x1]
    %v2297 = vld [vmem:[%s8 + $0xf] sm:$0x1]
    %v2298 = vsel %vm239, %v2294, 0.0
    %2299 = vadd.xlane.f32.xlu0 %v2298
    %v2300 = vpop.xlane.xlu0 %2299
    %v2301 = vsel %vm239, %v2295, 0.0
    %2302 = vadd.xlane.f32.xlu0 %v2301
    %v2303 = vpop.xlane.xlu0 %2302
    %v2304 = vmul.f32 %v2300, %v246
    %v2305 = vmul.f32 %v2303, %v246
    %v2306 = vsub.f32 %v2294, %v2304
    %v2307 = vsub.f32 %v2295, %v2305
    %v2308 = vmul.f32 %v2306, %v2306
    %v2309 = vmul.f32 %v2307, %v2307
    %v2310 = vsel %vm239, %v2308, 0.0
    %2311 = vadd.xlane.f32.xlu0 %v2310
    %v2312 = vpop.xlane.xlu0 %2311
    %v2313 = vsel %vm239, %v2309, 0.0
    %2314 = vadd.xlane.f32.xlu0 %v2313
    %v2315 = vpop.xlane.xlu0 %2314
    %v2316 = vmul.f32 %v2312, %v246
    %v2317 = vmul.f32 %v2315, %v246
    %v2318 = vadd.f32 %v2316, 1e-12
    %v2319 = vadd.f32 %v2317, 1e-12
    %v2320 = vrsqrt.pop %v2318
    %v2321 = vrsqrt.pop %v2319
    %v2322 = vmul.f32 %v2306, %v2320
    %v2323 = vmul.f32 %v2307, %v2321
    %v2324 = vlaneseq
    %v2325 = vshrl.u32 %v2324, 7
    %v2326 = vsub.s32 0, %v2325
    %v2327 = vrot.slane %v2296, %v2326
    %v2328 = vmul.f32 %v2322, %v2327
    %v2329 = vmul.f32 %v2323, %v2327
    %v2330 = vlaneseq
    %v2331 = vshrl.u32 %v2330, 7
    %v2332 = vsub.s32 0, %v2331
    %v2333 = vrot.slane %v2297, %v2332
    %v2334 = vadd.f32 %v2328, %v2333
    %v2335 = vadd.f32 %v2329, %v2333
    %s2336 = scalar_lea.vmem %s5, 32
    %v2337 = vld [vmem:[%s2336] sm:$0xff]
    %v2338 = vld [vmem:[%s2336 + $0x8] sm:$0xff]
    %v2339 = vld [vmem:[%s2336 + $0x10] sm:$0xff]
    %v2340 = vld [vmem:[%s2336 + $0x18] sm:$0xff]
    %v2341 = vld [vmem:[%s8 + $0x10] sm:$0x1]
    %v2342 = vlaneseq
    %v2343 = vshrl.u32 %v2342, 7
    %v2344 = vsub.s32 0, %v2343
    %v2345 = vrot.slane %v2341, %v2344
    %v2347 = vsel %vm239, %v2334, 0
    %v2350 = vsel %vm239, %v2335, 0
    %2352 = vmatprep.subr.mxu0 0.0
    %2353 = vmatpush1.msra.mxu0 %v2337
    %2354 = vmatprep.subr.mxu0 0.0
    %2355 = vmatpush1.msra.mxu0 %v2338
    %2356 = vmatprep.subr.mxu0 0.0
    %2357 = vmatpush1.msra.mxu0 %v2339
    %2358 = vmatprep.subr.mxu0 0.0
    %2359 = vmatpush1.msra.mxu0 %v2340
    %2360 = vmatprep.subr.mxu0 0.0
    %2361 = vmatpush1.msra.mxu0 0.0
    %2362 = vmatprep.subr.mxu0 0.0
    %2363 = vmatpush1.msra.mxu0 0.0
    %2364 = vmatprep.subr.mxu0 0.0
    %2365 = vmatpush1.msra.mxu0 0.0
    %2366 = vmatprep.subr.mxu0 0.0
    %2367 = vmatpush1.msra.mxu0 0.0
    %2368 = vmatprep.subr.mxu0 0.0
    %2369 = vmatpush1.msra.mxu0 0.0
    %2370 = vmatprep.subr.mxu0 0.0
    %2371 = vmatpush1.msra.mxu0 0.0
    %2372 = vmatprep.subr.mxu0 0.0
    %2373 = vmatpush1.msra.mxu0 0.0
    %2374 = vmatprep.subr.mxu0 0.0
    %2375 = vmatpush1.msra.mxu0 0.0
    %2376 = vmatprep.subr.mxu0 0.0
    %2377 = vmatpush1.msra.mxu0 0.0
    %2378 = vmatprep.subr.mxu0 0.0
    %2379 = vmatpush1.msra.mxu0 0.0
    %2380 = vmatprep.subr.mxu0 0.0
    %2381 = vmatpush1.msra.mxu0 0.0
    %2382 = vmatprep.subr.mxu0 0.0
    %2383 = vmatpush1.msra.mxu0 0.0
    %2384 = vmatprep.subr.mxu0 0.0
    %2385 = vmatpush1.msra.mxu0 0.0
    %2386 = vmatprep.subr.mxu0 0.0
    %2387 = vmatpush1.msra.mxu0 0.0
    %2388 = vmatprep.subr.mxu0 0.0
    %2389 = vmatpush1.msra.mxu0 0.0
    %2390 = vmatprep.subr.mxu0 0.0
    %2391 = vmatpush1.msra.mxu0 0.0
    %2392 = vmatprep.subr.mxu0 0.0
    %2393 = vmatpush1.msra.mxu0 0.0
    %2394 = vmatprep.subr.mxu0 0.0
    %2395 = vmatpush1.msra.mxu0 0.0
    %2396 = vmatprep.subr.mxu0 0.0
    %2397 = vmatpush1.msra.mxu0 0.0
    %2398 = vmatprep.subr.mxu0 0.0
    %2399 = vmatpush1.msra.mxu0 0.0
    %2400 = vmatprep.subr.mxu0 0.0
    %2401 = vmatpush1.msra.mxu0 0.0
    %2402 = vmatprep.subr.mxu0 0.0
    %2403 = vmatpush1.msra.mxu0 0.0
    %2404 = vmatprep.subr.mxu0 0.0
    %2405 = vmatpush1.msra.mxu0 0.0
    %2406 = vmatprep.subr.mxu0 0.0
    %2407 = vmatpush1.msra.mxu0 0.0
    %2408 = vmatprep.subr.mxu0 0.0
    %2409 = vmatpush1.msra.mxu0 0.0
    %2410 = vmatprep.subr.mxu0 0.0
    %2411 = vmatpush1.msra.mxu0 0.0
    %2412 = vmatprep.subr.mxu0 0.0
    %2413 = vmatpush1.msra.mxu0 0.0
    %2414 = vmatprep.subr.mxu0 0.0
    %2415 = vmatpush1.msra.mxu0 0.0
    %2416 = vmatprep.mubr.f32.mxu0 0.0
    %2417 = vmatmul.mubr.f32.gmra.mrb[0].mxu0 %v2347
    %v2418 = vpop.f32.mrb[0].mxu0
    %v2419 = vadd.f32 %v2345, %v2418
    %v2420 = vpop.f32.mrb[0].mxu0
    %2421 = vmatprep.mubr.f32.mxu0 0.0
    %2422 = vmatmul.mubr.f32.gmra.mrb[0].mxu0 %v2350
    %v2423 = vpop.f32.mrb[0].mxu0
    %v2424 = vadd.f32 %v2345, %v2423
    %v2425 = vpop.f32.mrb[0].mxu0
    %2426 = vdwg.mxu0
    %v2427 = vmul.f32 %v2419, 0.5
    %v2428 = vmul.f32 %v2424, 0.5
    %v2429 = vmul.f32 %v2419, 0.044715
    %v2430 = vmul.f32 %v2424, 0.044715
    %v2431 = vmul.f32 %v2429, %v2419
    %v2432 = vmul.f32 %v2430, %v2424
    %v2433 = vmul.f32 %v2431, %v2419
    %v2434 = vmul.f32 %v2432, %v2424
    %v2435 = vadd.f32 %v2419, %v2433
    %v2436 = vadd.f32 %v2424, %v2434
    %v2437 = vmul.f32 %v2435, 0.7978846
    %v2438 = vmul.f32 %v2436, 0.7978846
    %v2439 = vtanh.pop %v2437
    %v2440 = vtanh.pop %v2438
    %v2441 = vadd.f32 %v2439, 1.0
    %v2442 = vadd.f32 %v2440, 1.0
    %v2443 = vmul.f32 %v2427, %v2441
    %v2444 = vmul.f32 %v2428, %v2442
    %s2445 = scalar_lea.vmem %s6, 64
    %v2446 = vld [vmem:[%s2445] sm:$0xff]
    %v2447 = vld [vmem:[%s2445 + $0x8] sm:$0xff]
    %v2448 = vld [vmem:[%s2445 + $0x10] sm:$0xff]
    %v2449 = vld [vmem:[%s2445 + $0x18] sm:$0xff]
    %v2450 = vld [vmem:[%s2445 + $0x20] sm:$0xff]
    %v2451 = vld [vmem:[%s2445 + $0x28] sm:$0xff]
    %v2452 = vld [vmem:[%s2445 + $0x30] sm:$0xff]
    %v2453 = vld [vmem:[%s2445 + $0x38] sm:$0xff]
    %v2454 = vld [vmem:[%s8 + $0x11] sm:$0x1]
    %v2455 = vlaneseq
    %v2456 = vshrl.u32 %v2455, 7
    %v2457 = vsub.s32 0, %v2456
    %v2458 = vrot.slane %v2454, %v2457
    %v2460 = vsel %vm153, %v2443, 0
    %v2463 = vsel %vm153, %v2444, 0
    %2465 = vmatprep.subr.mxu0 0.0
    %2466 = vmatpush1.msra.mxu0 %v2446
    %2467 = vmatprep.subr.mxu0 0.0
    %2468 = vmatpush1.msra.mxu0 %v2447
    %2469 = vmatprep.subr.mxu0 0.0
    %2470 = vmatpush1.msra.mxu0 %v2448
    %2471 = vmatprep.subr.mxu0 0.0
    %2472 = vmatpush1.msra.mxu0 %v2449
    %2473 = vmatprep.subr.mxu0 0.0
    %2474 = vmatpush1.msra.mxu0 %v2450
    %2475 = vmatprep.subr.mxu0 0.0
    %2476 = vmatpush1.msra.mxu0 %v2451
    %2477 = vmatprep.subr.mxu0 0.0
    %2478 = vmatpush1.msra.mxu0 %v2452
    %2479 = vmatprep.subr.mxu0 0.0
    %2480 = vmatpush1.msra.mxu0 %v2453
    %2481 = vmatprep.subr.mxu0 0.0
    %2482 = vmatpush1.msra.mxu0 0.0
    %2483 = vmatprep.subr.mxu0 0.0
    %2484 = vmatpush1.msra.mxu0 0.0
    %2485 = vmatprep.subr.mxu0 0.0
    %2486 = vmatpush1.msra.mxu0 0.0
    %2487 = vmatprep.subr.mxu0 0.0
    %2488 = vmatpush1.msra.mxu0 0.0
    %2489 = vmatprep.subr.mxu0 0.0
    %2490 = vmatpush1.msra.mxu0 0.0
    %2491 = vmatprep.subr.mxu0 0.0
    %2492 = vmatpush1.msra.mxu0 0.0
    %2493 = vmatprep.subr.mxu0 0.0
    %2494 = vmatpush1.msra.mxu0 0.0
    %2495 = vmatprep.subr.mxu0 0.0
    %2496 = vmatpush1.msra.mxu0 0.0
    %2497 = vmatprep.subr.mxu0 0.0
    %2498 = vmatpush1.msra.mxu0 0.0
    %2499 = vmatprep.subr.mxu0 0.0
    %2500 = vmatpush1.msra.mxu0 0.0
    %2501 = vmatprep.subr.mxu0 0.0
    %2502 = vmatpush1.msra.mxu0 0.0
    %2503 = vmatprep.subr.mxu0 0.0
    %2504 = vmatpush1.msra.mxu0 0.0
    %2505 = vmatprep.subr.mxu0 0.0
    %2506 = vmatpush1.msra.mxu0 0.0
    %2507 = vmatprep.subr.mxu0 0.0
    %2508 = vmatpush1.msra.mxu0 0.0
    %2509 = vmatprep.subr.mxu0 0.0
    %2510 = vmatpush1.msra.mxu0 0.0
    %2511 = vmatprep.subr.mxu0 0.0
    %2512 = vmatpush1.msra.mxu0 0.0
    %2513 = vmatprep.subr.mxu0 0.0
    %2514 = vmatpush1.msra.mxu0 0.0
    %2515 = vmatprep.subr.mxu0 0.0
    %2516 = vmatpush1.msra.mxu0 0.0
    %2517 = vmatprep.subr.mxu0 0.0
    %2518 = vmatpush1.msra.mxu0 0.0
    %2519 = vmatprep.subr.mxu0 0.0
    %2520 = vmatpush1.msra.mxu0 0.0
    %2521 = vmatprep.subr.mxu0 0.0
    %2522 = vmatpush1.msra.mxu0 0.0
    %2523 = vmatprep.subr.mxu0 0.0
    %2524 = vmatpush1.msra.mxu0 0.0
    %2525 = vmatprep.subr.mxu0 0.0
    %2526 = vmatpush1.msra.mxu0 0.0
    %2527 = vmatprep.subr.mxu0 0.0
    %2528 = vmatpush1.msra.mxu0 0.0
    %2529 = vmatprep.mubr.f32.mxu0 0.0
    %2530 = vmatmul.mubr.f32.gmra.mrb[0].mxu0 %v2460
    %v2531 = vpop.f32.mrb[0].mxu0
    %v2532 = vadd.f32 %v2458, %v2531
    %v2533 = vpop.f32.mrb[0].mxu0
    %2534 = vmatprep.mubr.f32.mxu0 0.0
    %2535 = vmatmul.mubr.f32.gmra.mrb[0].mxu0 %v2463
    %v2536 = vpop.f32.mrb[0].mxu0
    %v2537 = vadd.f32 %v2458, %v2536
    %v2538 = vpop.f32.mrb[0].mxu0
    %2539 = vdwg.mxu0
    %v2540 = vadd.f32 %v2334, %v2532
    %v2541 = vadd.f32 %v2335, %v2537
    %v2542 = vld [vmem:[%s8 + $0x12] sm:$0x1]
    %v2543 = vld [vmem:[%s8 + $0x13] sm:$0x1]
    %v2544 = vsel %vm239, %v2540, 0.0
    %2545 = vadd.xlane.f32.xlu0 %v2544
    %v2546 = vpop.xlane.xlu0 %2545
    %v2547 = vsel %vm239, %v2541, 0.0
    %2548 = vadd.xlane.f32.xlu0 %v2547
    %v2549 = vpop.xlane.xlu0 %2548
    %v2550 = vmul.f32 %v2546, %v246
    %v2551 = vmul.f32 %v2549, %v246
    %v2552 = vsub.f32 %v2540, %v2550
    %v2553 = vsub.f32 %v2541, %v2551
    %v2554 = vmul.f32 %v2552, %v2552
    %v2555 = vmul.f32 %v2553, %v2553
    %v2556 = vsel %vm239, %v2554, 0.0
    %2557 = vadd.xlane.f32.xlu0 %v2556
    %v2558 = vpop.xlane.xlu0 %2557
    %v2559 = vsel %vm239, %v2555, 0.0
    %2560 = vadd.xlane.f32.xlu0 %v2559
    %v2561 = vpop.xlane.xlu0 %2560
    %v2562 = vmul.f32 %v2558, %v246
    %v2563 = vmul.f32 %v2561, %v246
    %v2564 = vadd.f32 %v2562, 1e-12
    %v2565 = vadd.f32 %v2563, 1e-12
    %v2566 = vrsqrt.pop %v2564
    %v2567 = vrsqrt.pop %v2565
    %v2568 = vmul.f32 %v2552, %v2566
    %v2569 = vmul.f32 %v2553, %v2567
    %v2570 = vlaneseq
    %v2571 = vshrl.u32 %v2570, 7
    %v2572 = vsub.s32 0, %v2571
    %v2573 = vrot.slane %v2542, %v2572
    %v2574 = vmul.f32 %v2568, %v2573
    %v2575 = vmul.f32 %v2569, %v2573
    %v2576 = vlaneseq
    %v2577 = vshrl.u32 %v2576, 7
    %v2578 = vsub.s32 0, %v2577
    %v2579 = vrot.slane %v2543, %v2578
    %v2580 = vadd.f32 %v2574, %v2579
    %v2581 = vadd.f32 %v2575, %v2579
    %v2583 = vrot.slane %v2581, 7
    %vm2585 = vcmask 1040384
    %v2586 = vsel %vm2585, %v2580, %v2583
    %v2587 = vld [vmem:[%s7] sm:$0xff]
    %v2588 = vld [vmem:[%s7 + $0x8] sm:$0xff]
    %v2589 = vld [vmem:[%s7 + $0x10] sm:$0xff]
    %v2590 = vld [vmem:[%s7 + $0x18] sm:$0xff]
    %v2591 = vld [vmem:[%s8 + $0x2] sm:$0x1]
    %v2592 = vlaneseq
    %v2593 = vshrl.u32 %v2592, 7
    %v2594 = vsub.s32 0, %v2593
    %v2595 = vrot.slane %v2591, %v2594
    %v2597 = vsel %vm239, %v2586, 0
    %2599 = vmatprep.subr.mxu0 0.0
    %2600 = vmatpush1.msra.mxu0 %v2587
    %2601 = vmatprep.subr.mxu0 0.0
    %2602 = vmatpush1.msra.mxu0 %v2588
    %2603 = vmatprep.subr.mxu0 0.0
    %2604 = vmatpush1.msra.mxu0 %v2589
    %2605 = vmatprep.subr.mxu0 0.0
    %2606 = vmatpush1.msra.mxu0 %v2590
    %2607 = vmatprep.subr.mxu0 0.0
    %2608 = vmatpush1.msra.mxu0 0.0
    %2609 = vmatprep.subr.mxu0 0.0
    %2610 = vmatpush1.msra.mxu0 0.0
    %2611 = vmatprep.subr.mxu0 0.0
    %2612 = vmatpush1.msra.mxu0 0.0
    %2613 = vmatprep.subr.mxu0 0.0
    %2614 = vmatpush1.msra.mxu0 0.0
    %2615 = vmatprep.subr.mxu0 0.0
    %2616 = vmatpush1.msra.mxu0 0.0
    %2617 = vmatprep.subr.mxu0 0.0
    %2618 = vmatpush1.msra.mxu0 0.0
    %2619 = vmatprep.subr.mxu0 0.0
    %2620 = vmatpush1.msra.mxu0 0.0
    %2621 = vmatprep.subr.mxu0 0.0
    %2622 = vmatpush1.msra.mxu0 0.0
    %2623 = vmatprep.subr.mxu0 0.0
    %2624 = vmatpush1.msra.mxu0 0.0
    %2625 = vmatprep.subr.mxu0 0.0
    %2626 = vmatpush1.msra.mxu0 0.0
    %2627 = vmatprep.subr.mxu0 0.0
    %2628 = vmatpush1.msra.mxu0 0.0
    %2629 = vmatprep.subr.mxu0 0.0
    %2630 = vmatpush1.msra.mxu0 0.0
    %2631 = vmatprep.subr.mxu0 0.0
    %2632 = vmatpush1.msra.mxu0 0.0
    %2633 = vmatprep.subr.mxu0 0.0
    %2634 = vmatpush1.msra.mxu0 0.0
    %2635 = vmatprep.subr.mxu0 0.0
    %2636 = vmatpush1.msra.mxu0 0.0
    %2637 = vmatprep.subr.mxu0 0.0
    %2638 = vmatpush1.msra.mxu0 0.0
    %2639 = vmatprep.subr.mxu0 0.0
    %2640 = vmatpush1.msra.mxu0 0.0
    %2641 = vmatprep.subr.mxu0 0.0
    %2642 = vmatpush1.msra.mxu0 0.0
    %2643 = vmatprep.subr.mxu0 0.0
    %2644 = vmatpush1.msra.mxu0 0.0
    %2645 = vmatprep.subr.mxu0 0.0
    %2646 = vmatpush1.msra.mxu0 0.0
    %2647 = vmatprep.subr.mxu0 0.0
    %2648 = vmatpush1.msra.mxu0 0.0
    %2649 = vmatprep.subr.mxu0 0.0
    %2650 = vmatpush1.msra.mxu0 0.0
    %2651 = vmatprep.subr.mxu0 0.0
    %2652 = vmatpush1.msra.mxu0 0.0
    %2653 = vmatprep.subr.mxu0 0.0
    %2654 = vmatpush1.msra.mxu0 0.0
    %2655 = vmatprep.subr.mxu0 0.0
    %2656 = vmatpush1.msra.mxu0 0.0
    %2657 = vmatprep.subr.mxu0 0.0
    %2658 = vmatpush1.msra.mxu0 0.0
    %2659 = vmatprep.subr.mxu0 0.0
    %2660 = vmatpush1.msra.mxu0 0.0
    %2661 = vmatprep.subr.mxu0 0.0
    %2662 = vmatpush1.msra.mxu0 0.0
    %2663 = vmatprep.mubr.f32.mxu0 0.0
    %2664 = vmatmul.mubr.f32.gmra.mrb[0].mxu0 %v2597
    %v2665 = vpop.f32.mrb[0].mxu0
    %v2666 = vadd.f32 %v2595, %v2665
    %v2667 = vpop.f32.mrb[0].mxu0
    %2668 = vdwg.mxu0
    %v2669 = vtanh.pop %v2666
    %v2670 = vld [vmem:[%s8 + $0x3] sm:$0x1]
    %v2671 = vlaneseq
    %v2672 = vshrl.u32 %v2671, 7
    %v2673 = vsub.s32 0, %v2672
    %v2674 = vrot.slane %v2670, %v2673
    %2679 = vrot.lane.b32.xlu0 %v2587, 96
    %v2680 = vpop.permute.xlu0 %2679
    %2681 = vrot.lane.b32.xlu0 %v2588, 96
    %v2682 = vpop.permute.xlu0 %2681
    %2683 = vrot.lane.b32.xlu0 %v2589, 96
    %v2684 = vpop.permute.xlu0 %2683
    %2685 = vrot.lane.b32.xlu0 %v2590, 96
    %v2686 = vpop.permute.xlu0 %2685
    %v2692 = vsel %vm239, %v2669, 0
    %2694 = vmatprep.subr.mxu0 0.0
    %2695 = vmatpush1.msra.mxu0 %v2680
    %2696 = vmatprep.subr.mxu0 0.0
    %2697 = vmatpush1.msra.mxu0 %v2682
    %2698 = vmatprep.subr.mxu0 0.0
    %2699 = vmatpush1.msra.mxu0 %v2684
    %2700 = vmatprep.subr.mxu0 0.0
    %2701 = vmatpush1.msra.mxu0 %v2686
    %2702 = vmatprep.subr.mxu0 0.0
    %2703 = vmatpush1.msra.mxu0 0.0
    %2704 = vmatprep.subr.mxu0 0.0
    %2705 = vmatpush1.msra.mxu0 0.0
    %2706 = vmatprep.subr.mxu0 0.0
    %2707 = vmatpush1.msra.mxu0 0.0
    %2708 = vmatprep.subr.mxu0 0.0
    %2709 = vmatpush1.msra.mxu0 0.0
    %2710 = vmatprep.subr.mxu0 0.0
    %2711 = vmatpush1.msra.mxu0 0.0
    %2712 = vmatprep.subr.mxu0 0.0
    %2713 = vmatpush1.msra.mxu0 0.0
    %2714 = vmatprep.subr.mxu0 0.0
    %2715 = vmatpush1.msra.mxu0 0.0
    %2716 = vmatprep.subr.mxu0 0.0
    %2717 = vmatpush1.msra.mxu0 0.0
    %2718 = vmatprep.subr.mxu0 0.0
    %2719 = vmatpush1.msra.mxu0 0.0
    %2720 = vmatprep.subr.mxu0 0.0
    %2721 = vmatpush1.msra.mxu0 0.0
    %2722 = vmatprep.subr.mxu0 0.0
    %2723 = vmatpush1.msra.mxu0 0.0
    %2724 = vmatprep.subr.mxu0 0.0
    %2725 = vmatpush1.msra.mxu0 0.0
    %2726 = vmatprep.subr.mxu0 0.0
    %2727 = vmatpush1.msra.mxu0 0.0
    %2728 = vmatprep.subr.mxu0 0.0
    %2729 = vmatpush1.msra.mxu0 0.0
    %2730 = vmatprep.subr.mxu0 0.0
    %2731 = vmatpush1.msra.mxu0 0.0
    %2732 = vmatprep.subr.mxu0 0.0
    %2733 = vmatpush1.msra.mxu0 0.0
    %2734 = vmatprep.subr.mxu0 0.0
    %2735 = vmatpush1.msra.mxu0 0.0
    %2736 = vmatprep.subr.mxu0 0.0
    %2737 = vmatpush1.msra.mxu0 0.0
    %2738 = vmatprep.subr.mxu0 0.0
    %2739 = vmatpush1.msra.mxu0 0.0
    %2740 = vmatprep.subr.mxu0 0.0
    %2741 = vmatpush1.msra.mxu0 0.0
    %2742 = vmatprep.subr.mxu0 0.0
    %2743 = vmatpush1.msra.mxu0 0.0
    %2744 = vmatprep.subr.mxu0 0.0
    %2745 = vmatpush1.msra.mxu0 0.0
    %2746 = vmatprep.subr.mxu0 0.0
    %2747 = vmatpush1.msra.mxu0 0.0
    %2748 = vmatprep.subr.mxu0 0.0
    %2749 = vmatpush1.msra.mxu0 0.0
    %2750 = vmatprep.subr.mxu0 0.0
    %2751 = vmatpush1.msra.mxu0 0.0
    %2752 = vmatprep.subr.mxu0 0.0
    %2753 = vmatpush1.msra.mxu0 0.0
    %2754 = vmatprep.subr.mxu0 0.0
    %2755 = vmatpush1.msra.mxu0 0.0
    %2756 = vmatprep.subr.mxu0 0.0
    %2757 = vmatpush1.msra.mxu0 0.0
    %2758 = vmatprep.mubr.f32.mxu0 0.0
    %2759 = vmatmul.mubr.f32.gmra.mrb[0].mxu0 %v2692
    %v2760 = vpop.f32.mrb[0].mxu0
    %v2761 = vadd.f32 %v2674, %v2760
    %v2762 = vpop.f32.mrb[0].mxu0
    %2763 = vdwg.mxu0
    %vm2764 = vcmask 9216
    %2765 = vst.msk [vmem:[#allocation2] sm:$0x3] %vm2764, %v2761
    // Predicated region
    $region38: #{bert_forward.1} parent=1 // pred_check
      _
    $region39: #{bert_forward.1} parent=1 // pred_check_branch
      %2767 = sbr.rel (0) target = $region41
    $region40: #{bert_forward.1} parent=1 // pred_region
      %s2769 = ssub.s32 32, 32
      %2770 = vsyncadd [#allocation3], %s2769
      %s2772 = sshll.u32 [#allocation2], 4
      %s2773 = int_to_ptr.vmem [resolvable:$true] %s2772
      %2775 = dma.vmem_to_hbm [thread:$0]  %s2773, 32, %s9, [#allocation3]
    $region41: #{bert_forward.1} parent=1 // pred_fallthru
      _
    // Predicated region
    $region42: #{bert_forward.1} parent=1 // pred_check
      _
    $region43: #{bert_forward.1} parent=1 // pred_check_branch
      %2777 = sbr.rel (0) target = $region45
    $region44: #{bert_forward.1} parent=1 // pred_region
      %2778 = dma.done [#allocation3], 32
    $region45: #{bert_forward.1} parent=1 // pred_fallthru
      _
    %2779 = vsyncpa [#allocation3], 1

</llo_original>
